<compile_context>
chip_gen: v7x
topology: tpu7x:2x2x1
jax: 0.10.0
libtpu: 0.0.40
codegen_flags: <defaults>
</compile_context>

<pallas_src>
import jax
import jax.numpy as jnp
from jax.experimental import pallas as pl
from jax.experimental.pallas import tpu as pltpu

# MLP layer sizes from MAML_coat.__init__
LAYER_SIZES = [600, 300, 150, 70, 20, 1]
# Hidden / output feature dims zero-padded up to multiples of 128 (lane width).
PADDED_OUT = [384, 256, 128, 128, 128]


def _round_up(x, m):
    return (x + m - 1) // m * m


def _mlp_kernel(x_ref,
                w1_ref, b1_ref,
                w2_ref, b2_ref,
                w3_ref, b3_ref,
                w4_ref, b4_ref,
                w5_ref, b5_ref,
                o_ref):
    """Fused 5-layer MLP for one batch tile (bf16 matmuls, f32 accumulation)."""

    def layer(h, w_ref, b_ref, relu):
        acc = jnp.dot(h, w_ref[...], preferred_element_type=jnp.float32)
        acc = acc + b_ref[...]
        if relu:
            acc = jnp.maximum(acc, 0.0)
        return acc

    h = x_ref[...]                                        # (tile, 600) bf16
    h = layer(h, w1_ref, b1_ref, True).astype(jnp.bfloat16)   # (tile, 384)
    h = layer(h, w2_ref, b2_ref, True).astype(jnp.bfloat16)   # (tile, 256)
    h = layer(h, w3_ref, b3_ref, True).astype(jnp.bfloat16)   # (tile, 128)
    h = layer(h, w4_ref, b4_ref, True).astype(jnp.bfloat16)   # (tile, 128)
    # Final layer: no ReLU.  Lane-dense (tile, 128) f32 store; real output is
    # column 0 (padded columns are exactly zero).
    o_ref[...] = layer(h, w5_ref, b5_ref, False)


def pad_and_cast_params(params):
    """Zero-pad every layer so feature dims are multiples of 128 and cast the
    weights to bf16.  Biases stay f32 (added to the f32 accumulator)."""
    padded = []
    k_pad = LAYER_SIZES[0]                 # input features (600) are not padded
    for (w_t, b), n_pad in zip(params, PADDED_OUT):
        k, n = w_t.shape
        w_p = jnp.zeros((k_pad, n_pad), jnp.float32).at[:k, :n].set(w_t)
        b_p = jnp.zeros((1, n_pad), jnp.float32).at[:, :n].set(b.reshape(1, n))
        padded.append((w_p.astype(jnp.bfloat16), b_p))
        k_pad = n_pad
    return padded


def maml_coat_forward(x, padded_params, *, batch_tile=512):
    """Fused forward pass.

    x:             (B, 600) float32 (any B; rows are zero-padded to the tile).
    padded_params: output of `pad_and_cast_params`.
    batch_tile:    MXU M dimension per grid step; 512-2048 is the sweet spot
                   for large B.  Rounded down to a multiple of 256.
    """
    B, D_in = x.shape
    assert D_in == LAYER_SIZES[0]

    # Batch tile: multiple of 256 (fills the 256-wide v6e/v7x MXU; also
    # 128-aligned for v5e), no larger than needed for this batch.
    tile = min(batch_tile, _round_up(B, 256))
    tile = max(256, (tile // 256) * 256)
    # Keep at least 2 grid steps when the batch allows it so v7x's two
    # TensorCores both get work (no effect on single-TC v5e/v6e).
    if _round_up(B, tile) // tile < 2 and tile >= 512:
        tile //= 2
    B_pad = _round_up(B, tile)

    x_bf16 = x.astype(jnp.bfloat16)
    if B_pad != B:
        x_bf16 = jnp.pad(x_bf16, ((0, B_pad - B), (0, 0)))

    flat_params = []
    in_specs = [pl.BlockSpec((tile, D_in), lambda i: (i, 0))]
    for (w_p, b_p) in padded_params:
        flat_params.extend([w_p, b_p])
        # Grid-invariant full-array blocks: fetched once, resident in VMEM.
        # (Could additionally mark pipeline_mode=pl.Buffered(1) to drop the
        #  unused second buffer; skipped as the saving here is ~1 MB.)
        in_specs.append(pl.BlockSpec(w_p.shape, lambda i: (0, 0)))
        in_specs.append(pl.BlockSpec(b_p.shape, lambda i: (0, 0)))

    out_dim_pad = PADDED_OUT[-1]            # 128 -> lane-dense output store
    out_spec = pl.BlockSpec((tile, out_dim_pad), lambda i: (i, 0))

    kernel = pl.pallas_call(
        _mlp_kernel,
        out_shape=jax.ShapeDtypeStruct((B_pad, out_dim_pad), jnp.float32),
        grid_spec=pltpu.PrefetchScalarGridSpec(
            num_scalar_prefetch=0,
            grid=(B_pad // tile,),
            in_specs=in_specs,
            out_specs=out_spec,
        ),
        compiler_params=pltpu.CompilerParams(
            dimension_semantics=("parallel",),
            # Headroom for large batch tiles (needed past the v5e 16 MiB
            # scoped default); stays well under v7x's 64 MiB physical VMEM.
            vmem_limit_bytes=48 * 1024 * 1024,
        ),
    )
    out_padded = kernel(x_bf16, *flat_params)
    # Drop batch padding and the 127 zero output columns.
    return out_padded[:B, :LAYER_SIZES[-1]]


def init_params(key):
    """Deterministic init mimicking PyTorch's default Linear init
    (uniform(-1/sqrt(fan_in), 1/sqrt(fan_in))).  Weights stored transposed
    as (in, out)."""
    params = []
    for fan_in, fan_out in zip(LAYER_SIZES[:-1], LAYER_SIZES[1:]):
        key, kw, kb = jax.random.split(key, 3)
        bound = 1.0 / jnp.sqrt(jnp.float32(fan_in))
        w_t = jax.random.uniform(kw, (fan_in, fan_out), jnp.float32,
                                 minval=-bound, maxval=bound)
        b = jax.random.uniform(kb, (1, fan_out), jnp.float32,
                               minval=-bound, maxval=bound)
        params.append((w_t, b))
    return params


def reference_forward_f32(x, params):
    """Pure-JAX f32 reference (matches the PyTorch module exactly)."""
    h = x
    for i, (w_t, b) in enumerate(params):
        h = h @ w_t + b
        if i < len(params) - 1:
            h = jnp.maximum(h, 0.0)
    return h


def reference_forward_bf16(x, params):
    """Pure-JAX reference using the same numerics as the kernel
    (bf16 operands, f32 accumulation)."""
    h = x.astype(jnp.bfloat16)
    for i, (w_t, b) in enumerate(params):
        h = jnp.dot(h, w_t.astype(jnp.bfloat16),
                    preferred_element_type=jnp.float32) + b
        if i < len(params) - 1:
            h = jnp.maximum(h, 0.0).astype(jnp.bfloat16)
    return h


if __name__ == "__main__":
    key = jax.random.PRNGKey(0)
    kx, kp = jax.random.split(key)

    B = 512  # small batch; wrapper splits it into 2 x 256-row tiles
    x = jax.random.normal(kx, (B, LAYER_SIZES[0]), jnp.float32)
    params = init_params(kp)
    padded_params = pad_and_cast_params(params)

    out = maml_coat_forward(x, padded_params)
    out = jax.block_until_ready(out)
    assert out.shape == (B, 1)

    # Same-numerics (bf16/f32-acc) reference: should match tightly.
    ref_bf16 = reference_forward_bf16(x, params)
    assert jnp.allclose(out, ref_bf16, atol=2e-3, rtol=2e-3), \
        "mismatch vs bf16 reference"

    # Full-precision reference: loose tolerance for bf16 operand rounding.
    ref_f32 = reference_forward_f32(x, params)
    assert jnp.allclose(out, ref_f32, atol=5e-2, rtol=5e-2), \
        "mismatch vs f32 reference"

    print("KERNEL_OK")
</pallas_src>

<mosaic_0001>
module attributes {stable_mosaic.version = 11 : i64} {
  func.func @_mlp_kernel(%arg0: i32, %arg1: memref<256x600xbf16, #tpu.memory_space<vmem>>, %arg2: memref<600x384xbf16, #tpu.memory_space<vmem>>, %arg3: memref<1x384xf32, #tpu.memory_space<vmem>>, %arg4: memref<384x256xbf16, #tpu.memory_space<vmem>>, %arg5: memref<1x256xf32, #tpu.memory_space<vmem>>, %arg6: memref<256x128xbf16, #tpu.memory_space<vmem>>, %arg7: memref<1x128xf32, #tpu.memory_space<vmem>>, %arg8: memref<128x128xbf16, #tpu.memory_space<vmem>>, %arg9: memref<1x128xf32, #tpu.memory_space<vmem>>, %arg10: memref<128x128xbf16, #tpu.memory_space<vmem>>, %arg11: memref<1x128xf32, #tpu.memory_space<vmem>>, %arg12: memref<256x128xf32, #tpu.memory_space<vmem>>) attributes {dimension_semantics = [#tpu.dimension_semantics<parallel>], iteration_bounds = array<i64: 2>, scalar_prefetch = 0 : i64, scratch_operands = 0 : i64, tpu.core_type = #tpu.core_type<tc>, window_params = [{transform_indices = @transform_0, window_bounds = array<i64: 256, 600>}, {pipeline_mode = #tpu.pipeline_mode<synchronous>, transform_indices = @transform_1, window_bounds = array<i64: 600, 384>}, {pipeline_mode = #tpu.pipeline_mode<synchronous>, transform_indices = @transform_2, window_bounds = array<i64: 1, 384>}, {pipeline_mode = #tpu.pipeline_mode<synchronous>, transform_indices = @transform_3, window_bounds = array<i64: 384, 256>}, {pipeline_mode = #tpu.pipeline_mode<synchronous>, transform_indices = @transform_4, window_bounds = array<i64: 1, 256>}, {pipeline_mode = #tpu.pipeline_mode<synchronous>, transform_indices = @transform_5, window_bounds = array<i64: 256, 128>}, {pipeline_mode = #tpu.pipeline_mode<synchronous>, transform_indices = @transform_6, window_bounds = array<i64: 1, 128>}, {pipeline_mode = #tpu.pipeline_mode<synchronous>, transform_indices = @transform_7, window_bounds = array<i64: 128, 128>}, {pipeline_mode = #tpu.pipeline_mode<synchronous>, transform_indices = @transform_8, window_bounds = array<i64: 1, 128>}, {pipeline_mode = #tpu.pipeline_mode<synchronous>, transform_indices = @transform_9, window_bounds = array<i64: 128, 128>}, {pipeline_mode = #tpu.pipeline_mode<synchronous>, transform_indices = @transform_10, window_bounds = array<i64: 1, 128>}, {transform_indices = @transform_11, window_bounds = array<i64: 256, 128>}]} {
    %c0 = arith.constant 0 : index
    %c0_0 = arith.constant 0 : index
    %0 = vector.load %arg1[%c0, %c0_0] : memref<256x600xbf16, #tpu.memory_space<vmem>>, vector<256x600xbf16>
    %c0_1 = arith.constant 0 : index
    %c0_2 = arith.constant 0 : index
    %1 = vector.load %arg2[%c0_1, %c0_2] : memref<600x384xbf16, #tpu.memory_space<vmem>>, vector<600x384xbf16>
    %cst = arith.constant dense<0.000000e+00> : vector<256x384xf32>
    %2 = tpu.matmul %0, %1, %cst {dimension_numbers = #tpu.dot_dimension_numbers<[1], [0], [0], [1], [0, 0, 1, 1], [], []>} : vector<256x600xbf16>, vector<600x384xbf16>, vector<256x384xf32> -> vector<256x384xf32>
    %c0_3 = arith.constant 0 : index
    %c0_4 = arith.constant 0 : index
    %3 = vector.load %arg3[%c0_3, %c0_4] : memref<1x384xf32, #tpu.memory_space<vmem>>, vector<1x384xf32>
    %4 = vector.broadcast %3 : vector<1x384xf32> to vector<256x384xf32>
    %5 = arith.addf %2, %4 : vector<256x384xf32>
    %cst_5 = arith.constant 0.000000e+00 : f32
    %6 = vector.broadcast %cst_5 : f32 to vector<256x384xf32>
    %7 = arith.maximumf %5, %6 : vector<256x384xf32>
    %8 = arith.truncf %7 : vector<256x384xf32> to vector<256x384xbf16>
    %c0_6 = arith.constant 0 : index
    %c0_7 = arith.constant 0 : index
    %9 = vector.load %arg4[%c0_6, %c0_7] : memref<384x256xbf16, #tpu.memory_space<vmem>>, vector<384x256xbf16>
    %cst_8 = arith.constant dense<0.000000e+00> : vector<256x256xf32>
    %10 = tpu.matmul %8, %9, %cst_8 {dimension_numbers = #tpu.dot_dimension_numbers<[1], [0], [0], [1], [0, 0, 1, 1], [], []>} : vector<256x384xbf16>, vector<384x256xbf16>, vector<256x256xf32> -> vector<256x256xf32>
    %c0_9 = arith.constant 0 : index
    %c0_10 = arith.constant 0 : index
    %11 = vector.load %arg5[%c0_9, %c0_10] : memref<1x256xf32, #tpu.memory_space<vmem>>, vector<1x256xf32>
    %12 = vector.broadcast %11 : vector<1x256xf32> to vector<256x256xf32>
    %13 = arith.addf %10, %12 : vector<256x256xf32>
    %cst_11 = arith.constant 0.000000e+00 : f32
    %14 = vector.broadcast %cst_11 : f32 to vector<256x256xf32>
    %15 = arith.maximumf %13, %14 : vector<256x256xf32>
    %16 = arith.truncf %15 : vector<256x256xf32> to vector<256x256xbf16>
    %c0_12 = arith.constant 0 : index
    %c0_13 = arith.constant 0 : index
    %17 = vector.load %arg6[%c0_12, %c0_13] : memref<256x128xbf16, #tpu.memory_space<vmem>>, vector<256x128xbf16>
    %cst_14 = arith.constant dense<0.000000e+00> : vector<256x128xf32>
    %18 = tpu.matmul %16, %17, %cst_14 {dimension_numbers = #tpu.dot_dimension_numbers<[1], [0], [0], [1], [0, 0, 1, 1], [], []>} : vector<256x256xbf16>, vector<256x128xbf16>, vector<256x128xf32> -> vector<256x128xf32>
    %c0_15 = arith.constant 0 : index
    %c0_16 = arith.constant 0 : index
    %19 = vector.load %arg7[%c0_15, %c0_16] : memref<1x128xf32, #tpu.memory_space<vmem>>, vector<1x128xf32>
    %20 = vector.broadcast %19 : vector<1x128xf32> to vector<256x128xf32>
    %21 = arith.addf %18, %20 : vector<256x128xf32>
    %cst_17 = arith.constant 0.000000e+00 : f32
    %22 = vector.broadcast %cst_17 : f32 to vector<256x128xf32>
    %23 = arith.maximumf %21, %22 : vector<256x128xf32>
    %24 = arith.truncf %23 : vector<256x128xf32> to vector<256x128xbf16>
    %c0_18 = arith.constant 0 : index
    %c0_19 = arith.constant 0 : index
    %25 = vector.load %arg8[%c0_18, %c0_19] : memref<128x128xbf16, #tpu.memory_space<vmem>>, vector<128x128xbf16>
    %cst_20 = arith.constant dense<0.000000e+00> : vector<256x128xf32>
    %26 = tpu.matmul %24, %25, %cst_20 {dimension_numbers = #tpu.dot_dimension_numbers<[1], [0], [0], [1], [0, 0, 1, 1], [], []>} : vector<256x128xbf16>, vector<128x128xbf16>, vector<256x128xf32> -> vector<256x128xf32>
    %c0_21 = arith.constant 0 : index
    %c0_22 = arith.constant 0 : index
    %27 = vector.load %arg9[%c0_21, %c0_22] : memref<1x128xf32, #tpu.memory_space<vmem>>, vector<1x128xf32>
    %28 = vector.broadcast %27 : vector<1x128xf32> to vector<256x128xf32>
    %29 = arith.addf %26, %28 : vector<256x128xf32>
    %cst_23 = arith.constant 0.000000e+00 : f32
    %30 = vector.broadcast %cst_23 : f32 to vector<256x128xf32>
    %31 = arith.maximumf %29, %30 : vector<256x128xf32>
    %32 = arith.truncf %31 : vector<256x128xf32> to vector<256x128xbf16>
    %c0_24 = arith.constant 0 : index
    %c0_25 = arith.constant 0 : index
    %33 = vector.load %arg10[%c0_24, %c0_25] : memref<128x128xbf16, #tpu.memory_space<vmem>>, vector<128x128xbf16>
    %cst_26 = arith.constant dense<0.000000e+00> : vector<256x128xf32>
    %34 = tpu.matmul %32, %33, %cst_26 {dimension_numbers = #tpu.dot_dimension_numbers<[1], [0], [0], [1], [0, 0, 1, 1], [], []>} : vector<256x128xbf16>, vector<128x128xbf16>, vector<256x128xf32> -> vector<256x128xf32>
    %c0_27 = arith.constant 0 : index
    %c0_28 = arith.constant 0 : index
    %35 = vector.load %arg11[%c0_27, %c0_28] : memref<1x128xf32, #tpu.memory_space<vmem>>, vector<1x128xf32>
    %36 = vector.broadcast %35 : vector<1x128xf32> to vector<256x128xf32>
    %37 = arith.addf %34, %36 : vector<256x128xf32>
    %c0_29 = arith.constant 0 : index
    %c0_30 = arith.constant 0 : index
    %38 = vector.load %arg12[%c0_29, %c0_30] : memref<256x128xf32, #tpu.memory_space<vmem>>, vector<256x128xf32>
    tpu.vector_store %arg12[%c0_29, %c0_30], %37 {strides = array<i32>} : memref<256x128xf32, #tpu.memory_space<vmem>>, vector<256x128xf32>,
    return
  }
  func.func @transform_0(%arg0: i32) -> (i32, i32) {
    %c0_i32 = arith.constant 0 : i32
    %c0_i32_0 = arith.constant 0 : i32
    return %arg0, %c0_i32 : i32, i32
  }
  func.func @transform_1(%arg0: i32) -> (i32, i32) {
    %c0_i32 = arith.constant 0 : i32
    %c0_i32_0 = arith.constant 0 : i32
    %c0_i32_1 = arith.constant 0 : i32
    return %c0_i32, %c0_i32_0 : i32, i32
  }
  func.func @transform_2(%arg0: i32) -> (i32, i32) {
    %c0_i32 = arith.constant 0 : i32
    %c0_i32_0 = arith.constant 0 : i32
    %c0_i32_1 = arith.constant 0 : i32
    return %c0_i32, %c0_i32_0 : i32, i32
  }
  func.func @transform_3(%arg0: i32) -> (i32, i32) {
    %c0_i32 = arith.constant 0 : i32
    %c0_i32_0 = arith.constant 0 : i32
    %c0_i32_1 = arith.constant 0 : i32
    return %c0_i32, %c0_i32_0 : i32, i32
  }
  func.func @transform_4(%arg0: i32) -> (i32, i32) {
    %c0_i32 = arith.constant 0 : i32
    %c0_i32_0 = arith.constant 0 : i32
    %c0_i32_1 = arith.constant 0 : i32
    return %c0_i32, %c0_i32_0 : i32, i32
  }
  func.func @transform_5(%arg0: i32) -> (i32, i32) {
    %c0_i32 = arith.constant 0 : i32
    %c0_i32_0 = arith.constant 0 : i32
    %c0_i32_1 = arith.constant 0 : i32
    return %c0_i32, %c0_i32_0 : i32, i32
  }
  func.func @transform_6(%arg0: i32) -> (i32, i32) {
    %c0_i32 = arith.constant 0 : i32
    %c0_i32_0 = arith.constant 0 : i32
    %c0_i32_1 = arith.constant 0 : i32
    return %c0_i32, %c0_i32_0 : i32, i32
  }
  func.func @transform_7(%arg0: i32) -> (i32, i32) {
    %c0_i32 = arith.constant 0 : i32
    %c0_i32_0 = arith.constant 0 : i32
    %c0_i32_1 = arith.constant 0 : i32
    return %c0_i32, %c0_i32_0 : i32, i32
  }
  func.func @transform_8(%arg0: i32) -> (i32, i32) {
    %c0_i32 = arith.constant 0 : i32
    %c0_i32_0 = arith.constant 0 : i32
    %c0_i32_1 = arith.constant 0 : i32
    return %c0_i32, %c0_i32_0 : i32, i32
  }
  func.func @transform_9(%arg0: i32) -> (i32, i32) {
    %c0_i32 = arith.constant 0 : i32
    %c0_i32_0 = arith.constant 0 : i32
    %c0_i32_1 = arith.constant 0 : i32
    return %c0_i32, %c0_i32_0 : i32, i32
  }
  func.func @transform_10(%arg0: i32) -> (i32, i32) {
    %c0_i32 = arith.constant 0 : i32
    %c0_i32_0 = arith.constant 0 : i32
    %c0_i32_1 = arith.constant 0 : i32
    return %c0_i32, %c0_i32_0 : i32, i32
  }
  func.func @transform_11(%arg0: i32) -> (i32, i32) {
    %c0_i32 = arith.constant 0 : i32
    %c0_i32_0 = arith.constant 0 : i32
    return %arg0, %c0_i32 : i32, i32
  }
}

</mosaic_0001>

<llo_original>
// kernel: tpu_custom_call.1
$region0: #{tpu_custom_call.1}
  #allocation0 [shape = 'u32[]', space=smem, size = 0x4, offset = 0x4, fixed_abs, tag = 'smem constant byte address 0x4 - core index']
  #allocation1 [shape = 'u32[144,128]{1,0:T(1,128)}', space=vmem, size = 0x12000, scoped, tag = 'internal scratch']
  %s0 = inlined_call_operand.vmem [shape: bf16[512,600], index: 0, kind: input, shape index: {}]
  %s1 = inlined_call_operand.vmem [shape: bf16[600,384], index: 1, kind: input, shape index: {}]
  %s2 = inlined_call_operand.vmem [shape: f32[1,384], index: 2, kind: input, shape index: {}]
  %s3 = inlined_call_operand.vmem [shape: bf16[384,256], index: 3, kind: input, shape index: {}]
  %s4 = inlined_call_operand.vmem [shape: f32[1,256], index: 4, kind: input, shape index: {}]
  %s5 = inlined_call_operand.vmem [shape: bf16[256,128], index: 5, kind: input, shape index: {}]
  %s6 = inlined_call_operand.vmem [shape: f32[1,128], index: 6, kind: input, shape index: {}]
  %s7 = inlined_call_operand.vmem [shape: bf16[128,128], index: 7, kind: input, shape index: {}]
  %s8 = inlined_call_operand.vmem [shape: f32[1,128], index: 8, kind: input, shape index: {}]
  %s9 = inlined_call_operand.vmem [shape: bf16[128,128], index: 9, kind: input, shape index: {}]
  %s10 = inlined_call_operand.vmem [shape: f32[1,128], index: 10, kind: input, shape index: {}]
  %s11 = inlined_call_operand.hbm [shape: f32[512,128], index: 11, kind: output, shape index: {}]
  %s12 = sld [smem:[#allocation0]]
  $region77: #{tpu_custom_call.1} parent=0
    _
  %s14 = ssub.s32 1, %s12
  %s15 = scalar_select 0, %s14, %s12
  $region1: #{tpu_custom_call.1} parent=0
    #allocation2 [shape = 'u8[262144]{0}', space=vmem, size = 0x40000, scoped, tag = 'output window, operand 0']
    #allocation3 [shape = 's32[2]{0}', space=sflag, size = 0x8, scoped, tag = 'scoped memory for tpu_custom_call.1']
    %16 = vsyncpa [#allocation3], 0
    %s17 = scalar_lea.sflag [#allocation3], 1
    %18 = vsyncpa %s17, 0
    loop: start=0, step=1, limit=4
    $region2: #{tpu_custom_call.1} parent=1 // loop_pre_header
      _
    $region3: #{tpu_custom_call.1} parent=1 // loop_header
      %s20 = sphi 0, %s24
      %p21 = scmp.ge.s32.totalorder %s20, 4
      %s30 = sphi 0, %s32
      %s33 = sphi 0, %s30
      %s34 = sphi 0, %s33
      %s50 = sphi 0, %s34
      %s54 = sphi 0, %s54
      %s56 = sphi 0, %s54
      %s57 = sphi 0, %s56
      %s71 = sphi 0, %s57
      %s75 = sphi 0, %s75
      %s77 = sphi 0, %s75
      %s78 = sphi 0, %s77
      %s92 = sphi 0, %s78
      %s96 = sphi 0, %s96
      %s98 = sphi 0, %s96
      %s99 = sphi 0, %s98
      %s113 = sphi 0, %s99
      %s117 = sphi 0, %s117
      %s119 = sphi 0, %s117
      %s120 = sphi 0, %s119
      %s134 = sphi 0, %s120
      %s138 = sphi 0, %s138
      %s140 = sphi 0, %s138
      %s141 = sphi 0, %s140
      %s155 = sphi 0, %s141
      %s159 = sphi 0, %s159
      %s161 = sphi 0, %s159
      %s162 = sphi 0, %s161
      %s176 = sphi 0, %s162
      %s180 = sphi 0, %s180
      %s182 = sphi 0, %s180
      %s183 = sphi 0, %s182
      %s197 = sphi 0, %s183
      %s201 = sphi 0, %s201
      %s203 = sphi 0, %s201
      %s204 = sphi 0, %s203
      %s218 = sphi 0, %s204
      %s222 = sphi 0, %s222
      %s224 = sphi 0, %s222
      %s225 = sphi 0, %s224
      %s239 = sphi 0, %s225
      %s243 = sphi 0, %s243
      %s245 = sphi 0, %s243
      %s246 = sphi 0, %s245
      %s260 = sphi 0, %s246
      %s266 = sphi 0, %s268
      %s269 = sphi 0, %s266
      %s270 = sphi 0, %s269
      %s286 = sphi 0, %s270
    $region4: #{tpu_custom_call.1} parent=1 // loop_header_branch
      %23 = sbr.rel (%p21) target = $region8
    $region5: #{tpu_custom_call.1} parent=1 // loop_body
      %s25 = ssub.s32 %s20, 1
      %s26 = ssub.s32 %s20, 2
      %s27 = sadd.s32 %s20, 1
      %s28 = ssub.s32 %s20, %s27
      %p29 = scmp.eq.s32.totalorder %s28, 0
      %s31 = sadd.s32 %s30, 1
      %s32 = scalar_select %p29, %s30, %s31
      %p35 = pneg %p29
      %p36 = scmp.eq.s32.totalorder %s20, 1
      %p37 = por %p35, %p36
      %p38 = scmp.ne.s32.totalorder %s30, %s33
      %p39 = scmp.eq.s32.totalorder %s20, 0
      %p40 = por %p38, %p39
      %p41 = scmp.ne.s32.totalorder %s30, %s33
      %p42 = scmp.eq.s32.totalorder %s25, 1
      %p43 = por %p41, %p42
      %p44 = scmp.ne.s32.totalorder %s33, %s34
      %p45 = scmp.eq.s32.totalorder %s25, 0
      %p46 = por %p44, %p45
      %p47 = scmp.ne.s32.totalorder %s33, %s34
      %p48 = scmp.eq.s32.totalorder %s26, 1
      %p49 = por %p47, %p48
      %p51 = scmp.ne.s32.totalorder %s34, %s50
      %p52 = scmp.eq.s32.totalorder %s26, 0
      %p53 = por %p51, %p52
      %s55 = sadd.s32 %s54, 1
      %p58 = scmp.eq.s32.totalorder %s20, 1
      %p59 = scmp.ne.s32.totalorder %s54, %s56
      %p60 = scmp.eq.s32.totalorder %s20, 0
      %p61 = por %p59, %p60
      %p62 = scmp.ne.s32.totalorder %s54, %s56
      %p63 = scmp.eq.s32.totalorder %s25, 1
      %p64 = por %p62, %p63
      %p65 = scmp.ne.s32.totalorder %s56, %s57
      %p66 = scmp.eq.s32.totalorder %s25, 0
      %p67 = por %p65, %p66
      %p68 = scmp.ne.s32.totalorder %s56, %s57
      %p69 = scmp.eq.s32.totalorder %s26, 1
      %p70 = por %p68, %p69
      %p72 = scmp.ne.s32.totalorder %s57, %s71
      %p73 = scmp.eq.s32.totalorder %s26, 0
      %p74 = por %p72, %p73
      %s76 = sadd.s32 %s75, 1
      %p79 = scmp.eq.s32.totalorder %s20, 1
      %p80 = scmp.ne.s32.totalorder %s75, %s77
      %p81 = scmp.eq.s32.totalorder %s20, 0
      %p82 = por %p80, %p81
      %p83 = scmp.ne.s32.totalorder %s75, %s77
      %p84 = scmp.eq.s32.totalorder %s25, 1
      %p85 = por %p83, %p84
      %p86 = scmp.ne.s32.totalorder %s77, %s78
      %p87 = scmp.eq.s32.totalorder %s25, 0
      %p88 = por %p86, %p87
      %p89 = scmp.ne.s32.totalorder %s77, %s78
      %p90 = scmp.eq.s32.totalorder %s26, 1
      %p91 = por %p89, %p90
      %p93 = scmp.ne.s32.totalorder %s78, %s92
      %p94 = scmp.eq.s32.totalorder %s26, 0
      %p95 = por %p93, %p94
      %s97 = sadd.s32 %s96, 1
      %p100 = scmp.eq.s32.totalorder %s20, 1
      %p101 = scmp.ne.s32.totalorder %s96, %s98
      %p102 = scmp.eq.s32.totalorder %s20, 0
      %p103 = por %p101, %p102
      %p104 = scmp.ne.s32.totalorder %s96, %s98
      %p105 = scmp.eq.s32.totalorder %s25, 1
      %p106 = por %p104, %p105
      %p107 = scmp.ne.s32.totalorder %s98, %s99
      %p108 = scmp.eq.s32.totalorder %s25, 0
      %p109 = por %p107, %p108
      %p110 = scmp.ne.s32.totalorder %s98, %s99
      %p111 = scmp.eq.s32.totalorder %s26, 1
      %p112 = por %p110, %p111
      %p114 = scmp.ne.s32.totalorder %s99, %s113
      %p115 = scmp.eq.s32.totalorder %s26, 0
      %p116 = por %p114, %p115
      %s118 = sadd.s32 %s117, 1
      %p121 = scmp.eq.s32.totalorder %s20, 1
      %p122 = scmp.ne.s32.totalorder %s117, %s119
      %p123 = scmp.eq.s32.totalorder %s20, 0
      %p124 = por %p122, %p123
      %p125 = scmp.ne.s32.totalorder %s117, %s119
      %p126 = scmp.eq.s32.totalorder %s25, 1
      %p127 = por %p125, %p126
      %p128 = scmp.ne.s32.totalorder %s119, %s120
      %p129 = scmp.eq.s32.totalorder %s25, 0
      %p130 = por %p128, %p129
      %p131 = scmp.ne.s32.totalorder %s119, %s120
      %p132 = scmp.eq.s32.totalorder %s26, 1
      %p133 = por %p131, %p132
      %p135 = scmp.ne.s32.totalorder %s120, %s134
      %p136 = scmp.eq.s32.totalorder %s26, 0
      %p137 = por %p135, %p136
      %s139 = sadd.s32 %s138, 1
      %p142 = scmp.eq.s32.totalorder %s20, 1
      %p143 = scmp.ne.s32.totalorder %s138, %s140
      %p144 = scmp.eq.s32.totalorder %s20, 0
      %p145 = por %p143, %p144
      %p146 = scmp.ne.s32.totalorder %s138, %s140
      %p147 = scmp.eq.s32.totalorder %s25, 1
      %p148 = por %p146, %p147
      %p149 = scmp.ne.s32.totalorder %s140, %s141
      %p150 = scmp.eq.s32.totalorder %s25, 0
      %p151 = por %p149, %p150
      %p152 = scmp.ne.s32.totalorder %s140, %s141
      %p153 = scmp.eq.s32.totalorder %s26, 1
      %p154 = por %p152, %p153
      %p156 = scmp.ne.s32.totalorder %s141, %s155
      %p157 = scmp.eq.s32.totalorder %s26, 0
      %p158 = por %p156, %p157
      %s160 = sadd.s32 %s159, 1
      %p163 = scmp.eq.s32.totalorder %s20, 1
      %p164 = scmp.ne.s32.totalorder %s159, %s161
      %p165 = scmp.eq.s32.totalorder %s20, 0
      %p166 = por %p164, %p165
      %p167 = scmp.ne.s32.totalorder %s159, %s161
      %p168 = scmp.eq.s32.totalorder %s25, 1
      %p169 = por %p167, %p168
      %p170 = scmp.ne.s32.totalorder %s161, %s162
      %p171 = scmp.eq.s32.totalorder %s25, 0
      %p172 = por %p170, %p171
      %p173 = scmp.ne.s32.totalorder %s161, %s162
      %p174 = scmp.eq.s32.totalorder %s26, 1
      %p175 = por %p173, %p174
      %p177 = scmp.ne.s32.totalorder %s162, %s176
      %p178 = scmp.eq.s32.totalorder %s26, 0
      %p179 = por %p177, %p178
      %s181 = sadd.s32 %s180, 1
      %p184 = scmp.eq.s32.totalorder %s20, 1
      %p185 = scmp.ne.s32.totalorder %s180, %s182
      %p186 = scmp.eq.s32.totalorder %s20, 0
      %p187 = por %p185, %p186
      %p188 = scmp.ne.s32.totalorder %s180, %s182
      %p189 = scmp.eq.s32.totalorder %s25, 1
      %p190 = por %p188, %p189
      %p191 = scmp.ne.s32.totalorder %s182, %s183
      %p192 = scmp.eq.s32.totalorder %s25, 0
      %p193 = por %p191, %p192
      %p194 = scmp.ne.s32.totalorder %s182, %s183
      %p195 = scmp.eq.s32.totalorder %s26, 1
      %p196 = por %p194, %p195
      %p198 = scmp.ne.s32.totalorder %s183, %s197
      %p199 = scmp.eq.s32.totalorder %s26, 0
      %p200 = por %p198, %p199
      %s202 = sadd.s32 %s201, 1
      %p205 = scmp.eq.s32.totalorder %s20, 1
      %p206 = scmp.ne.s32.totalorder %s201, %s203
      %p207 = scmp.eq.s32.totalorder %s20, 0
      %p208 = por %p206, %p207
      %p209 = scmp.ne.s32.totalorder %s201, %s203
      %p210 = scmp.eq.s32.totalorder %s25, 1
      %p211 = por %p209, %p210
      %p212 = scmp.ne.s32.totalorder %s203, %s204
      %p213 = scmp.eq.s32.totalorder %s25, 0
      %p214 = por %p212, %p213
      %p215 = scmp.ne.s32.totalorder %s203, %s204
      %p216 = scmp.eq.s32.totalorder %s26, 1
      %p217 = por %p215, %p216
      %p219 = scmp.ne.s32.totalorder %s204, %s218
      %p220 = scmp.eq.s32.totalorder %s26, 0
      %p221 = por %p219, %p220
      %s223 = sadd.s32 %s222, 1
      %p226 = scmp.eq.s32.totalorder %s20, 1
      %p227 = scmp.ne.s32.totalorder %s222, %s224
      %p228 = scmp.eq.s32.totalorder %s20, 0
      %p229 = por %p227, %p228
      %p230 = scmp.ne.s32.totalorder %s222, %s224
      %p231 = scmp.eq.s32.totalorder %s25, 1
      %p232 = por %p230, %p231
      %p233 = scmp.ne.s32.totalorder %s224, %s225
      %p234 = scmp.eq.s32.totalorder %s25, 0
      %p235 = por %p233, %p234
      %p236 = scmp.ne.s32.totalorder %s224, %s225
      %p237 = scmp.eq.s32.totalorder %s26, 1
      %p238 = por %p236, %p237
      %p240 = scmp.ne.s32.totalorder %s225, %s239
      %p241 = scmp.eq.s32.totalorder %s26, 0
      %p242 = por %p240, %p241
      %s244 = sadd.s32 %s243, 1
      %p247 = scmp.eq.s32.totalorder %s20, 1
      %p248 = scmp.ne.s32.totalorder %s243, %s245
      %p249 = scmp.eq.s32.totalorder %s20, 0
      %p250 = por %p248, %p249
      %p251 = scmp.ne.s32.totalorder %s243, %s245
      %p252 = scmp.eq.s32.totalorder %s25, 1
      %p253 = por %p251, %p252
      %p254 = scmp.ne.s32.totalorder %s245, %s246
      %p255 = scmp.eq.s32.totalorder %s25, 0
      %p256 = por %p254, %p255
      %p257 = scmp.ne.s32.totalorder %s245, %s246
      %p258 = scmp.eq.s32.totalorder %s26, 1
      %p259 = por %p257, %p258
      %p261 = scmp.ne.s32.totalorder %s246, %s260
      %p262 = scmp.eq.s32.totalorder %s26, 0
      %p263 = por %p261, %p262
      %s264 = ssub.s32 %s20, %s27
      %p265 = scmp.eq.s32.totalorder %s264, 0
      %s267 = sadd.s32 %s266, 1
      %s268 = scalar_select %p265, %s266, %s267
      %p271 = pneg %p265
      %p272 = scmp.eq.s32.totalorder %s20, 1
      %p273 = por %p271, %p272
      %p274 = scmp.ne.s32.totalorder %s266, %s269
      %p275 = scmp.eq.s32.totalorder %s20, 0
      %p276 = por %p274, %p275
      %p277 = scmp.ne.s32.totalorder %s266, %s269
      %p278 = scmp.eq.s32.totalorder %s25, 1
      %p279 = por %p277, %p278
      %p280 = scmp.ne.s32.totalorder %s269, %s270
      %p281 = scmp.eq.s32.totalorder %s25, 0
      %p282 = por %p280, %p281
      %p283 = scmp.ne.s32.totalorder %s269, %s270
      %p284 = scmp.eq.s32.totalorder %s26, 1
      %p285 = por %p283, %p284
      %p287 = scmp.ne.s32.totalorder %s270, %s286
      %p288 = scmp.eq.s32.totalorder %s26, 0
      %p289 = por %p287, %p288
      %p290 = scmp.le.s32.totalorder 1, %s20
      %p291 = scmp.lt.s32.totalorder %s20, 3
      %p292 = pnand %p290, %p291
      %p293 = pneg %p292
      // Predicated region
      $region9: #{tpu_custom_call.1} parent=5 // pred_check
        _
      $region10: #{tpu_custom_call.1} parent=5 // pred_check_branch
        %295 = sbr.rel (%p292) target = $region12
      $region11: #{tpu_custom_call.1} parent=5 // pred_region
        %s296 = ssub.s32 %s20, 1
        // Predicated region
        $region13: #{tpu_custom_call.1} parent=11 // pred_check
          %p297 = pneg %p67
        $region14: #{tpu_custom_call.1} parent=11 // pred_check_branch
          %299 = sbr.rel (%p297) target = $region16
        $region15: #{tpu_custom_call.1} parent=11 // pred_region
          _
        $region16: #{tpu_custom_call.1} parent=11 // pred_fallthru
          _
        // Predicated region
        $region17: #{tpu_custom_call.1} parent=11 // pred_check
          %p300 = pneg %p88
        $region18: #{tpu_custom_call.1} parent=11 // pred_check_branch
          %302 = sbr.rel (%p300) target = $region20
        $region19: #{tpu_custom_call.1} parent=11 // pred_region
          _
        $region20: #{tpu_custom_call.1} parent=11 // pred_fallthru
          _
        // Predicated region
        $region21: #{tpu_custom_call.1} parent=11 // pred_check
          %p303 = pneg %p109
        $region22: #{tpu_custom_call.1} parent=11 // pred_check_branch
          %305 = sbr.rel (%p303) target = $region24
        $region23: #{tpu_custom_call.1} parent=11 // pred_region
          _
        $region24: #{tpu_custom_call.1} parent=11 // pred_fallthru
          _
        // Predicated region
        $region25: #{tpu_custom_call.1} parent=11 // pred_check
          %p306 = pneg %p130
        $region26: #{tpu_custom_call.1} parent=11 // pred_check_branch
          %308 = sbr.rel (%p306) target = $region28
        $region27: #{tpu_custom_call.1} parent=11 // pred_region
          _
        $region28: #{tpu_custom_call.1} parent=11 // pred_fallthru
          _
        // Predicated region
        $region29: #{tpu_custom_call.1} parent=11 // pred_check
          %p309 = pneg %p151
        $region30: #{tpu_custom_call.1} parent=11 // pred_check_branch
          %311 = sbr.rel (%p309) target = $region32
        $region31: #{tpu_custom_call.1} parent=11 // pred_region
          _
        $region32: #{tpu_custom_call.1} parent=11 // pred_fallthru
          _
        // Predicated region
        $region33: #{tpu_custom_call.1} parent=11 // pred_check
          %p312 = pneg %p172
        $region34: #{tpu_custom_call.1} parent=11 // pred_check_branch
          %314 = sbr.rel (%p312) target = $region36
        $region35: #{tpu_custom_call.1} parent=11 // pred_region
          _
        $region36: #{tpu_custom_call.1} parent=11 // pred_fallthru
          _
        // Predicated region
        $region37: #{tpu_custom_call.1} parent=11 // pred_check
          %p315 = pneg %p193
        $region38: #{tpu_custom_call.1} parent=11 // pred_check_branch
          %317 = sbr.rel (%p315) target = $region40
        $region39: #{tpu_custom_call.1} parent=11 // pred_region
          _
        $region40: #{tpu_custom_call.1} parent=11 // pred_fallthru
          _
        // Predicated region
        $region41: #{tpu_custom_call.1} parent=11 // pred_check
          %p318 = pneg %p214
        $region42: #{tpu_custom_call.1} parent=11 // pred_check_branch
          %320 = sbr.rel (%p318) target = $region44
        $region43: #{tpu_custom_call.1} parent=11 // pred_region
          _
        $region44: #{tpu_custom_call.1} parent=11 // pred_fallthru
          _
        // Predicated region
        $region45: #{tpu_custom_call.1} parent=11 // pred_check
          %p321 = pneg %p235
        $region46: #{tpu_custom_call.1} parent=11 // pred_check_branch
          %323 = sbr.rel (%p321) target = $region48
        $region47: #{tpu_custom_call.1} parent=11 // pred_region
          _
        $region48: #{tpu_custom_call.1} parent=11 // pred_fallthru
          _
        // Predicated region
        $region49: #{tpu_custom_call.1} parent=11 // pred_check
          %p324 = pneg %p256
        $region50: #{tpu_custom_call.1} parent=11 // pred_check_branch
          %326 = sbr.rel (%p324) target = $region52
        $region51: #{tpu_custom_call.1} parent=11 // pred_region
          _
        $region52: #{tpu_custom_call.1} parent=11 // pred_fallthru
          _
      $region12: #{tpu_custom_call.1} parent=5 // pred_fallthru
        _
      %p327 = scmp.lt.s32.totalorder %s20, 2
      // Predicated region
      $region53: #{tpu_custom_call.1} parent=5 // pred_check
        %p328 = pneg %p327
      $region54: #{tpu_custom_call.1} parent=5 // pred_check_branch
        %330 = sbr.rel (%p328) target = $region56
      $region55: #{tpu_custom_call.1} parent=5 // pred_region
        // Predicated region
        $region57: #{tpu_custom_call.1} parent=55 // pred_check
          %p331 = pneg %p40
        $region58: #{tpu_custom_call.1} parent=55 // pred_check_branch
          %333 = sbr.rel (%p331) target = $region60
        $region59: #{tpu_custom_call.1} parent=55 // pred_region
          %s334 = smul.u32 32, %s20
          %p335 = scmp.lt.s32.totalorder %s334, 63
          %s336 = scalar_select %p335, %s334, 63
          %s337 = smul.addr %s336, 5
          %s338 = smul.addr %s337, 4
          %s339 = scalar_lea.vmem %s0, %s338
          %s340 = smul.u32 32, %s20
        $region60: #{tpu_custom_call.1} parent=55 // pred_fallthru
          _
      $region56: #{tpu_custom_call.1} parent=5 // pred_fallthru
        _
      %p341 = scmp.le.s32.totalorder 1, %s20
      %p342 = scmp.lt.s32.totalorder %s20, 3
      %p343 = pnand %p341, %p342
      %p344 = pneg %p343
      // Predicated region
      $region61: #{tpu_custom_call.1} parent=5 // pred_check
        _
      $region62: #{tpu_custom_call.1} parent=5 // pred_check_branch
        %346 = sbr.rel (%p343) target = $region64
      $region63: #{tpu_custom_call.1} parent=5 // pred_region
        %s347 = ssub.s32 %s20, 1
        %s348 = smul.u32 32, %s25
        %p349 = scmp.lt.s32.totalorder %s348, 63
        %s350 = scalar_select %p349, %s348, 63
        %s351 = smul.addr %s350, 5
        %s352 = smul.addr %s351, 4
        %s353 = scalar_lea.vmem %s0, %s352
        %p354 = pneg %p46
        %p355 = pneg %p43
        %p356 = pneg %p67
        %p357 = pneg %p64
        %p358 = pneg %p88
        %p359 = pneg %p85
        %p360 = pneg %p109
        %p361 = pneg %p106
        %p362 = pneg %p130
        %p363 = pneg %p127
        %p364 = pneg %p151
        %p365 = pneg %p148
        %p366 = pneg %p172
        %p367 = pneg %p169
        %p368 = pneg %p193
        %p369 = pneg %p190
        %p370 = pneg %p214
        %p371 = pneg %p211
        %p372 = pneg %p235
        %p373 = pneg %p232
        %p374 = pneg %p256
        %p375 = pneg %p253
        %p376 = pneg %p282
        %p377 = pneg %p279
        %s378 = sand.u32 %s269, 1
        %s379 = scalar_lea.sflag [#allocation3], %s378
        %s380 = sand.u32 %s269, 1
        %s381 = smul.addr %s380, 256
        %s382 = scalar_lea.vmem [#allocation2], %s381
        %s383 = smul.u32 32, %s25
        %p384 = scmp.lt.s32.totalorder %s383, 63
        %s385 = scalar_select %p384, %s383, 63
        %s386 = smul.addr %s385, 5
        %s387 = smul.addr %s386, 4
        %s388 = scalar_lea.vmem %s0, %s387
        %s389 = smul.u32 32, %s25
        %s390 = smul.u32 32, %s25
        %v392 = vld [vmem:[%s388] sm:$0xff]
        %v393 = vld [vmem:[%s388 + $0x8] sm:$0xff]
        %v394 = vld [vmem:[%s388 + $0x10] sm:$0xf]
        %v395 = vld [vmem:[%s388 + $0x14] sm:$0xff]
        %v396 = vld [vmem:[%s388 + $0x1c] sm:$0xff]
        %v397 = vld [vmem:[%s388 + $0x24] sm:$0xf]
        %v398 = vld [vmem:[%s388 + $0x28] sm:$0xff]
        %v399 = vld [vmem:[%s388 + $0x30] sm:$0xff]
        %v400 = vld [vmem:[%s388 + $0x38] sm:$0xf]
        %v401 = vld [vmem:[%s388 + $0x3c] sm:$0xff]
        %v402 = vld [vmem:[%s388 + $0x44] sm:$0xff]
        %v403 = vld [vmem:[%s388 + $0x4c] sm:$0xf]
        %v404 = vld [vmem:[%s388 + $0x50] sm:$0xff]
        %v405 = vld [vmem:[%s388 + $0x58] sm:$0xff]
        %v406 = vld [vmem:[%s388 + $0x60] sm:$0xf]
        %v407 = vld [vmem:[%s388 + $0x64] sm:$0xff]
        %v408 = vld [vmem:[%s388 + $0x6c] sm:$0xff]
        %v409 = vld [vmem:[%s388 + $0x74] sm:$0xf]
        %v410 = vld [vmem:[%s388 + $0x78] sm:$0xff]
        %v411 = vld [vmem:[%s388 + $0x80] sm:$0xff]
        %v412 = vld [vmem:[%s388 + $0x88] sm:$0xf]
        %v413 = vld [vmem:[%s388 + $0x8c] sm:$0xff]
        %v414 = vld [vmem:[%s388 + $0x94] sm:$0xff]
        %v415 = vld [vmem:[%s388 + $0x9c] sm:$0xf]
        %v416 = vld [vmem:[%s388 + $0xa0] sm:$0xff]
        %v417 = vld [vmem:[%s388 + $0xa8] sm:$0xff]
        %v418 = vld [vmem:[%s388 + $0xb0] sm:$0xf]
        %v419 = vld [vmem:[%s388 + $0xb4] sm:$0xff]
        %v420 = vld [vmem:[%s388 + $0xbc] sm:$0xff]
        %v421 = vld [vmem:[%s388 + $0xc4] sm:$0xf]
        %v422 = vld [vmem:[%s388 + $0xc8] sm:$0xff]
        %v423 = vld [vmem:[%s388 + $0xd0] sm:$0xff]
        %v424 = vld [vmem:[%s388 + $0xd8] sm:$0xf]
        %v425 = vld [vmem:[%s388 + $0xdc] sm:$0xff]
        %v426 = vld [vmem:[%s388 + $0xe4] sm:$0xff]
        %v427 = vld [vmem:[%s388 + $0xec] sm:$0xf]
        %v428 = vld [vmem:[%s388 + $0xf0] sm:$0xff]
        %v429 = vld [vmem:[%s388 + $0xf8] sm:$0xff]
        %v430 = vld [vmem:[%s388 + $0x100] sm:$0xf]
        %v431 = vld [vmem:[%s388 + $0x104] sm:$0xff]
        %v432 = vld [vmem:[%s388 + $0x10c] sm:$0xff]
        %v433 = vld [vmem:[%s388 + $0x114] sm:$0xf]
        %v434 = vld [vmem:[%s388 + $0x118] sm:$0xff]
        %v435 = vld [vmem:[%s388 + $0x120] sm:$0xff]
        %v436 = vld [vmem:[%s388 + $0x128] sm:$0xf]
        %v437 = vld [vmem:[%s388 + $0x12c] sm:$0xff]
        %v438 = vld [vmem:[%s388 + $0x134] sm:$0xff]
        %v439 = vld [vmem:[%s388 + $0x13c] sm:$0xf]
        %v440 = vld [vmem:[%s388 + $0x140] sm:$0xff]
        %v441 = vld [vmem:[%s388 + $0x148] sm:$0xff]
        %v442 = vld [vmem:[%s388 + $0x150] sm:$0xf]
        %v443 = vld [vmem:[%s388 + $0x154] sm:$0xff]
        %v444 = vld [vmem:[%s388 + $0x15c] sm:$0xff]
        %v445 = vld [vmem:[%s388 + $0x164] sm:$0xf]
        %v446 = vld [vmem:[%s388 + $0x168] sm:$0xff]
        %v447 = vld [vmem:[%s388 + $0x170] sm:$0xff]
        %v448 = vld [vmem:[%s388 + $0x178] sm:$0xf]
        %v449 = vld [vmem:[%s388 + $0x17c] sm:$0xff]
        %v450 = vld [vmem:[%s388 + $0x184] sm:$0xff]
        %v451 = vld [vmem:[%s388 + $0x18c] sm:$0xf]
        %v452 = vld [vmem:[%s388 + $0x190] sm:$0xff]
        %v453 = vld [vmem:[%s388 + $0x198] sm:$0xff]
        %v454 = vld [vmem:[%s388 + $0x1a0] sm:$0xf]
        %v455 = vld [vmem:[%s388 + $0x1a4] sm:$0xff]
        %v456 = vld [vmem:[%s388 + $0x1ac] sm:$0xff]
        %v457 = vld [vmem:[%s388 + $0x1b4] sm:$0xf]
        %v458 = vld [vmem:[%s388 + $0x1b8] sm:$0xff]
        %v459 = vld [vmem:[%s388 + $0x1c0] sm:$0xff]
        %v460 = vld [vmem:[%s388 + $0x1c8] sm:$0xf]
        %v461 = vld [vmem:[%s388 + $0x1cc] sm:$0xff]
        %v462 = vld [vmem:[%s388 + $0x1d4] sm:$0xff]
        %v463 = vld [vmem:[%s388 + $0x1dc] sm:$0xf]
        %v464 = vld [vmem:[%s388 + $0x1e0] sm:$0xff]
        %v465 = vld [vmem:[%s388 + $0x1e8] sm:$0xff]
        %v466 = vld [vmem:[%s388 + $0x1f0] sm:$0xf]
        %v467 = vld [vmem:[%s388 + $0x1f4] sm:$0xff]
        %v468 = vld [vmem:[%s388 + $0x1fc] sm:$0xff]
        %v469 = vld [vmem:[%s388 + $0x204] sm:$0xf]
        %v470 = vld [vmem:[%s388 + $0x208] sm:$0xff]
        %v471 = vld [vmem:[%s388 + $0x210] sm:$0xff]
        %v472 = vld [vmem:[%s388 + $0x218] sm:$0xf]
        %v473 = vld [vmem:[%s388 + $0x21c] sm:$0xff]
        %v474 = vld [vmem:[%s388 + $0x224] sm:$0xff]
        %v475 = vld [vmem:[%s388 + $0x22c] sm:$0xf]
        %v476 = vld [vmem:[%s388 + $0x230] sm:$0xff]
        %v477 = vld [vmem:[%s388 + $0x238] sm:$0xff]
        %v478 = vld [vmem:[%s388 + $0x240] sm:$0xf]
        %v479 = vld [vmem:[%s388 + $0x244] sm:$0xff]
        %v480 = vld [vmem:[%s388 + $0x24c] sm:$0xff]
        %v481 = vld [vmem:[%s388 + $0x254] sm:$0xf]
        %v482 = vld [vmem:[%s388 + $0x258] sm:$0xff]
        %v483 = vld [vmem:[%s388 + $0x260] sm:$0xff]
        %v484 = vld [vmem:[%s388 + $0x268] sm:$0xf]
        %v485 = vld [vmem:[%s388 + $0x26c] sm:$0xff]
        %v486 = vld [vmem:[%s388 + $0x274] sm:$0xff]
        %v487 = vld [vmem:[%s388 + $0x27c] sm:$0xf]
        %v488 = vld [vmem:[%s1] sm:$0xff]
        %v489 = vld [vmem:[%s1 + $0x8] sm:$0xf]
        %v490 = vld [vmem:[%s1 + $0xc] sm:$0xff]
        %v491 = vld [vmem:[%s1 + $0x14] sm:$0xf]
        %v492 = vld [vmem:[%s1 + $0x18] sm:$0xff]
        %v493 = vld [vmem:[%s1 + $0x20] sm:$0xf]
        %v494 = vld [vmem:[%s1 + $0x24] sm:$0xff]
        %v495 = vld [vmem:[%s1 + $0x2c] sm:$0xf]
        %v496 = vld [vmem:[%s1 + $0x30] sm:$0xff]
        %v497 = vld [vmem:[%s1 + $0x38] sm:$0xf]
        %v498 = vld [vmem:[%s1 + $0x3c] sm:$0xff]
        %v499 = vld [vmem:[%s1 + $0x44] sm:$0xf]
        %v500 = vld [vmem:[%s1 + $0x48] sm:$0xff]
        %v501 = vld [vmem:[%s1 + $0x50] sm:$0xf]
        %v502 = vld [vmem:[%s1 + $0x54] sm:$0xff]
        %v503 = vld [vmem:[%s1 + $0x5c] sm:$0xf]
        %v504 = vld [vmem:[%s1 + $0x60] sm:$0xff]
        %v505 = vld [vmem:[%s1 + $0x68] sm:$0xf]
        %v506 = vld [vmem:[%s1 + $0x6c] sm:$0xff]
        %v507 = vld [vmem:[%s1 + $0x74] sm:$0xf]
        %v508 = vld [vmem:[%s1 + $0x78] sm:$0xff]
        %v509 = vld [vmem:[%s1 + $0x80] sm:$0xf]
        %v510 = vld [vmem:[%s1 + $0x84] sm:$0xff]
        %v511 = vld [vmem:[%s1 + $0x8c] sm:$0xf]
        %v512 = vld [vmem:[%s1 + $0x90] sm:$0xff]
        %v513 = vld [vmem:[%s1 + $0x98] sm:$0xf]
        %v514 = vld [vmem:[%s1 + $0x9c] sm:$0xff]
        %v515 = vld [vmem:[%s1 + $0xa4] sm:$0xf]
        %v516 = vld [vmem:[%s1 + $0xa8] sm:$0xff]
        %v517 = vld [vmem:[%s1 + $0xb0] sm:$0xf]
        %v518 = vld [vmem:[%s1 + $0xb4] sm:$0xff]
        %v519 = vld [vmem:[%s1 + $0xbc] sm:$0xf]
        %v520 = vld [vmem:[%s1 + $0xc0] sm:$0xff]
        %v521 = vld [vmem:[%s1 + $0xc8] sm:$0xf]
        %v522 = vld [vmem:[%s1 + $0xcc] sm:$0xff]
        %v523 = vld [vmem:[%s1 + $0xd4] sm:$0xf]
        %v524 = vld [vmem:[%s1 + $0xd8] sm:$0xff]
        %v525 = vld [vmem:[%s1 + $0xe0] sm:$0xf]
        %v526 = vld [vmem:[%s1 + $0xe4] sm:$0xff]
        %v527 = vld [vmem:[%s1 + $0xec] sm:$0xf]
        %v528 = vld [vmem:[%s1 + $0xf0] sm:$0xff]
        %v529 = vld [vmem:[%s1 + $0xf8] sm:$0xf]
        %v530 = vld [vmem:[%s1 + $0xfc] sm:$0xff]
        %v531 = vld [vmem:[%s1 + $0x104] sm:$0xf]
        %v532 = vld [vmem:[%s1 + $0x108] sm:$0xff]
        %v533 = vld [vmem:[%s1 + $0x110] sm:$0xf]
        %v534 = vld [vmem:[%s1 + $0x114] sm:$0xff]
        %v535 = vld [vmem:[%s1 + $0x11c] sm:$0xf]
        %v536 = vld [vmem:[%s1 + $0x120] sm:$0xff]
        %v537 = vld [vmem:[%s1 + $0x128] sm:$0xf]
        %v538 = vld [vmem:[%s1 + $0x12c] sm:$0xff]
        %v539 = vld [vmem:[%s1 + $0x134] sm:$0xf]
        %v540 = vld [vmem:[%s1 + $0x138] sm:$0xff]
        %v541 = vld [vmem:[%s1 + $0x140] sm:$0xf]
        %v542 = vld [vmem:[%s1 + $0x144] sm:$0xff]
        %v543 = vld [vmem:[%s1 + $0x14c] sm:$0xf]
        %v544 = vld [vmem:[%s1 + $0x150] sm:$0xff]
        %v545 = vld [vmem:[%s1 + $0x158] sm:$0xf]
        %v546 = vld [vmem:[%s1 + $0x15c] sm:$0xff]
        %v547 = vld [vmem:[%s1 + $0x164] sm:$0xf]
        %v548 = vld [vmem:[%s1 + $0x168] sm:$0xff]
        %v549 = vld [vmem:[%s1 + $0x170] sm:$0xf]
        %v550 = vld [vmem:[%s1 + $0x174] sm:$0xff]
        %v551 = vld [vmem:[%s1 + $0x17c] sm:$0xf]
        %v552 = vld [vmem:[%s1 + $0x180] sm:$0xff]
        %v553 = vld [vmem:[%s1 + $0x188] sm:$0xf]
        %v554 = vld [vmem:[%s1 + $0x18c] sm:$0xff]
        %v555 = vld [vmem:[%s1 + $0x194] sm:$0xf]
        %v556 = vld [vmem:[%s1 + $0x198] sm:$0xff]
        %v557 = vld [vmem:[%s1 + $0x1a0] sm:$0xf]
        %v558 = vld [vmem:[%s1 + $0x1a4] sm:$0xff]
        %v559 = vld [vmem:[%s1 + $0x1ac] sm:$0xf]
        %v560 = vld [vmem:[%s1 + $0x1b0] sm:$0xff]
        %v561 = vld [vmem:[%s1 + $0x1b8] sm:$0xf]
        %v562 = vld [vmem:[%s1 + $0x1bc] sm:$0xff]
        %v563 = vld [vmem:[%s1 + $0x1c4] sm:$0xf]
        %v564 = vld [vmem:[%s1 + $0x1c8] sm:$0xff]
        %v565 = vld [vmem:[%s1 + $0x1d0] sm:$0xf]
        %v566 = vld [vmem:[%s1 + $0x1d4] sm:$0xff]
        %v567 = vld [vmem:[%s1 + $0x1dc] sm:$0xf]
        %v568 = vld [vmem:[%s1 + $0x1e0] sm:$0xff]
        %v569 = vld [vmem:[%s1 + $0x1e8] sm:$0xf]
        %v570 = vld [vmem:[%s1 + $0x1ec] sm:$0xff]
        %v571 = vld [vmem:[%s1 + $0x1f4] sm:$0xf]
        %v572 = vld [vmem:[%s1 + $0x1f8] sm:$0xff]
        %v573 = vld [vmem:[%s1 + $0x200] sm:$0xf]
        %v574 = vld [vmem:[%s1 + $0x204] sm:$0xff]
        %v575 = vld [vmem:[%s1 + $0x20c] sm:$0xf]
        %v576 = vld [vmem:[%s1 + $0x210] sm:$0xff]
        %v577 = vld [vmem:[%s1 + $0x218] sm:$0xf]
        %v578 = vld [vmem:[%s1 + $0x21c] sm:$0xff]
        %v579 = vld [vmem:[%s1 + $0x224] sm:$0xf]
        %v580 = vld [vmem:[%s1 + $0x228] sm:$0xff]
        %v581 = vld [vmem:[%s1 + $0x230] sm:$0xf]
        %v582 = vld [vmem:[%s1 + $0x234] sm:$0xff]
        %v583 = vld [vmem:[%s1 + $0x23c] sm:$0xf]
        %v584 = vld [vmem:[%s1 + $0x240] sm:$0xff]
        %v585 = vld [vmem:[%s1 + $0x248] sm:$0xf]
        %v586 = vld [vmem:[%s1 + $0x24c] sm:$0xff]
        %v587 = vld [vmem:[%s1 + $0x254] sm:$0xf]
        %v588 = vld [vmem:[%s1 + $0x258] sm:$0xff]
        %v589 = vld [vmem:[%s1 + $0x260] sm:$0xf]
        %v590 = vld [vmem:[%s1 + $0x264] sm:$0xff]
        %v591 = vld [vmem:[%s1 + $0x26c] sm:$0xf]
        %v592 = vld [vmem:[%s1 + $0x270] sm:$0xff]
        %v593 = vld [vmem:[%s1 + $0x278] sm:$0xf]
        %v594 = vld [vmem:[%s1 + $0x27c] sm:$0xff]
        %v595 = vld [vmem:[%s1 + $0x284] sm:$0xf]
        %v596 = vld [vmem:[%s1 + $0x288] sm:$0xff]
        %v597 = vld [vmem:[%s1 + $0x290] sm:$0xf]
        %v598 = vld [vmem:[%s1 + $0x294] sm:$0xff]
        %v599 = vld [vmem:[%s1 + $0x29c] sm:$0xf]
        %v600 = vld [vmem:[%s1 + $0x2a0] sm:$0xff]
        %v601 = vld [vmem:[%s1 + $0x2a8] sm:$0xf]
        %v602 = vld [vmem:[%s1 + $0x2ac] sm:$0xff]
        %v603 = vld [vmem:[%s1 + $0x2b4] sm:$0xf]
        %v604 = vld [vmem:[%s1 + $0x2b8] sm:$0xff]
        %v605 = vld [vmem:[%s1 + $0x2c0] sm:$0xf]
        %v606 = vld [vmem:[%s1 + $0x2c4] sm:$0xff]
        %v607 = vld [vmem:[%s1 + $0x2cc] sm:$0xf]
        %v608 = vld [vmem:[%s1 + $0x2d0] sm:$0xff]
        %v609 = vld [vmem:[%s1 + $0x2d8] sm:$0xf]
        %v610 = vld [vmem:[%s1 + $0x2dc] sm:$0xff]
        %v611 = vld [vmem:[%s1 + $0x2e4] sm:$0xf]
        %v612 = vld [vmem:[%s1 + $0x2e8] sm:$0xff]
        %v613 = vld [vmem:[%s1 + $0x2f0] sm:$0xf]
        %v614 = vld [vmem:[%s1 + $0x2f4] sm:$0xff]
        %v615 = vld [vmem:[%s1 + $0x2fc] sm:$0xf]
        %v616 = vld [vmem:[%s1 + $0x300] sm:$0xff]
        %v617 = vld [vmem:[%s1 + $0x308] sm:$0xf]
        %v618 = vld [vmem:[%s1 + $0x30c] sm:$0xff]
        %v619 = vld [vmem:[%s1 + $0x314] sm:$0xf]
        %v620 = vld [vmem:[%s1 + $0x318] sm:$0xff]
        %v621 = vld [vmem:[%s1 + $0x320] sm:$0xf]
        %v622 = vld [vmem:[%s1 + $0x324] sm:$0xff]
        %v623 = vld [vmem:[%s1 + $0x32c] sm:$0xf]
        %v624 = vld [vmem:[%s1 + $0x330] sm:$0xff]
        %v625 = vld [vmem:[%s1 + $0x338] sm:$0xf]
        %v626 = vld [vmem:[%s1 + $0x33c] sm:$0xff]
        %v627 = vld [vmem:[%s1 + $0x344] sm:$0xf]
        %v628 = vld [vmem:[%s1 + $0x348] sm:$0xff]
        %v629 = vld [vmem:[%s1 + $0x350] sm:$0xf]
        %v630 = vld [vmem:[%s1 + $0x354] sm:$0xff]
        %v631 = vld [vmem:[%s1 + $0x35c] sm:$0xf]
        %v632 = vld [vmem:[%s1 + $0x360] sm:$0xff]
        %v633 = vld [vmem:[%s1 + $0x368] sm:$0xf]
        %v634 = vld [vmem:[%s1 + $0x36c] sm:$0xff]
        %v635 = vld [vmem:[%s1 + $0x374] sm:$0xf]
        %v636 = vld [vmem:[%s1 + $0x378] sm:$0xff]
        %v637 = vld [vmem:[%s1 + $0x380] sm:$0xf]
        %v638 = vld [vmem:[%s2] sm:$0x7]
        %v640 = vlaneseq
        %v641 = vshrl.u32 %v640, 7
        %v642 = vsub.s32 0, %v641
        %v643 = vrot.slane %v638, %v642
        %v644 = vlaneseq
        %v645 = vshrl.u32 %v644, 7
        %v646 = vsub.s32 1, %v645
        %v647 = vrot.slane %v638, %v646
        %v648 = vlaneseq
        %v649 = vshrl.u32 %v648, 7
        %v650 = vsub.s32 2, %v649
        %v651 = vrot.slane %v638, %v650
        %v751 = vunpack.c.l.b16 %v392
        %v752 = vunpack.c.h.b16 %v392
        %v753 = vunpack.c.l.b16 %v393
        %v754 = vunpack.c.h.b16 %v393
        %v755 = vunpack.c.l.b16 %v394
        %v756 = vunpack.c.l.b16 %v395
        %v757 = vunpack.c.h.b16 %v395
        %v758 = vunpack.c.l.b16 %v396
        %v759 = vunpack.c.h.b16 %v396
        %v760 = vunpack.c.l.b16 %v397
        %v761 = vunpack.c.l.b16 %v398
        %v762 = vunpack.c.h.b16 %v398
        %v763 = vunpack.c.l.b16 %v399
        %v764 = vunpack.c.h.b16 %v399
        %v765 = vunpack.c.l.b16 %v400
        %v766 = vunpack.c.l.b16 %v401
        %v767 = vunpack.c.h.b16 %v401
        %v768 = vunpack.c.l.b16 %v402
        %v769 = vunpack.c.h.b16 %v402
        %v770 = vunpack.c.l.b16 %v403
        %v771 = vunpack.c.l.b16 %v404
        %v772 = vunpack.c.h.b16 %v404
        %v773 = vunpack.c.l.b16 %v405
        %v774 = vunpack.c.h.b16 %v405
        %v775 = vunpack.c.l.b16 %v406
        %v776 = vunpack.c.l.b16 %v407
        %v777 = vunpack.c.h.b16 %v407
        %v778 = vunpack.c.l.b16 %v408
        %v779 = vunpack.c.h.b16 %v408
        %v780 = vunpack.c.l.b16 %v409
        %v781 = vunpack.c.l.b16 %v410
        %v782 = vunpack.c.h.b16 %v410
        %v783 = vunpack.c.l.b16 %v411
        %v784 = vunpack.c.h.b16 %v411
        %v785 = vunpack.c.l.b16 %v412
        %v786 = vunpack.c.l.b16 %v413
        %v787 = vunpack.c.h.b16 %v413
        %v788 = vunpack.c.l.b16 %v414
        %v789 = vunpack.c.h.b16 %v414
        %v790 = vunpack.c.l.b16 %v415
        %v791 = vunpack.c.l.b16 %v416
        %v792 = vunpack.c.h.b16 %v416
        %v793 = vunpack.c.l.b16 %v417
        %v794 = vunpack.c.h.b16 %v417
        %v795 = vunpack.c.l.b16 %v418
        %v796 = vunpack.c.l.b16 %v419
        %v797 = vunpack.c.h.b16 %v419
        %v798 = vunpack.c.l.b16 %v420
        %v799 = vunpack.c.h.b16 %v420
        %v800 = vunpack.c.l.b16 %v421
        %v801 = vunpack.c.l.b16 %v422
        %v802 = vunpack.c.h.b16 %v422
        %v803 = vunpack.c.l.b16 %v423
        %v804 = vunpack.c.h.b16 %v423
        %v805 = vunpack.c.l.b16 %v424
        %v806 = vunpack.c.l.b16 %v425
        %v807 = vunpack.c.h.b16 %v425
        %v808 = vunpack.c.l.b16 %v426
        %v809 = vunpack.c.h.b16 %v426
        %v810 = vunpack.c.l.b16 %v427
        %v811 = vunpack.c.l.b16 %v428
        %v812 = vunpack.c.h.b16 %v428
        %v813 = vunpack.c.l.b16 %v429
        %v814 = vunpack.c.h.b16 %v429
        %v815 = vunpack.c.l.b16 %v430
        %v816 = vunpack.c.l.b16 %v431
        %v817 = vunpack.c.h.b16 %v431
        %v818 = vunpack.c.l.b16 %v432
        %v819 = vunpack.c.h.b16 %v432
        %v820 = vunpack.c.l.b16 %v433
        %v821 = vunpack.c.l.b16 %v434
        %v822 = vunpack.c.h.b16 %v434
        %v823 = vunpack.c.l.b16 %v435
        %v824 = vunpack.c.h.b16 %v435
        %v825 = vunpack.c.l.b16 %v436
        %v826 = vunpack.c.l.b16 %v437
        %v827 = vunpack.c.h.b16 %v437
        %v828 = vunpack.c.l.b16 %v438
        %v829 = vunpack.c.h.b16 %v438
        %v830 = vunpack.c.l.b16 %v439
        %v831 = vunpack.c.l.b16 %v440
        %v832 = vunpack.c.h.b16 %v440
        %v833 = vunpack.c.l.b16 %v441
        %v834 = vunpack.c.h.b16 %v441
        %v835 = vunpack.c.l.b16 %v442
        %v836 = vunpack.c.l.b16 %v443
        %v837 = vunpack.c.h.b16 %v443
        %v838 = vunpack.c.l.b16 %v444
        %v839 = vunpack.c.h.b16 %v444
        %v840 = vunpack.c.l.b16 %v445
        %v841 = vunpack.c.l.b16 %v446
        %v842 = vunpack.c.h.b16 %v446
        %v843 = vunpack.c.l.b16 %v447
        %v844 = vunpack.c.h.b16 %v447
        %v845 = vunpack.c.l.b16 %v448
        %v846 = vunpack.c.l.b16 %v449
        %v847 = vunpack.c.h.b16 %v449
        %v848 = vunpack.c.l.b16 %v450
        %v849 = vunpack.c.h.b16 %v450
        %v850 = vunpack.c.l.b16 %v451
        %v851 = vunpack.c.l.b16 %v452
        %v852 = vunpack.c.h.b16 %v452
        %v853 = vunpack.c.l.b16 %v453
        %v854 = vunpack.c.h.b16 %v453
        %v855 = vunpack.c.l.b16 %v454
        %v856 = vunpack.c.l.b16 %v455
        %v857 = vunpack.c.h.b16 %v455
        %v858 = vunpack.c.l.b16 %v456
        %v859 = vunpack.c.h.b16 %v456
        %v860 = vunpack.c.l.b16 %v457
        %v861 = vunpack.c.l.b16 %v458
        %v862 = vunpack.c.h.b16 %v458
        %v863 = vunpack.c.l.b16 %v459
        %v864 = vunpack.c.h.b16 %v459
        %v865 = vunpack.c.l.b16 %v460
        %v866 = vunpack.c.l.b16 %v461
        %v867 = vunpack.c.h.b16 %v461
        %v868 = vunpack.c.l.b16 %v462
        %v869 = vunpack.c.h.b16 %v462
        %v870 = vunpack.c.l.b16 %v463
        %v871 = vunpack.c.l.b16 %v464
        %v872 = vunpack.c.h.b16 %v464
        %v873 = vunpack.c.l.b16 %v465
        %v874 = vunpack.c.h.b16 %v465
        %v875 = vunpack.c.l.b16 %v466
        %v876 = vunpack.c.l.b16 %v467
        %v877 = vunpack.c.h.b16 %v467
        %v878 = vunpack.c.l.b16 %v468
        %v879 = vunpack.c.h.b16 %v468
        %v880 = vunpack.c.l.b16 %v469
        %v881 = vunpack.c.l.b16 %v470
        %v882 = vunpack.c.h.b16 %v470
        %v883 = vunpack.c.l.b16 %v471
        %v884 = vunpack.c.h.b16 %v471
        %v885 = vunpack.c.l.b16 %v472
        %v886 = vunpack.c.l.b16 %v473
        %v887 = vunpack.c.h.b16 %v473
        %v888 = vunpack.c.l.b16 %v474
        %v889 = vunpack.c.h.b16 %v474
        %v890 = vunpack.c.l.b16 %v475
        %v891 = vunpack.c.l.b16 %v476
        %v892 = vunpack.c.h.b16 %v476
        %v893 = vunpack.c.l.b16 %v477
        %v894 = vunpack.c.h.b16 %v477
        %v895 = vunpack.c.l.b16 %v478
        %v896 = vunpack.c.l.b16 %v479
        %v897 = vunpack.c.h.b16 %v479
        %v898 = vunpack.c.l.b16 %v480
        %v899 = vunpack.c.h.b16 %v480
        %v900 = vunpack.c.l.b16 %v481
        %v901 = vunpack.c.l.b16 %v482
        %v902 = vunpack.c.h.b16 %v482
        %v903 = vunpack.c.l.b16 %v483
        %v904 = vunpack.c.h.b16 %v483
        %v905 = vunpack.c.l.b16 %v484
        %v906 = vunpack.c.l.b16 %v485
        %v907 = vunpack.c.h.b16 %v485
        %v908 = vunpack.c.l.b16 %v486
        %v909 = vunpack.c.h.b16 %v486
        %v910 = vunpack.c.l.b16 %v487
        %v911 = vpack.c.b16 %v756, %v751
        %v912 = vpack.c.b16 %v757, %v752
        %v913 = vpack.c.b16 %v758, %v753
        %v914 = vpack.c.b16 %v759, %v754
        %v915 = vpack.c.b16 %v760, %v755
        %v916 = vpack.c.b16 %v766, %v761
        %v917 = vpack.c.b16 %v767, %v762
        %v918 = vpack.c.b16 %v768, %v763
        %v919 = vpack.c.b16 %v769, %v764
        %v920 = vpack.c.b16 %v770, %v765
        %v921 = vpack.c.b16 %v776, %v771
        %v922 = vpack.c.b16 %v777, %v772
        %v923 = vpack.c.b16 %v778, %v773
        %v924 = vpack.c.b16 %v779, %v774
        %v925 = vpack.c.b16 %v780, %v775
        %v926 = vpack.c.b16 %v786, %v781
        %v927 = vpack.c.b16 %v787, %v782
        %v928 = vpack.c.b16 %v788, %v783
        %v929 = vpack.c.b16 %v789, %v784
        %v930 = vpack.c.b16 %v790, %v785
        %v931 = vpack.c.b16 %v796, %v791
        %v932 = vpack.c.b16 %v797, %v792
        %v933 = vpack.c.b16 %v798, %v793
        %v934 = vpack.c.b16 %v799, %v794
        %v935 = vpack.c.b16 %v800, %v795
        %v936 = vpack.c.b16 %v806, %v801
        %v937 = vpack.c.b16 %v807, %v802
        %v938 = vpack.c.b16 %v808, %v803
        %v939 = vpack.c.b16 %v809, %v804
        %v940 = vpack.c.b16 %v810, %v805
        %v941 = vpack.c.b16 %v816, %v811
        %v942 = vpack.c.b16 %v817, %v812
        %v943 = vpack.c.b16 %v818, %v813
        %v944 = vpack.c.b16 %v819, %v814
        %v945 = vpack.c.b16 %v820, %v815
        %v946 = vpack.c.b16 %v826, %v821
        %v947 = vpack.c.b16 %v827, %v822
        %v948 = vpack.c.b16 %v828, %v823
        %v949 = vpack.c.b16 %v829, %v824
        %v950 = vpack.c.b16 %v830, %v825
        %v951 = vpack.c.b16 %v836, %v831
        %v952 = vpack.c.b16 %v837, %v832
        %v953 = vpack.c.b16 %v838, %v833
        %v954 = vpack.c.b16 %v839, %v834
        %v955 = vpack.c.b16 %v840, %v835
        %v956 = vpack.c.b16 %v846, %v841
        %v957 = vpack.c.b16 %v847, %v842
        %v958 = vpack.c.b16 %v848, %v843
        %v959 = vpack.c.b16 %v849, %v844
        %v960 = vpack.c.b16 %v850, %v845
        %v961 = vpack.c.b16 %v856, %v851
        %v962 = vpack.c.b16 %v857, %v852
        %v963 = vpack.c.b16 %v858, %v853
        %v964 = vpack.c.b16 %v859, %v854
        %v965 = vpack.c.b16 %v860, %v855
        %v966 = vpack.c.b16 %v866, %v861
        %v967 = vpack.c.b16 %v867, %v862
        %v968 = vpack.c.b16 %v868, %v863
        %v969 = vpack.c.b16 %v869, %v864
        %v970 = vpack.c.b16 %v870, %v865
        %v971 = vpack.c.b16 %v876, %v871
        %v972 = vpack.c.b16 %v877, %v872
        %v973 = vpack.c.b16 %v878, %v873
        %v974 = vpack.c.b16 %v879, %v874
        %v975 = vpack.c.b16 %v880, %v875
        %v976 = vpack.c.b16 %v886, %v881
        %v977 = vpack.c.b16 %v887, %v882
        %v978 = vpack.c.b16 %v888, %v883
        %v979 = vpack.c.b16 %v889, %v884
        %v980 = vpack.c.b16 %v890, %v885
        %v981 = vpack.c.b16 %v896, %v891
        %v982 = vpack.c.b16 %v897, %v892
        %v983 = vpack.c.b16 %v898, %v893
        %v984 = vpack.c.b16 %v899, %v894
        %v985 = vpack.c.b16 %v900, %v895
        %v986 = vpack.c.b16 %v906, %v901
        %v987 = vpack.c.b16 %v907, %v902
        %v988 = vpack.c.b16 %v908, %v903
        %v989 = vpack.c.b16 %v909, %v904
        %v990 = vpack.c.b16 %v910, %v905
        %v1205 = vunpack.c.l.b16 %v488
        %v1206 = vunpack.c.h.b16 %v488
        %v1207 = vunpack.c.l.b16 %v489
        %v1208 = vunpack.c.l.b16 %v490
        %v1209 = vunpack.c.h.b16 %v490
        %v1210 = vunpack.c.l.b16 %v491
        %v1211 = vunpack.c.l.b16 %v492
        %v1212 = vunpack.c.h.b16 %v492
        %v1213 = vunpack.c.l.b16 %v493
        %v1214 = vunpack.c.l.b16 %v494
        %v1215 = vunpack.c.h.b16 %v494
        %v1216 = vunpack.c.l.b16 %v495
        %v1217 = vunpack.c.l.b16 %v496
        %v1218 = vunpack.c.h.b16 %v496
        %v1219 = vunpack.c.l.b16 %v497
        %v1220 = vunpack.c.l.b16 %v498
        %v1221 = vunpack.c.h.b16 %v498
        %v1222 = vunpack.c.l.b16 %v499
        %v1223 = vunpack.c.l.b16 %v500
        %v1224 = vunpack.c.h.b16 %v500
        %v1225 = vunpack.c.l.b16 %v501
        %v1226 = vunpack.c.l.b16 %v502
        %v1227 = vunpack.c.h.b16 %v502
        %v1228 = vunpack.c.l.b16 %v503
        %v1229 = vunpack.c.l.b16 %v504
        %v1230 = vunpack.c.h.b16 %v504
        %v1231 = vunpack.c.l.b16 %v505
        %v1232 = vunpack.c.l.b16 %v506
        %v1233 = vunpack.c.h.b16 %v506
        %v1234 = vunpack.c.l.b16 %v507
        %v1235 = vunpack.c.l.b16 %v508
        %v1236 = vunpack.c.h.b16 %v508
        %v1237 = vunpack.c.l.b16 %v509
        %v1238 = vunpack.c.l.b16 %v510
        %v1239 = vunpack.c.h.b16 %v510
        %v1240 = vunpack.c.l.b16 %v511
        %v1241 = vunpack.c.l.b16 %v512
        %v1242 = vunpack.c.h.b16 %v512
        %v1243 = vunpack.c.l.b16 %v513
        %v1244 = vunpack.c.l.b16 %v514
        %v1245 = vunpack.c.h.b16 %v514
        %v1246 = vunpack.c.l.b16 %v515
        %v1247 = vunpack.c.l.b16 %v516
        %v1248 = vunpack.c.h.b16 %v516
        %v1249 = vunpack.c.l.b16 %v517
        %v1250 = vunpack.c.l.b16 %v518
        %v1251 = vunpack.c.h.b16 %v518
        %v1252 = vunpack.c.l.b16 %v519
        %v1253 = vunpack.c.l.b16 %v520
        %v1254 = vunpack.c.h.b16 %v520
        %v1255 = vunpack.c.l.b16 %v521
        %v1256 = vunpack.c.l.b16 %v522
        %v1257 = vunpack.c.h.b16 %v522
        %v1258 = vunpack.c.l.b16 %v523
        %v1259 = vunpack.c.l.b16 %v524
        %v1260 = vunpack.c.h.b16 %v524
        %v1261 = vunpack.c.l.b16 %v525
        %v1262 = vunpack.c.l.b16 %v526
        %v1263 = vunpack.c.h.b16 %v526
        %v1264 = vunpack.c.l.b16 %v527
        %v1265 = vunpack.c.l.b16 %v528
        %v1266 = vunpack.c.h.b16 %v528
        %v1267 = vunpack.c.l.b16 %v529
        %v1268 = vunpack.c.l.b16 %v530
        %v1269 = vunpack.c.h.b16 %v530
        %v1270 = vunpack.c.l.b16 %v531
        %v1271 = vunpack.c.l.b16 %v532
        %v1272 = vunpack.c.h.b16 %v532
        %v1273 = vunpack.c.l.b16 %v533
        %v1274 = vunpack.c.l.b16 %v534
        %v1275 = vunpack.c.h.b16 %v534
        %v1276 = vunpack.c.l.b16 %v535
        %v1277 = vunpack.c.l.b16 %v536
        %v1278 = vunpack.c.h.b16 %v536
        %v1279 = vunpack.c.l.b16 %v537
        %v1280 = vunpack.c.l.b16 %v538
        %v1281 = vunpack.c.h.b16 %v538
        %v1282 = vunpack.c.l.b16 %v539
        %v1283 = vunpack.c.l.b16 %v540
        %v1284 = vunpack.c.h.b16 %v540
        %v1285 = vunpack.c.l.b16 %v541
        %v1286 = vunpack.c.l.b16 %v542
        %v1287 = vunpack.c.h.b16 %v542
        %v1288 = vunpack.c.l.b16 %v543
        %v1289 = vunpack.c.l.b16 %v544
        %v1290 = vunpack.c.h.b16 %v544
        %v1291 = vunpack.c.l.b16 %v545
        %v1292 = vunpack.c.l.b16 %v546
        %v1293 = vunpack.c.h.b16 %v546
        %v1294 = vunpack.c.l.b16 %v547
        %v1295 = vunpack.c.l.b16 %v548
        %v1296 = vunpack.c.h.b16 %v548
        %v1297 = vunpack.c.l.b16 %v549
        %v1298 = vunpack.c.l.b16 %v550
        %v1299 = vunpack.c.h.b16 %v550
        %v1300 = vunpack.c.l.b16 %v551
        %v1301 = vunpack.c.l.b16 %v552
        %v1302 = vunpack.c.h.b16 %v552
        %v1303 = vunpack.c.l.b16 %v553
        %v1304 = vunpack.c.l.b16 %v554
        %v1305 = vunpack.c.h.b16 %v554
        %v1306 = vunpack.c.l.b16 %v555
        %v1307 = vunpack.c.l.b16 %v556
        %v1308 = vunpack.c.h.b16 %v556
        %v1309 = vunpack.c.l.b16 %v557
        %v1310 = vunpack.c.l.b16 %v558
        %v1311 = vunpack.c.h.b16 %v558
        %v1312 = vunpack.c.l.b16 %v559
        %v1313 = vunpack.c.l.b16 %v560
        %v1314 = vunpack.c.h.b16 %v560
        %v1315 = vunpack.c.l.b16 %v561
        %v1316 = vunpack.c.l.b16 %v562
        %v1317 = vunpack.c.h.b16 %v562
        %v1318 = vunpack.c.l.b16 %v563
        %v1319 = vunpack.c.l.b16 %v564
        %v1320 = vunpack.c.h.b16 %v564
        %v1321 = vunpack.c.l.b16 %v565
        %v1322 = vunpack.c.l.b16 %v566
        %v1323 = vunpack.c.h.b16 %v566
        %v1324 = vunpack.c.l.b16 %v567
        %v1325 = vunpack.c.l.b16 %v568
        %v1326 = vunpack.c.h.b16 %v568
        %v1327 = vunpack.c.l.b16 %v569
        %v1328 = vunpack.c.l.b16 %v570
        %v1329 = vunpack.c.h.b16 %v570
        %v1330 = vunpack.c.l.b16 %v571
        %v1331 = vunpack.c.l.b16 %v572
        %v1332 = vunpack.c.h.b16 %v572
        %v1333 = vunpack.c.l.b16 %v573
        %v1334 = vunpack.c.l.b16 %v574
        %v1335 = vunpack.c.h.b16 %v574
        %v1336 = vunpack.c.l.b16 %v575
        %v1337 = vunpack.c.l.b16 %v576
        %v1338 = vunpack.c.h.b16 %v576
        %v1339 = vunpack.c.l.b16 %v577
        %v1340 = vunpack.c.l.b16 %v578
        %v1341 = vunpack.c.h.b16 %v578
        %v1342 = vunpack.c.l.b16 %v579
        %v1343 = vunpack.c.l.b16 %v580
        %v1344 = vunpack.c.h.b16 %v580
        %v1345 = vunpack.c.l.b16 %v581
        %v1346 = vunpack.c.l.b16 %v582
        %v1347 = vunpack.c.h.b16 %v582
        %v1348 = vunpack.c.l.b16 %v583
        %v1349 = vunpack.c.l.b16 %v584
        %v1350 = vunpack.c.h.b16 %v584
        %v1351 = vunpack.c.l.b16 %v585
        %v1352 = vunpack.c.l.b16 %v586
        %v1353 = vunpack.c.h.b16 %v586
        %v1354 = vunpack.c.l.b16 %v587
        %v1355 = vunpack.c.l.b16 %v588
        %v1356 = vunpack.c.h.b16 %v588
        %v1357 = vunpack.c.l.b16 %v589
        %v1358 = vunpack.c.l.b16 %v590
        %v1359 = vunpack.c.h.b16 %v590
        %v1360 = vunpack.c.l.b16 %v591
        %v1361 = vunpack.c.l.b16 %v592
        %v1362 = vunpack.c.h.b16 %v592
        %v1363 = vunpack.c.l.b16 %v593
        %v1364 = vunpack.c.l.b16 %v594
        %v1365 = vunpack.c.h.b16 %v594
        %v1366 = vunpack.c.l.b16 %v595
        %v1367 = vunpack.c.l.b16 %v596
        %v1368 = vunpack.c.h.b16 %v596
        %v1369 = vunpack.c.l.b16 %v597
        %v1370 = vunpack.c.l.b16 %v598
        %v1371 = vunpack.c.h.b16 %v598
        %v1372 = vunpack.c.l.b16 %v599
        %v1373 = vunpack.c.l.b16 %v600
        %v1374 = vunpack.c.h.b16 %v600
        %v1375 = vunpack.c.l.b16 %v601
        %v1376 = vunpack.c.l.b16 %v602
        %v1377 = vunpack.c.h.b16 %v602
        %v1378 = vunpack.c.l.b16 %v603
        %v1379 = vunpack.c.l.b16 %v604
        %v1380 = vunpack.c.h.b16 %v604
        %v1381 = vunpack.c.l.b16 %v605
        %v1382 = vunpack.c.l.b16 %v606
        %v1383 = vunpack.c.h.b16 %v606
        %v1384 = vunpack.c.l.b16 %v607
        %v1385 = vunpack.c.l.b16 %v608
        %v1386 = vunpack.c.h.b16 %v608
        %v1387 = vunpack.c.l.b16 %v609
        %v1388 = vunpack.c.l.b16 %v610
        %v1389 = vunpack.c.h.b16 %v610
        %v1390 = vunpack.c.l.b16 %v611
        %v1391 = vunpack.c.l.b16 %v612
        %v1392 = vunpack.c.h.b16 %v612
        %v1393 = vunpack.c.l.b16 %v613
        %v1394 = vunpack.c.l.b16 %v614
        %v1395 = vunpack.c.h.b16 %v614
        %v1396 = vunpack.c.l.b16 %v615
        %v1397 = vunpack.c.l.b16 %v616
        %v1398 = vunpack.c.h.b16 %v616
        %v1399 = vunpack.c.l.b16 %v617
        %v1400 = vunpack.c.l.b16 %v618
        %v1401 = vunpack.c.h.b16 %v618
        %v1402 = vunpack.c.l.b16 %v619
        %v1403 = vunpack.c.l.b16 %v620
        %v1404 = vunpack.c.h.b16 %v620
        %v1405 = vunpack.c.l.b16 %v621
        %v1406 = vunpack.c.l.b16 %v622
        %v1407 = vunpack.c.h.b16 %v622
        %v1408 = vunpack.c.l.b16 %v623
        %v1409 = vunpack.c.l.b16 %v624
        %v1410 = vunpack.c.h.b16 %v624
        %v1411 = vunpack.c.l.b16 %v625
        %v1412 = vunpack.c.l.b16 %v626
        %v1413 = vunpack.c.h.b16 %v626
        %v1414 = vunpack.c.l.b16 %v627
        %v1415 = vunpack.c.l.b16 %v628
        %v1416 = vunpack.c.h.b16 %v628
        %v1417 = vunpack.c.l.b16 %v629
        %v1418 = vunpack.c.l.b16 %v630
        %v1419 = vunpack.c.h.b16 %v630
        %v1420 = vunpack.c.l.b16 %v631
        %v1421 = vunpack.c.l.b16 %v632
        %v1422 = vunpack.c.h.b16 %v632
        %v1423 = vunpack.c.l.b16 %v633
        %v1424 = vunpack.c.l.b16 %v634
        %v1425 = vunpack.c.h.b16 %v634
        %v1426 = vunpack.c.l.b16 %v635
        %v1427 = vunpack.c.l.b16 %v636
        %v1428 = vunpack.c.h.b16 %v636
        %v1429 = vunpack.c.l.b16 %v637
        %v1430 = vpack.c.b16 %v1208, %v1205
        %v1431 = vpack.c.b16 %v1209, %v1206
        %v1432 = vpack.c.b16 %v1210, %v1207
        %v1433 = vpack.c.b16 %v1214, %v1211
        %v1434 = vpack.c.b16 %v1215, %v1212
        %v1435 = vpack.c.b16 %v1216, %v1213
        %v1436 = vpack.c.b16 %v1220, %v1217
        %v1437 = vpack.c.b16 %v1221, %v1218
        %v1438 = vpack.c.b16 %v1222, %v1219
        %v1439 = vpack.c.b16 %v1226, %v1223
        %v1440 = vpack.c.b16 %v1227, %v1224
        %v1441 = vpack.c.b16 %v1228, %v1225
        %v1442 = vpack.c.b16 %v1232, %v1229
        %v1443 = vpack.c.b16 %v1233, %v1230
        %v1444 = vpack.c.b16 %v1234, %v1231
        %v1445 = vpack.c.b16 %v1238, %v1235
        %v1446 = vpack.c.b16 %v1239, %v1236
        %v1447 = vpack.c.b16 %v1240, %v1237
        %v1448 = vpack.c.b16 %v1244, %v1241
        %v1449 = vpack.c.b16 %v1245, %v1242
        %v1450 = vpack.c.b16 %v1246, %v1243
        %v1451 = vpack.c.b16 %v1250, %v1247
        %v1452 = vpack.c.b16 %v1251, %v1248
        %v1453 = vpack.c.b16 %v1252, %v1249
        %v1454 = vpack.c.b16 %v1256, %v1253
        %v1455 = vpack.c.b16 %v1257, %v1254
        %v1456 = vpack.c.b16 %v1258, %v1255
        %v1457 = vpack.c.b16 %v1262, %v1259
        %v1458 = vpack.c.b16 %v1263, %v1260
        %v1459 = vpack.c.b16 %v1264, %v1261
        %v1460 = vpack.c.b16 %v1268, %v1265
        %v1461 = vpack.c.b16 %v1269, %v1266
        %v1462 = vpack.c.b16 %v1270, %v1267
        %v1463 = vpack.c.b16 %v1274, %v1271
        %v1464 = vpack.c.b16 %v1275, %v1272
        %v1465 = vpack.c.b16 %v1276, %v1273
        %v1466 = vpack.c.b16 %v1280, %v1277
        %v1467 = vpack.c.b16 %v1281, %v1278
        %v1468 = vpack.c.b16 %v1282, %v1279
        %v1469 = vpack.c.b16 %v1286, %v1283
        %v1470 = vpack.c.b16 %v1287, %v1284
        %v1471 = vpack.c.b16 %v1288, %v1285
        %v1472 = vpack.c.b16 %v1292, %v1289
        %v1473 = vpack.c.b16 %v1293, %v1290
        %v1474 = vpack.c.b16 %v1294, %v1291
        %v1475 = vpack.c.b16 %v1298, %v1295
        %v1476 = vpack.c.b16 %v1299, %v1296
        %v1477 = vpack.c.b16 %v1300, %v1297
        %v1478 = vpack.c.b16 %v1304, %v1301
        %v1479 = vpack.c.b16 %v1305, %v1302
        %v1480 = vpack.c.b16 %v1306, %v1303
        %v1481 = vpack.c.b16 %v1310, %v1307
        %v1482 = vpack.c.b16 %v1311, %v1308
        %v1483 = vpack.c.b16 %v1312, %v1309
        %v1484 = vpack.c.b16 %v1316, %v1313
        %v1485 = vpack.c.b16 %v1317, %v1314
        %v1486 = vpack.c.b16 %v1318, %v1315
        %v1487 = vpack.c.b16 %v1322, %v1319
        %v1488 = vpack.c.b16 %v1323, %v1320
        %v1489 = vpack.c.b16 %v1324, %v1321
        %v1490 = vpack.c.b16 %v1328, %v1325
        %v1491 = vpack.c.b16 %v1329, %v1326
        %v1492 = vpack.c.b16 %v1330, %v1327
        %v1493 = vpack.c.b16 %v1334, %v1331
        %v1494 = vpack.c.b16 %v1335, %v1332
        %v1495 = vpack.c.b16 %v1336, %v1333
        %v1496 = vpack.c.b16 %v1340, %v1337
        %v1497 = vpack.c.b16 %v1341, %v1338
        %v1498 = vpack.c.b16 %v1342, %v1339
        %v1499 = vpack.c.b16 %v1346, %v1343
        %v1500 = vpack.c.b16 %v1347, %v1344
        %v1501 = vpack.c.b16 %v1348, %v1345
        %v1502 = vpack.c.b16 %v1352, %v1349
        %v1503 = vpack.c.b16 %v1353, %v1350
        %v1504 = vpack.c.b16 %v1354, %v1351
        %v1505 = vpack.c.b16 %v1358, %v1355
        %v1506 = vpack.c.b16 %v1359, %v1356
        %v1507 = vpack.c.b16 %v1360, %v1357
        %v1508 = vpack.c.b16 %v1364, %v1361
        %v1509 = vpack.c.b16 %v1365, %v1362
        %v1510 = vpack.c.b16 %v1366, %v1363
        %v1511 = vpack.c.b16 %v1370, %v1367
        %v1512 = vpack.c.b16 %v1371, %v1368
        %v1513 = vpack.c.b16 %v1372, %v1369
        %v1514 = vpack.c.b16 %v1376, %v1373
        %v1515 = vpack.c.b16 %v1377, %v1374
        %v1516 = vpack.c.b16 %v1378, %v1375
        %v1517 = vpack.c.b16 %v1382, %v1379
        %v1518 = vpack.c.b16 %v1383, %v1380
        %v1519 = vpack.c.b16 %v1384, %v1381
        %v1520 = vpack.c.b16 %v1388, %v1385
        %v1521 = vpack.c.b16 %v1389, %v1386
        %v1522 = vpack.c.b16 %v1390, %v1387
        %v1523 = vpack.c.b16 %v1394, %v1391
        %v1524 = vpack.c.b16 %v1395, %v1392
        %v1525 = vpack.c.b16 %v1396, %v1393
        %v1526 = vpack.c.b16 %v1400, %v1397
        %v1527 = vpack.c.b16 %v1401, %v1398
        %v1528 = vpack.c.b16 %v1402, %v1399
        %v1529 = vpack.c.b16 %v1406, %v1403
        %v1530 = vpack.c.b16 %v1407, %v1404
        %v1531 = vpack.c.b16 %v1408, %v1405
        %v1532 = vpack.c.b16 %v1412, %v1409
        %v1533 = vpack.c.b16 %v1413, %v1410
        %v1534 = vpack.c.b16 %v1414, %v1411
        %v1535 = vpack.c.b16 %v1418, %v1415
        %v1536 = vpack.c.b16 %v1419, %v1416
        %v1537 = vpack.c.b16 %v1420, %v1417
        %v1538 = vpack.c.b16 %v1424, %v1421
        %v1539 = vpack.c.b16 %v1425, %v1422
        %v1540 = vpack.c.b16 %v1426, %v1423
        %v1541 = vpack.c.b16 %v1427, %v1427
        %v1542 = vpack.c.b16 %v1428, %v1428
        %v1543 = vpack.c.b16 %v1429, %v1429
        %vm1655 = vcmask 719872
        %v1657 = vsel %vm1655, %v915, 0
        %v1660 = vsel %vm1655, %v920, 0
        %v1663 = vsel %vm1655, %v925, 0
        %v1666 = vsel %vm1655, %v930, 0
        %v1669 = vsel %vm1655, %v935, 0
        %v1672 = vsel %vm1655, %v940, 0
        %v1675 = vsel %vm1655, %v945, 0
        %v1678 = vsel %vm1655, %v950, 0
        %v1681 = vsel %vm1655, %v955, 0
        %v1684 = vsel %vm1655, %v960, 0
        %v1687 = vsel %vm1655, %v965, 0
        %v1690 = vsel %vm1655, %v970, 0
        %v1693 = vsel %vm1655, %v975, 0
        %v1696 = vsel %vm1655, %v980, 0
        %v1699 = vsel %vm1655, %v985, 0
        %v1702 = vsel %vm1655, %v990, 0
        %vm1704 = vcmask 1043456
        %v1706 = vsel %vm1704, %v1541, 0
        %v1709 = vsel %vm1704, %v1542, 0
        %v1712 = vsel %vm1704, %v1543, 0
        %1714 = vmatprep.subr.bf16.mxu0 %v1431
        %1715 = vmatpush1.bf16.msra.mxu0 %v1430
        %1716 = vmatprep.subr.bf16.mxu0 %v1434
        %1717 = vmatpush1.bf16.msra.mxu0 %v1433
        %1718 = vmatprep.subr.bf16.mxu0 %v1437
        %1719 = vmatpush1.bf16.msra.mxu0 %v1436
        %1720 = vmatprep.subr.bf16.mxu0 %v1440
        %1721 = vmatpush1.bf16.msra.mxu0 %v1439
        %1722 = vmatprep.subr.bf16.mxu0 %v1443
        %1723 = vmatpush1.bf16.msra.mxu0 %v1442
        %1724 = vmatprep.subr.bf16.mxu0 %v1446
        %1725 = vmatpush1.bf16.msra.mxu0 %v1445
        %1726 = vmatprep.subr.bf16.mxu0 %v1449
        %1727 = vmatpush1.bf16.msra.mxu0 %v1448
        %1728 = vmatprep.subr.bf16.mxu0 %v1452
        %1729 = vmatpush1.bf16.msra.mxu0 %v1451
        %1730 = vmatprep.subr.bf16.mxu0 %v1455
        %1731 = vmatpush1.bf16.msra.mxu0 %v1454
        %1732 = vmatprep.subr.bf16.mxu0 %v1458
        %1733 = vmatpush1.bf16.msra.mxu0 %v1457
        %1734 = vmatprep.subr.bf16.mxu0 %v1461
        %1735 = vmatpush1.bf16.msra.mxu0 %v1460
        %1736 = vmatprep.subr.bf16.mxu0 %v1464
        %1737 = vmatpush1.bf16.msra.mxu0 %v1463
        %1738 = vmatprep.subr.bf16.mxu0 %v1467
        %1739 = vmatpush1.bf16.msra.mxu0 %v1466
        %1740 = vmatprep.subr.bf16.mxu0 %v1470
        %1741 = vmatpush1.bf16.msra.mxu0 %v1469
        %1742 = vmatprep.subr.bf16.mxu0 %v1473
        %1743 = vmatpush1.bf16.msra.mxu0 %v1472
        %1744 = vmatprep.subr.bf16.mxu0 %v1476
        %1745 = vmatpush1.bf16.msra.mxu0 %v1475
        %1746 = vmatprep.mubr.bf16.mxu0 %v912
        %1747 = vmatmul.mubr.bf16.gmra.mrb[0].mxu0 %v911
        %v1748 = vpop.f32.mrb[0].mxu0
        %v1749 = vadd.f32 %v643, %v1748
        %v1750 = vpop.f32.mrb[0].mxu0
        %v1751 = vadd.f32 %v647, %v1750
        %v1752 = vpop.f32.mrb[0].mxu0
        %v1753 = vadd.f32 %v643, %v1752
        %v1754 = vpop.f32.mrb[0].mxu0
        %v1755 = vadd.f32 %v647, %v1754
        %1756 = vmatprep.mubr.bf16.mxu0 %v917
        %1757 = vmatmul.mubr.bf16.gmra.mrb[0].mxu0 %v916
        %v1758 = vpop.f32.mrb[0].mxu0
        %v1759 = vadd.f32 %v643, %v1758
        %v1760 = vpop.f32.mrb[0].mxu0
        %v1761 = vadd.f32 %v647, %v1760
        %v1762 = vpop.f32.mrb[0].mxu0
        %v1763 = vadd.f32 %v643, %v1762
        %v1764 = vpop.f32.mrb[0].mxu0
        %v1765 = vadd.f32 %v647, %v1764
        %1766 = vmatprep.mubr.bf16.mxu0 %v922
        %1767 = vmatmul.mubr.bf16.gmra.mrb[0].mxu0 %v921
        %v1768 = vpop.f32.mrb[0].mxu0
        %v1769 = vadd.f32 %v643, %v1768
        %v1770 = vpop.f32.mrb[0].mxu0
        %v1771 = vadd.f32 %v647, %v1770
        %v1772 = vpop.f32.mrb[0].mxu0
        %v1773 = vadd.f32 %v643, %v1772
        %v1774 = vpop.f32.mrb[0].mxu0
        %v1775 = vadd.f32 %v647, %v1774
        %1776 = vmatprep.mubr.bf16.mxu0 %v927
        %1777 = vmatmul.mubr.bf16.gmra.mrb[0].mxu0 %v926
        %v1778 = vpop.f32.mrb[0].mxu0
        %v1779 = vadd.f32 %v643, %v1778
        %v1780 = vpop.f32.mrb[0].mxu0
        %v1781 = vadd.f32 %v647, %v1780
        %v1782 = vpop.f32.mrb[0].mxu0
        %v1783 = vadd.f32 %v643, %v1782
        %v1784 = vpop.f32.mrb[0].mxu0
        %v1785 = vadd.f32 %v647, %v1784
        %1786 = vmatprep.mubr.bf16.mxu0 %v932
        %1787 = vmatmul.mubr.bf16.gmra.mrb[0].mxu0 %v931
        %v1788 = vpop.f32.mrb[0].mxu0
        %v1789 = vadd.f32 %v643, %v1788
        %v1790 = vpop.f32.mrb[0].mxu0
        %v1791 = vadd.f32 %v647, %v1790
        %v1792 = vpop.f32.mrb[0].mxu0
        %v1793 = vadd.f32 %v643, %v1792
        %v1794 = vpop.f32.mrb[0].mxu0
        %v1795 = vadd.f32 %v647, %v1794
        %1796 = vmatprep.mubr.bf16.mxu0 %v937
        %1797 = vmatmul.mubr.bf16.gmra.mrb[0].mxu0 %v936
        %v1798 = vpop.f32.mrb[0].mxu0
        %v1799 = vadd.f32 %v643, %v1798
        %v1800 = vpop.f32.mrb[0].mxu0
        %v1801 = vadd.f32 %v647, %v1800
        %v1802 = vpop.f32.mrb[0].mxu0
        %v1803 = vadd.f32 %v643, %v1802
        %v1804 = vpop.f32.mrb[0].mxu0
        %v1805 = vadd.f32 %v647, %v1804
        %1806 = vmatprep.mubr.bf16.mxu0 %v942
        %1807 = vmatmul.mubr.bf16.gmra.mrb[0].mxu0 %v941
        %v1808 = vpop.f32.mrb[0].mxu0
        %v1809 = vadd.f32 %v643, %v1808
        %v1810 = vpop.f32.mrb[0].mxu0
        %v1811 = vadd.f32 %v647, %v1810
        %v1812 = vpop.f32.mrb[0].mxu0
        %v1813 = vadd.f32 %v643, %v1812
        %v1814 = vpop.f32.mrb[0].mxu0
        %v1815 = vadd.f32 %v647, %v1814
        %1816 = vmatprep.mubr.bf16.mxu0 %v947
        %1817 = vmatmul.mubr.bf16.gmra.mrb[0].mxu0 %v946
        %v1818 = vpop.f32.mrb[0].mxu0
        %v1819 = vadd.f32 %v643, %v1818
        %v1820 = vpop.f32.mrb[0].mxu0
        %v1821 = vadd.f32 %v647, %v1820
        %v1822 = vpop.f32.mrb[0].mxu0
        %v1823 = vadd.f32 %v643, %v1822
        %v1824 = vpop.f32.mrb[0].mxu0
        %v1825 = vadd.f32 %v647, %v1824
        %1826 = vmatprep.mubr.bf16.mxu0 %v952
        %1827 = vmatmul.mubr.bf16.gmra.mrb[0].mxu0 %v951
        %v1828 = vpop.f32.mrb[0].mxu0
        %v1829 = vadd.f32 %v643, %v1828
        %v1830 = vpop.f32.mrb[0].mxu0
        %v1831 = vadd.f32 %v647, %v1830
        %v1832 = vpop.f32.mrb[0].mxu0
        %v1833 = vadd.f32 %v643, %v1832
        %v1834 = vpop.f32.mrb[0].mxu0
        %v1835 = vadd.f32 %v647, %v1834
        %1836 = vmatprep.mubr.bf16.mxu0 %v957
        %1837 = vmatmul.mubr.bf16.gmra.mrb[0].mxu0 %v956
        %v1838 = vpop.f32.mrb[0].mxu0
        %v1839 = vadd.f32 %v643, %v1838
        %v1840 = vpop.f32.mrb[0].mxu0
        %v1841 = vadd.f32 %v647, %v1840
        %v1842 = vpop.f32.mrb[0].mxu0
        %v1843 = vadd.f32 %v643, %v1842
        %v1844 = vpop.f32.mrb[0].mxu0
        %v1845 = vadd.f32 %v647, %v1844
        %1846 = vmatprep.mubr.bf16.mxu0 %v962
        %1847 = vmatmul.mubr.bf16.gmra.mrb[0].mxu0 %v961
        %v1848 = vpop.f32.mrb[0].mxu0
        %v1849 = vadd.f32 %v643, %v1848
        %v1850 = vpop.f32.mrb[0].mxu0
        %v1851 = vadd.f32 %v647, %v1850
        %v1852 = vpop.f32.mrb[0].mxu0
        %v1853 = vadd.f32 %v643, %v1852
        %v1854 = vpop.f32.mrb[0].mxu0
        %v1855 = vadd.f32 %v647, %v1854
        %1856 = vmatprep.mubr.bf16.mxu0 %v967
        %1857 = vmatmul.mubr.bf16.gmra.mrb[0].mxu0 %v966
        %v1858 = vpop.f32.mrb[0].mxu0
        %v1859 = vadd.f32 %v643, %v1858
        %v1860 = vpop.f32.mrb[0].mxu0
        %v1861 = vadd.f32 %v647, %v1860
        %v1862 = vpop.f32.mrb[0].mxu0
        %v1863 = vadd.f32 %v643, %v1862
        %v1864 = vpop.f32.mrb[0].mxu0
        %v1865 = vadd.f32 %v647, %v1864
        %1866 = vmatprep.mubr.bf16.mxu0 %v972
        %1867 = vmatmul.mubr.bf16.gmra.mrb[0].mxu0 %v971
        %v1868 = vpop.f32.mrb[0].mxu0
        %v1869 = vadd.f32 %v643, %v1868
        %v1870 = vpop.f32.mrb[0].mxu0
        %v1871 = vadd.f32 %v647, %v1870
        %v1872 = vpop.f32.mrb[0].mxu0
        %v1873 = vadd.f32 %v643, %v1872
        %v1874 = vpop.f32.mrb[0].mxu0
        %v1875 = vadd.f32 %v647, %v1874
        %1876 = vmatprep.mubr.bf16.mxu0 %v977
        %1877 = vmatmul.mubr.bf16.gmra.mrb[0].mxu0 %v976
        %v1878 = vpop.f32.mrb[0].mxu0
        %v1879 = vadd.f32 %v643, %v1878
        %v1880 = vpop.f32.mrb[0].mxu0
        %v1881 = vadd.f32 %v647, %v1880
        %v1882 = vpop.f32.mrb[0].mxu0
        %v1883 = vadd.f32 %v643, %v1882
        %v1884 = vpop.f32.mrb[0].mxu0
        %v1885 = vadd.f32 %v647, %v1884
        %1886 = vmatprep.mubr.bf16.mxu0 %v982
        %1887 = vmatmul.mubr.bf16.gmra.mrb[0].mxu0 %v981
        %v1888 = vpop.f32.mrb[0].mxu0
        %v1889 = vadd.f32 %v643, %v1888
        %v1890 = vpop.f32.mrb[0].mxu0
        %v1891 = vadd.f32 %v647, %v1890
        %v1892 = vpop.f32.mrb[0].mxu0
        %v1893 = vadd.f32 %v643, %v1892
        %v1894 = vpop.f32.mrb[0].mxu0
        %v1895 = vadd.f32 %v647, %v1894
        %1896 = vmatprep.mubr.bf16.mxu0 %v987
        %1897 = vmatmul.mubr.bf16.gmra.mrb[0].mxu0 %v986
        %v1898 = vpop.f32.mrb[0].mxu0
        %v1899 = vadd.f32 %v643, %v1898
        %v1900 = vpop.f32.mrb[0].mxu0
        %v1901 = vadd.f32 %v647, %v1900
        %v1902 = vpop.f32.mrb[0].mxu0
        %v1903 = vadd.f32 %v643, %v1902
        %v1904 = vpop.f32.mrb[0].mxu0
        %v1905 = vadd.f32 %v647, %v1904
        %1906 = vdwg.mxu0
        %1907 = vmatprep.subr.bf16.mxu0 %v1479
        %1908 = vmatpush1.bf16.msra.mxu0 %v1478
        %1909 = vmatprep.subr.bf16.mxu0 %v1482
        %1910 = vmatpush1.bf16.msra.mxu0 %v1481
        %1911 = vmatprep.subr.bf16.mxu0 %v1485
        %1912 = vmatpush1.bf16.msra.mxu0 %v1484
        %1913 = vmatprep.subr.bf16.mxu0 %v1488
        %1914 = vmatpush1.bf16.msra.mxu0 %v1487
        %1915 = vmatprep.subr.bf16.mxu0 %v1491
        %1916 = vmatpush1.bf16.msra.mxu0 %v1490
        %1917 = vmatprep.subr.bf16.mxu0 %v1494
        %1918 = vmatpush1.bf16.msra.mxu0 %v1493
        %1919 = vmatprep.subr.bf16.mxu0 %v1497
        %1920 = vmatpush1.bf16.msra.mxu0 %v1496
        %1921 = vmatprep.subr.bf16.mxu0 %v1500
        %1922 = vmatpush1.bf16.msra.mxu0 %v1499
        %1923 = vmatprep.subr.bf16.mxu0 %v1503
        %1924 = vmatpush1.bf16.msra.mxu0 %v1502
        %1925 = vmatprep.subr.bf16.mxu0 %v1506
        %1926 = vmatpush1.bf16.msra.mxu0 %v1505
        %1927 = vmatprep.subr.bf16.mxu0 %v1509
        %1928 = vmatpush1.bf16.msra.mxu0 %v1508
        %1929 = vmatprep.subr.bf16.mxu0 %v1512
        %1930 = vmatpush1.bf16.msra.mxu0 %v1511
        %1931 = vmatprep.subr.bf16.mxu0 %v1515
        %1932 = vmatpush1.bf16.msra.mxu0 %v1514
        %1933 = vmatprep.subr.bf16.mxu0 %v1518
        %1934 = vmatpush1.bf16.msra.mxu0 %v1517
        %1935 = vmatprep.subr.bf16.mxu0 %v1521
        %1936 = vmatpush1.bf16.msra.mxu0 %v1520
        %1937 = vmatprep.subr.bf16.mxu0 %v1524
        %1938 = vmatpush1.bf16.msra.mxu0 %v1523
        %1939 = vmatprep.mubr.bf16.mxu0 %v914
        %1940 = vmatmul.mubr.bf16.gmra.mrb[0].mxu0 %v913
        %v1941 = vpop.f32.mrb[0].mxu0
        %v1942 = vadd.f32 %v1749, %v1941
        %v1943 = vpop.f32.mrb[0].mxu0
        %v1944 = vadd.f32 %v1751, %v1943
        %v1945 = vpop.f32.mrb[0].mxu0
        %v1946 = vadd.f32 %v1753, %v1945
        %v1947 = vpop.f32.mrb[0].mxu0
        %v1948 = vadd.f32 %v1755, %v1947
        %1949 = vmatprep.mubr.bf16.mxu0 %v919
        %1950 = vmatmul.mubr.bf16.gmra.mrb[0].mxu0 %v918
        %v1951 = vpop.f32.mrb[0].mxu0
        %v1952 = vadd.f32 %v1759, %v1951
        %v1953 = vpop.f32.mrb[0].mxu0
        %v1954 = vadd.f32 %v1761, %v1953
        %v1955 = vpop.f32.mrb[0].mxu0
        %v1956 = vadd.f32 %v1763, %v1955
        %v1957 = vpop.f32.mrb[0].mxu0
        %v1958 = vadd.f32 %v1765, %v1957
        %1959 = vmatprep.mubr.bf16.mxu0 %v924
        %1960 = vmatmul.mubr.bf16.gmra.mrb[0].mxu0 %v923
        %v1961 = vpop.f32.mrb[0].mxu0
        %v1962 = vadd.f32 %v1769, %v1961
        %v1963 = vpop.f32.mrb[0].mxu0
        %v1964 = vadd.f32 %v1771, %v1963
        %v1965 = vpop.f32.mrb[0].mxu0
        %v1966 = vadd.f32 %v1773, %v1965
        %v1967 = vpop.f32.mrb[0].mxu0
        %v1968 = vadd.f32 %v1775, %v1967
        %1969 = vmatprep.mubr.bf16.mxu0 %v929
        %1970 = vmatmul.mubr.bf16.gmra.mrb[0].mxu0 %v928
        %v1971 = vpop.f32.mrb[0].mxu0
        %v1972 = vadd.f32 %v1779, %v1971
        %v1973 = vpop.f32.mrb[0].mxu0
        %v1974 = vadd.f32 %v1781, %v1973
        %v1975 = vpop.f32.mrb[0].mxu0
        %v1976 = vadd.f32 %v1783, %v1975
        %v1977 = vpop.f32.mrb[0].mxu0
        %v1978 = vadd.f32 %v1785, %v1977
        %1979 = vmatprep.mubr.bf16.mxu0 %v934
        %1980 = vmatmul.mubr.bf16.gmra.mrb[0].mxu0 %v933
        %v1981 = vpop.f32.mrb[0].mxu0
        %v1982 = vadd.f32 %v1789, %v1981
        %v1983 = vpop.f32.mrb[0].mxu0
        %v1984 = vadd.f32 %v1791, %v1983
        %v1985 = vpop.f32.mrb[0].mxu0
        %v1986 = vadd.f32 %v1793, %v1985
        %v1987 = vpop.f32.mrb[0].mxu0
        %v1988 = vadd.f32 %v1795, %v1987
        %1989 = vmatprep.mubr.bf16.mxu0 %v939
        %1990 = vmatmul.mubr.bf16.gmra.mrb[0].mxu0 %v938
        %v1991 = vpop.f32.mrb[0].mxu0
        %v1992 = vadd.f32 %v1799, %v1991
        %v1993 = vpop.f32.mrb[0].mxu0
        %v1994 = vadd.f32 %v1801, %v1993
        %v1995 = vpop.f32.mrb[0].mxu0
        %v1996 = vadd.f32 %v1803, %v1995
        %v1997 = vpop.f32.mrb[0].mxu0
        %v1998 = vadd.f32 %v1805, %v1997
        %1999 = vmatprep.mubr.bf16.mxu0 %v944
        %2000 = vmatmul.mubr.bf16.gmra.mrb[0].mxu0 %v943
        %v2001 = vpop.f32.mrb[0].mxu0
        %v2002 = vadd.f32 %v1809, %v2001
        %v2003 = vpop.f32.mrb[0].mxu0
        %v2004 = vadd.f32 %v1811, %v2003
        %v2005 = vpop.f32.mrb[0].mxu0
        %v2006 = vadd.f32 %v1813, %v2005
        %v2007 = vpop.f32.mrb[0].mxu0
        %v2008 = vadd.f32 %v1815, %v2007
        %2009 = vmatprep.mubr.bf16.mxu0 %v949
        %2010 = vmatmul.mubr.bf16.gmra.mrb[0].mxu0 %v948
        %v2011 = vpop.f32.mrb[0].mxu0
        %v2012 = vadd.f32 %v1819, %v2011
        %v2013 = vpop.f32.mrb[0].mxu0
        %v2014 = vadd.f32 %v1821, %v2013
        %v2015 = vpop.f32.mrb[0].mxu0
        %v2016 = vadd.f32 %v1823, %v2015
        %v2017 = vpop.f32.mrb[0].mxu0
        %v2018 = vadd.f32 %v1825, %v2017
        %2019 = vmatprep.mubr.bf16.mxu0 %v954
        %2020 = vmatmul.mubr.bf16.gmra.mrb[0].mxu0 %v953
        %v2021 = vpop.f32.mrb[0].mxu0
        %v2022 = vadd.f32 %v1829, %v2021
        %v2023 = vpop.f32.mrb[0].mxu0
        %v2024 = vadd.f32 %v1831, %v2023
        %v2025 = vpop.f32.mrb[0].mxu0
        %v2026 = vadd.f32 %v1833, %v2025
        %v2027 = vpop.f32.mrb[0].mxu0
        %v2028 = vadd.f32 %v1835, %v2027
        %2029 = vmatprep.mubr.bf16.mxu0 %v959
        %2030 = vmatmul.mubr.bf16.gmra.mrb[0].mxu0 %v958
        %v2031 = vpop.f32.mrb[0].mxu0
        %v2032 = vadd.f32 %v1839, %v2031
        %v2033 = vpop.f32.mrb[0].mxu0
        %v2034 = vadd.f32 %v1841, %v2033
        %v2035 = vpop.f32.mrb[0].mxu0
        %v2036 = vadd.f32 %v1843, %v2035
        %v2037 = vpop.f32.mrb[0].mxu0
        %v2038 = vadd.f32 %v1845, %v2037
        %2039 = vmatprep.mubr.bf16.mxu0 %v964
        %2040 = vmatmul.mubr.bf16.gmra.mrb[0].mxu0 %v963
        %v2041 = vpop.f32.mrb[0].mxu0
        %v2042 = vadd.f32 %v1849, %v2041
        %v2043 = vpop.f32.mrb[0].mxu0
        %v2044 = vadd.f32 %v1851, %v2043
        %v2045 = vpop.f32.mrb[0].mxu0
        %v2046 = vadd.f32 %v1853, %v2045
        %v2047 = vpop.f32.mrb[0].mxu0
        %v2048 = vadd.f32 %v1855, %v2047
        %2049 = vmatprep.mubr.bf16.mxu0 %v969
        %2050 = vmatmul.mubr.bf16.gmra.mrb[0].mxu0 %v968
        %v2051 = vpop.f32.mrb[0].mxu0
        %v2052 = vadd.f32 %v1859, %v2051
        %v2053 = vpop.f32.mrb[0].mxu0
        %v2054 = vadd.f32 %v1861, %v2053
        %v2055 = vpop.f32.mrb[0].mxu0
        %v2056 = vadd.f32 %v1863, %v2055
        %v2057 = vpop.f32.mrb[0].mxu0
        %v2058 = vadd.f32 %v1865, %v2057
        %2059 = vmatprep.mubr.bf16.mxu0 %v974
        %2060 = vmatmul.mubr.bf16.gmra.mrb[0].mxu0 %v973
        %v2061 = vpop.f32.mrb[0].mxu0
        %v2062 = vadd.f32 %v1869, %v2061
        %v2063 = vpop.f32.mrb[0].mxu0
        %v2064 = vadd.f32 %v1871, %v2063
        %v2065 = vpop.f32.mrb[0].mxu0
        %v2066 = vadd.f32 %v1873, %v2065
        %v2067 = vpop.f32.mrb[0].mxu0
        %v2068 = vadd.f32 %v1875, %v2067
        %2069 = vmatprep.mubr.bf16.mxu0 %v979
        %2070 = vmatmul.mubr.bf16.gmra.mrb[0].mxu0 %v978
        %v2071 = vpop.f32.mrb[0].mxu0
        %v2072 = vadd.f32 %v1879, %v2071
        %v2073 = vpop.f32.mrb[0].mxu0
        %v2074 = vadd.f32 %v1881, %v2073
        %v2075 = vpop.f32.mrb[0].mxu0
        %v2076 = vadd.f32 %v1883, %v2075
        %v2077 = vpop.f32.mrb[0].mxu0
        %v2078 = vadd.f32 %v1885, %v2077
        %2079 = vmatprep.mubr.bf16.mxu0 %v984
        %2080 = vmatmul.mubr.bf16.gmra.mrb[0].mxu0 %v983
        %v2081 = vpop.f32.mrb[0].mxu0
        %v2082 = vadd.f32 %v1889, %v2081
        %v2083 = vpop.f32.mrb[0].mxu0
        %v2084 = vadd.f32 %v1891, %v2083
        %v2085 = vpop.f32.mrb[0].mxu0
        %v2086 = vadd.f32 %v1893, %v2085
        %v2087 = vpop.f32.mrb[0].mxu0
        %v2088 = vadd.f32 %v1895, %v2087
        %2089 = vmatprep.mubr.bf16.mxu0 %v989
        %2090 = vmatmul.mubr.bf16.gmra.mrb[0].mxu0 %v988
        %v2091 = vpop.f32.mrb[0].mxu0
        %v2092 = vadd.f32 %v1899, %v2091
        %v2093 = vpop.f32.mrb[0].mxu0
        %v2094 = vadd.f32 %v1901, %v2093
        %v2095 = vpop.f32.mrb[0].mxu0
        %v2096 = vadd.f32 %v1903, %v2095
        %v2097 = vpop.f32.mrb[0].mxu0
        %v2098 = vadd.f32 %v1905, %v2097
        %2099 = vdwg.mxu0
        %2100 = vmatprep.subr.bf16.mxu0 %v1527
        %2101 = vmatpush1.bf16.msra.mxu0 %v1526
        %2102 = vmatprep.subr.bf16.mxu0 %v1530
        %2103 = vmatpush1.bf16.msra.mxu0 %v1529
        %2104 = vmatprep.subr.bf16.mxu0 %v1533
        %2105 = vmatpush1.bf16.msra.mxu0 %v1532
        %2106 = vmatprep.subr.bf16.mxu0 %v1536
        %2107 = vmatpush1.bf16.msra.mxu0 %v1535
        %2108 = vmatprep.subr.bf16.mxu0 %v1539
        %2109 = vmatpush1.bf16.msra.mxu0 %v1538
        %2110 = vmatprep.subr.bf16.mxu0 %v1709
        %2111 = vmatpush1.bf16.msra.mxu0 %v1706
        %2112 = vmatprep.subr.bf16.mxu0 0
        %2113 = vmatpush1.bf16.msra.mxu0 0
        %2114 = vmatprep.subr.bf16.mxu0 0
        %2115 = vmatpush1.bf16.msra.mxu0 0
        %2116 = vmatprep.subr.bf16.mxu0 0
        %2117 = vmatpush1.bf16.msra.mxu0 0
        %2118 = vmatprep.subr.bf16.mxu0 0
        %2119 = vmatpush1.bf16.msra.mxu0 0
        %2120 = vmatprep.subr.bf16.mxu0 0
        %2121 = vmatpush1.bf16.msra.mxu0 0
        %2122 = vmatprep.subr.bf16.mxu0 0
        %2123 = vmatpush1.bf16.msra.mxu0 0
        %2124 = vmatprep.subr.bf16.mxu0 0
        %2125 = vmatpush1.bf16.msra.mxu0 0
        %2126 = vmatprep.subr.bf16.mxu0 0
        %2127 = vmatpush1.bf16.msra.mxu0 0
        %2128 = vmatprep.subr.bf16.mxu0 0
        %2129 = vmatpush1.bf16.msra.mxu0 0
        %2130 = vmatprep.subr.bf16.mxu0 0
        %2131 = vmatpush1.bf16.msra.mxu0 0
        %2132 = vmatprep.mubr.bf16.mxu0 0
        %2133 = vmatmul.mubr.bf16.gmra.mrb[0].mxu0 %v1657
        %v2134 = vpop.f32.mrb[0].mxu0
        %v2135 = vadd.f32 %v1942, %v2134
        %v2136 = vpop.f32.mrb[0].mxu0
        %v2137 = vadd.f32 %v1944, %v2136
        %v2138 = vpop.f32.mrb[0].mxu0
        %v2139 = vadd.f32 %v1946, %v2138
        %v2140 = vpop.f32.mrb[0].mxu0
        %v2141 = vadd.f32 %v1948, %v2140
        %2142 = vmatprep.mubr.bf16.mxu0 0
        %2143 = vmatmul.mubr.bf16.gmra.mrb[0].mxu0 %v1660
        %v2144 = vpop.f32.mrb[0].mxu0
        %v2145 = vadd.f32 %v1952, %v2144
        %v2146 = vpop.f32.mrb[0].mxu0
        %v2147 = vadd.f32 %v1954, %v2146
        %v2148 = vpop.f32.mrb[0].mxu0
        %v2149 = vadd.f32 %v1956, %v2148
        %v2150 = vpop.f32.mrb[0].mxu0
        %v2151 = vadd.f32 %v1958, %v2150
        %2152 = vmatprep.mubr.bf16.mxu0 0
        %2153 = vmatmul.mubr.bf16.gmra.mrb[0].mxu0 %v1663
        %v2154 = vpop.f32.mrb[0].mxu0
        %v2155 = vadd.f32 %v1962, %v2154
        %v2156 = vpop.f32.mrb[0].mxu0
        %v2157 = vadd.f32 %v1964, %v2156
        %v2158 = vpop.f32.mrb[0].mxu0
        %v2159 = vadd.f32 %v1966, %v2158
        %v2160 = vpop.f32.mrb[0].mxu0
        %v2161 = vadd.f32 %v1968, %v2160
        %2162 = vmatprep.mubr.bf16.mxu0 0
        %2163 = vmatmul.mubr.bf16.gmra.mrb[0].mxu0 %v1666
        %v2164 = vpop.f32.mrb[0].mxu0
        %v2165 = vadd.f32 %v1972, %v2164
        %v2166 = vpop.f32.mrb[0].mxu0
        %v2167 = vadd.f32 %v1974, %v2166
        %v2168 = vpop.f32.mrb[0].mxu0
        %v2169 = vadd.f32 %v1976, %v2168
        %v2170 = vpop.f32.mrb[0].mxu0
        %v2171 = vadd.f32 %v1978, %v2170
        %2172 = vmatprep.mubr.bf16.mxu0 0
        %2173 = vmatmul.mubr.bf16.gmra.mrb[0].mxu0 %v1669
        %v2174 = vpop.f32.mrb[0].mxu0
        %v2175 = vadd.f32 %v1982, %v2174
        %v2176 = vpop.f32.mrb[0].mxu0
        %v2177 = vadd.f32 %v1984, %v2176
        %v2178 = vpop.f32.mrb[0].mxu0
        %v2179 = vadd.f32 %v1986, %v2178
        %v2180 = vpop.f32.mrb[0].mxu0
        %v2181 = vadd.f32 %v1988, %v2180
        %2182 = vmatprep.mubr.bf16.mxu0 0
        %2183 = vmatmul.mubr.bf16.gmra.mrb[0].mxu0 %v1672
        %v2184 = vpop.f32.mrb[0].mxu0
        %v2185 = vadd.f32 %v1992, %v2184
        %v2186 = vpop.f32.mrb[0].mxu0
        %v2187 = vadd.f32 %v1994, %v2186
        %v2188 = vpop.f32.mrb[0].mxu0
        %v2189 = vadd.f32 %v1996, %v2188
        %v2190 = vpop.f32.mrb[0].mxu0
        %v2191 = vadd.f32 %v1998, %v2190
        %2192 = vmatprep.mubr.bf16.mxu0 0
        %2193 = vmatmul.mubr.bf16.gmra.mrb[0].mxu0 %v1675
        %v2194 = vpop.f32.mrb[0].mxu0
        %v2195 = vadd.f32 %v2002, %v2194
        %v2196 = vpop.f32.mrb[0].mxu0
        %v2197 = vadd.f32 %v2004, %v2196
        %v2198 = vpop.f32.mrb[0].mxu0
        %v2199 = vadd.f32 %v2006, %v2198
        %v2200 = vpop.f32.mrb[0].mxu0
        %v2201 = vadd.f32 %v2008, %v2200
        %2202 = vmatprep.mubr.bf16.mxu0 0
        %2203 = vmatmul.mubr.bf16.gmra.mrb[0].mxu0 %v1678
        %v2204 = vpop.f32.mrb[0].mxu0
        %v2205 = vadd.f32 %v2012, %v2204
        %v2206 = vpop.f32.mrb[0].mxu0
        %v2207 = vadd.f32 %v2014, %v2206
        %v2208 = vpop.f32.mrb[0].mxu0
        %v2209 = vadd.f32 %v2016, %v2208
        %v2210 = vpop.f32.mrb[0].mxu0
        %v2211 = vadd.f32 %v2018, %v2210
        %2212 = vmatprep.mubr.bf16.mxu0 0
        %2213 = vmatmul.mubr.bf16.gmra.mrb[0].mxu0 %v1681
        %v2214 = vpop.f32.mrb[0].mxu0
        %v2215 = vadd.f32 %v2022, %v2214
        %v2216 = vpop.f32.mrb[0].mxu0
        %v2217 = vadd.f32 %v2024, %v2216
        %v2218 = vpop.f32.mrb[0].mxu0
        %v2219 = vadd.f32 %v2026, %v2218
        %v2220 = vpop.f32.mrb[0].mxu0
        %v2221 = vadd.f32 %v2028, %v2220
        %2222 = vmatprep.mubr.bf16.mxu0 0
        %2223 = vmatmul.mubr.bf16.gmra.mrb[0].mxu0 %v1684
        %v2224 = vpop.f32.mrb[0].mxu0
        %v2225 = vadd.f32 %v2032, %v2224
        %v2226 = vpop.f32.mrb[0].mxu0
        %v2227 = vadd.f32 %v2034, %v2226
        %v2228 = vpop.f32.mrb[0].mxu0
        %v2229 = vadd.f32 %v2036, %v2228
        %v2230 = vpop.f32.mrb[0].mxu0
        %v2231 = vadd.f32 %v2038, %v2230
        %2232 = vmatprep.mubr.bf16.mxu0 0
        %2233 = vmatmul.mubr.bf16.gmra.mrb[0].mxu0 %v1687
        %v2234 = vpop.f32.mrb[0].mxu0
        %v2235 = vadd.f32 %v2042, %v2234
        %v2236 = vpop.f32.mrb[0].mxu0
        %v2237 = vadd.f32 %v2044, %v2236
        %v2238 = vpop.f32.mrb[0].mxu0
        %v2239 = vadd.f32 %v2046, %v2238
        %v2240 = vpop.f32.mrb[0].mxu0
        %v2241 = vadd.f32 %v2048, %v2240
        %2242 = vmatprep.mubr.bf16.mxu0 0
        %2243 = vmatmul.mubr.bf16.gmra.mrb[0].mxu0 %v1690
        %v2244 = vpop.f32.mrb[0].mxu0
        %v2245 = vadd.f32 %v2052, %v2244
        %v2246 = vpop.f32.mrb[0].mxu0
        %v2247 = vadd.f32 %v2054, %v2246
        %v2248 = vpop.f32.mrb[0].mxu0
        %v2249 = vadd.f32 %v2056, %v2248
        %v2250 = vpop.f32.mrb[0].mxu0
        %v2251 = vadd.f32 %v2058, %v2250
        %2252 = vmatprep.mubr.bf16.mxu0 0
        %2253 = vmatmul.mubr.bf16.gmra.mrb[0].mxu0 %v1693
        %v2254 = vpop.f32.mrb[0].mxu0
        %v2255 = vadd.f32 %v2062, %v2254
        %v2256 = vpop.f32.mrb[0].mxu0
        %v2257 = vadd.f32 %v2064, %v2256
        %v2258 = vpop.f32.mrb[0].mxu0
        %v2259 = vadd.f32 %v2066, %v2258
        %v2260 = vpop.f32.mrb[0].mxu0
        %v2261 = vadd.f32 %v2068, %v2260
        %2262 = vmatprep.mubr.bf16.mxu0 0
        %2263 = vmatmul.mubr.bf16.gmra.mrb[0].mxu0 %v1696
        %v2264 = vpop.f32.mrb[0].mxu0
        %v2265 = vadd.f32 %v2072, %v2264
        %v2266 = vpop.f32.mrb[0].mxu0
        %v2267 = vadd.f32 %v2074, %v2266
        %v2268 = vpop.f32.mrb[0].mxu0
        %v2269 = vadd.f32 %v2076, %v2268
        %v2270 = vpop.f32.mrb[0].mxu0
        %v2271 = vadd.f32 %v2078, %v2270
        %2272 = vmatprep.mubr.bf16.mxu0 0
        %2273 = vmatmul.mubr.bf16.gmra.mrb[0].mxu0 %v1699
        %v2274 = vpop.f32.mrb[0].mxu0
        %v2275 = vadd.f32 %v2082, %v2274
        %v2276 = vpop.f32.mrb[0].mxu0
        %v2277 = vadd.f32 %v2084, %v2276
        %v2278 = vpop.f32.mrb[0].mxu0
        %v2279 = vadd.f32 %v2086, %v2278
        %v2280 = vpop.f32.mrb[0].mxu0
        %v2281 = vadd.f32 %v2088, %v2280
        %2282 = vmatprep.mubr.bf16.mxu0 0
        %2283 = vmatmul.mubr.bf16.gmra.mrb[0].mxu0 %v1702
        %v2284 = vpop.f32.mrb[0].mxu0
        %v2285 = vadd.f32 %v2092, %v2284
        %v2286 = vpop.f32.mrb[0].mxu0
        %v2287 = vadd.f32 %v2094, %v2286
        %v2288 = vpop.f32.mrb[0].mxu0
        %v2289 = vadd.f32 %v2096, %v2288
        %v2290 = vpop.f32.mrb[0].mxu0
        %v2291 = vadd.f32 %v2098, %v2290
        %2292 = vdwg.mxu0
        %2293 = vmatprep.subr.bf16.mxu0 0
        %2294 = vmatpush1.bf16.msra.mxu0 %v1432
        %2295 = vmatprep.subr.bf16.mxu0 0
        %2296 = vmatpush1.bf16.msra.mxu0 %v1435
        %2297 = vmatprep.subr.bf16.mxu0 0
        %2298 = vmatpush1.bf16.msra.mxu0 %v1438
        %2299 = vmatprep.subr.bf16.mxu0 0
        %2300 = vmatpush1.bf16.msra.mxu0 %v1441
        %2301 = vmatprep.subr.bf16.mxu0 0
        %2302 = vmatpush1.bf16.msra.mxu0 %v1444
        %2303 = vmatprep.subr.bf16.mxu0 0
        %2304 = vmatpush1.bf16.msra.mxu0 %v1447
        %2305 = vmatprep.subr.bf16.mxu0 0
        %2306 = vmatpush1.bf16.msra.mxu0 %v1450
        %2307 = vmatprep.subr.bf16.mxu0 0
        %2308 = vmatpush1.bf16.msra.mxu0 %v1453
        %2309 = vmatprep.subr.bf16.mxu0 0
        %2310 = vmatpush1.bf16.msra.mxu0 %v1456
        %2311 = vmatprep.subr.bf16.mxu0 0
        %2312 = vmatpush1.bf16.msra.mxu0 %v1459
        %2313 = vmatprep.subr.bf16.mxu0 0
        %2314 = vmatpush1.bf16.msra.mxu0 %v1462
        %2315 = vmatprep.subr.bf16.mxu0 0
        %2316 = vmatpush1.bf16.msra.mxu0 %v1465
        %2317 = vmatprep.subr.bf16.mxu0 0
        %2318 = vmatpush1.bf16.msra.mxu0 %v1468
        %2319 = vmatprep.subr.bf16.mxu0 0
        %2320 = vmatpush1.bf16.msra.mxu0 %v1471
        %2321 = vmatprep.subr.bf16.mxu0 0
        %2322 = vmatpush1.bf16.msra.mxu0 %v1474
        %2323 = vmatprep.subr.bf16.mxu0 0
        %2324 = vmatpush1.bf16.msra.mxu0 %v1477
        %2325 = vmatprep.mubr.bf16.mxu0 %v912
        %2326 = vmatmul.mubr.bf16.gmra.mrb[0].mxu0 %v911
        %v2327 = vpop.f32.mrb[0].mxu0
        %v2328 = vadd.f32 %v651, %v2327
        %v2329 = vpop.f32.mrb[0].mxu0
        %v2330 = vpop.f32.mrb[0].mxu0
        %v2331 = vadd.f32 %v651, %v2330
        %v2332 = vpop.f32.mrb[0].mxu0
        %2333 = vmatprep.mubr.bf16.mxu0 %v917
        %2334 = vmatmul.mubr.bf16.gmra.mrb[0].mxu0 %v916
        %v2335 = vpop.f32.mrb[0].mxu0
        %v2336 = vadd.f32 %v651, %v2335
        %v2337 = vpop.f32.mrb[0].mxu0
        %v2338 = vpop.f32.mrb[0].mxu0
        %v2339 = vadd.f32 %v651, %v2338
        %v2340 = vpop.f32.mrb[0].mxu0
        %2341 = vmatprep.mubr.bf16.mxu0 %v922
        %2342 = vmatmul.mubr.bf16.gmra.mrb[0].mxu0 %v921
        %v2343 = vpop.f32.mrb[0].mxu0
        %v2344 = vadd.f32 %v651, %v2343
        %v2345 = vpop.f32.mrb[0].mxu0
        %v2346 = vpop.f32.mrb[0].mxu0
        %v2347 = vadd.f32 %v651, %v2346
        %v2348 = vpop.f32.mrb[0].mxu0
        %2349 = vmatprep.mubr.bf16.mxu0 %v927
        %2350 = vmatmul.mubr.bf16.gmra.mrb[0].mxu0 %v926
        %v2351 = vpop.f32.mrb[0].mxu0
        %v2352 = vadd.f32 %v651, %v2351
        %v2353 = vpop.f32.mrb[0].mxu0
        %v2354 = vpop.f32.mrb[0].mxu0
        %v2355 = vadd.f32 %v651, %v2354
        %v2356 = vpop.f32.mrb[0].mxu0
        %2357 = vmatprep.mubr.bf16.mxu0 %v932
        %2358 = vmatmul.mubr.bf16.gmra.mrb[0].mxu0 %v931
        %v2359 = vpop.f32.mrb[0].mxu0
        %v2360 = vadd.f32 %v651, %v2359
        %v2361 = vpop.f32.mrb[0].mxu0
        %v2362 = vpop.f32.mrb[0].mxu0
        %v2363 = vadd.f32 %v651, %v2362
        %v2364 = vpop.f32.mrb[0].mxu0
        %2365 = vmatprep.mubr.bf16.mxu0 %v937
        %2366 = vmatmul.mubr.bf16.gmra.mrb[0].mxu0 %v936
        %v2367 = vpop.f32.mrb[0].mxu0
        %v2368 = vadd.f32 %v651, %v2367
        %v2369 = vpop.f32.mrb[0].mxu0
        %v2370 = vpop.f32.mrb[0].mxu0
        %v2371 = vadd.f32 %v651, %v2370
        %v2372 = vpop.f32.mrb[0].mxu0
        %2373 = vmatprep.mubr.bf16.mxu0 %v942
        %2374 = vmatmul.mubr.bf16.gmra.mrb[0].mxu0 %v941
        %v2375 = vpop.f32.mrb[0].mxu0
        %v2376 = vadd.f32 %v651, %v2375
        %v2377 = vpop.f32.mrb[0].mxu0
        %v2378 = vpop.f32.mrb[0].mxu0
        %v2379 = vadd.f32 %v651, %v2378
        %v2380 = vpop.f32.mrb[0].mxu0
        %2381 = vmatprep.mubr.bf16.mxu0 %v947
        %2382 = vmatmul.mubr.bf16.gmra.mrb[0].mxu0 %v946
        %v2383 = vpop.f32.mrb[0].mxu0
        %v2384 = vadd.f32 %v651, %v2383
        %v2385 = vpop.f32.mrb[0].mxu0
        %v2386 = vpop.f32.mrb[0].mxu0
        %v2387 = vadd.f32 %v651, %v2386
        %v2388 = vpop.f32.mrb[0].mxu0
        %2389 = vmatprep.mubr.bf16.mxu0 %v952
        %2390 = vmatmul.mubr.bf16.gmra.mrb[0].mxu0 %v951
        %v2391 = vpop.f32.mrb[0].mxu0
        %v2392 = vadd.f32 %v651, %v2391
        %v2393 = vpop.f32.mrb[0].mxu0
        %v2394 = vpop.f32.mrb[0].mxu0
        %v2395 = vadd.f32 %v651, %v2394
        %v2396 = vpop.f32.mrb[0].mxu0
        %2397 = vmatprep.mubr.bf16.mxu0 %v957
        %2398 = vmatmul.mubr.bf16.gmra.mrb[0].mxu0 %v956
        %v2399 = vpop.f32.mrb[0].mxu0
        %v2400 = vadd.f32 %v651, %v2399
        %v2401 = vpop.f32.mrb[0].mxu0
        %v2402 = vpop.f32.mrb[0].mxu0
        %v2403 = vadd.f32 %v651, %v2402
        %v2404 = vpop.f32.mrb[0].mxu0
        %2405 = vmatprep.mubr.bf16.mxu0 %v962
        %2406 = vmatmul.mubr.bf16.gmra.mrb[0].mxu0 %v961
        %v2407 = vpop.f32.mrb[0].mxu0
        %v2408 = vadd.f32 %v651, %v2407
        %v2409 = vpop.f32.mrb[0].mxu0
        %v2410 = vpop.f32.mrb[0].mxu0
        %v2411 = vadd.f32 %v651, %v2410
        %v2412 = vpop.f32.mrb[0].mxu0
        %2413 = vmatprep.mubr.bf16.mxu0 %v967
        %2414 = vmatmul.mubr.bf16.gmra.mrb[0].mxu0 %v966
        %v2415 = vpop.f32.mrb[0].mxu0
        %v2416 = vadd.f32 %v651, %v2415
        %v2417 = vpop.f32.mrb[0].mxu0
        %v2418 = vpop.f32.mrb[0].mxu0
        %v2419 = vadd.f32 %v651, %v2418
        %v2420 = vpop.f32.mrb[0].mxu0
        %2421 = vmatprep.mubr.bf16.mxu0 %v972
        %2422 = vmatmul.mubr.bf16.gmra.mrb[0].mxu0 %v971
        %v2423 = vpop.f32.mrb[0].mxu0
        %v2424 = vadd.f32 %v651, %v2423
        %v2425 = vpop.f32.mrb[0].mxu0
        %v2426 = vpop.f32.mrb[0].mxu0
        %v2427 = vadd.f32 %v651, %v2426
        %v2428 = vpop.f32.mrb[0].mxu0
        %2429 = vmatprep.mubr.bf16.mxu0 %v977
        %2430 = vmatmul.mubr.bf16.gmra.mrb[0].mxu0 %v976
        %v2431 = vpop.f32.mrb[0].mxu0
        %v2432 = vadd.f32 %v651, %v2431
        %v2433 = vpop.f32.mrb[0].mxu0
        %v2434 = vpop.f32.mrb[0].mxu0
        %v2435 = vadd.f32 %v651, %v2434
        %v2436 = vpop.f32.mrb[0].mxu0
        %2437 = vmatprep.mubr.bf16.mxu0 %v982
        %2438 = vmatmul.mubr.bf16.gmra.mrb[0].mxu0 %v981
        %v2439 = vpop.f32.mrb[0].mxu0
        %v2440 = vadd.f32 %v651, %v2439
        %v2441 = vpop.f32.mrb[0].mxu0
        %v2442 = vpop.f32.mrb[0].mxu0
        %v2443 = vadd.f32 %v651, %v2442
        %v2444 = vpop.f32.mrb[0].mxu0
        %2445 = vmatprep.mubr.bf16.mxu0 %v987
        %2446 = vmatmul.mubr.bf16.gmra.mrb[0].mxu0 %v986
        %v2447 = vpop.f32.mrb[0].mxu0
        %v2448 = vadd.f32 %v651, %v2447
        %v2449 = vpop.f32.mrb[0].mxu0
        %v2450 = vpop.f32.mrb[0].mxu0
        %v2451 = vadd.f32 %v651, %v2450
        %v2452 = vpop.f32.mrb[0].mxu0
        %2453 = vdwg.mxu0
        %2454 = vmatprep.subr.bf16.mxu0 0
        %2455 = vmatpush1.bf16.msra.mxu0 %v1480
        %2456 = vmatprep.subr.bf16.mxu0 0
        %2457 = vmatpush1.bf16.msra.mxu0 %v1483
        %2458 = vmatprep.subr.bf16.mxu0 0
        %2459 = vmatpush1.bf16.msra.mxu0 %v1486
        %2460 = vmatprep.subr.bf16.mxu0 0
        %2461 = vmatpush1.bf16.msra.mxu0 %v1489
        %2462 = vmatprep.subr.bf16.mxu0 0
        %2463 = vmatpush1.bf16.msra.mxu0 %v1492
        %2464 = vmatprep.subr.bf16.mxu0 0
        %2465 = vmatpush1.bf16.msra.mxu0 %v1495
        %2466 = vmatprep.subr.bf16.mxu0 0
        %2467 = vmatpush1.bf16.msra.mxu0 %v1498
        %2468 = vmatprep.subr.bf16.mxu0 0
        %2469 = vmatpush1.bf16.msra.mxu0 %v1501
        %2470 = vmatprep.subr.bf16.mxu0 0
        %2471 = vmatpush1.bf16.msra.mxu0 %v1504
        %2472 = vmatprep.subr.bf16.mxu0 0
        %2473 = vmatpush1.bf16.msra.mxu0 %v1507
        %2474 = vmatprep.subr.bf16.mxu0 0
        %2475 = vmatpush1.bf16.msra.mxu0 %v1510
        %2476 = vmatprep.subr.bf16.mxu0 0
        %2477 = vmatpush1.bf16.msra.mxu0 %v1513
        %2478 = vmatprep.subr.bf16.mxu0 0
        %2479 = vmatpush1.bf16.msra.mxu0 %v1516
        %2480 = vmatprep.subr.bf16.mxu0 0
        %2481 = vmatpush1.bf16.msra.mxu0 %v1519
        %2482 = vmatprep.subr.bf16.mxu0 0
        %2483 = vmatpush1.bf16.msra.mxu0 %v1522
        %2484 = vmatprep.subr.bf16.mxu0 0
        %2485 = vmatpush1.bf16.msra.mxu0 %v1525
        %2486 = vmatprep.mubr.bf16.mxu0 %v914
        %2487 = vmatmul.mubr.bf16.gmra.mrb[0].mxu0 %v913
        %v2488 = vpop.f32.mrb[0].mxu0
        %v2489 = vadd.f32 %v2328, %v2488
        %v2490 = vpop.f32.mrb[0].mxu0
        %v2491 = vpop.f32.mrb[0].mxu0
        %v2492 = vadd.f32 %v2331, %v2491
        %v2493 = vpop.f32.mrb[0].mxu0
        %2494 = vmatprep.mubr.bf16.mxu0 %v919
        %2495 = vmatmul.mubr.bf16.gmra.mrb[0].mxu0 %v918
        %v2496 = vpop.f32.mrb[0].mxu0
        %v2497 = vadd.f32 %v2336, %v2496
        %v2498 = vpop.f32.mrb[0].mxu0
        %v2499 = vpop.f32.mrb[0].mxu0
        %v2500 = vadd.f32 %v2339, %v2499
        %v2501 = vpop.f32.mrb[0].mxu0
        %2502 = vmatprep.mubr.bf16.mxu0 %v924
        %2503 = vmatmul.mubr.bf16.gmra.mrb[0].mxu0 %v923
        %v2504 = vpop.f32.mrb[0].mxu0
        %v2505 = vadd.f32 %v2344, %v2504
        %v2506 = vpop.f32.mrb[0].mxu0
        %v2507 = vpop.f32.mrb[0].mxu0
        %v2508 = vadd.f32 %v2347, %v2507
        %v2509 = vpop.f32.mrb[0].mxu0
        %2510 = vmatprep.mubr.bf16.mxu0 %v929
        %2511 = vmatmul.mubr.bf16.gmra.mrb[0].mxu0 %v928
        %v2512 = vpop.f32.mrb[0].mxu0
        %v2513 = vadd.f32 %v2352, %v2512
        %v2514 = vpop.f32.mrb[0].mxu0
        %v2515 = vpop.f32.mrb[0].mxu0
        %v2516 = vadd.f32 %v2355, %v2515
        %v2517 = vpop.f32.mrb[0].mxu0
        %2518 = vmatprep.mubr.bf16.mxu0 %v934
        %2519 = vmatmul.mubr.bf16.gmra.mrb[0].mxu0 %v933
        %v2520 = vpop.f32.mrb[0].mxu0
        %v2521 = vadd.f32 %v2360, %v2520
        %v2522 = vpop.f32.mrb[0].mxu0
        %v2523 = vpop.f32.mrb[0].mxu0
        %v2524 = vadd.f32 %v2363, %v2523
        %v2525 = vpop.f32.mrb[0].mxu0
        %2526 = vmatprep.mubr.bf16.mxu0 %v939
        %2527 = vmatmul.mubr.bf16.gmra.mrb[0].mxu0 %v938
        %v2528 = vpop.f32.mrb[0].mxu0
        %v2529 = vadd.f32 %v2368, %v2528
        %v2530 = vpop.f32.mrb[0].mxu0
        %v2531 = vpop.f32.mrb[0].mxu0
        %v2532 = vadd.f32 %v2371, %v2531
        %v2533 = vpop.f32.mrb[0].mxu0
        %2534 = vmatprep.mubr.bf16.mxu0 %v944
        %2535 = vmatmul.mubr.bf16.gmra.mrb[0].mxu0 %v943
        %v2536 = vpop.f32.mrb[0].mxu0
        %v2537 = vadd.f32 %v2376, %v2536
        %v2538 = vpop.f32.mrb[0].mxu0
        %v2539 = vpop.f32.mrb[0].mxu0
        %v2540 = vadd.f32 %v2379, %v2539
        %v2541 = vpop.f32.mrb[0].mxu0
        %2542 = vmatprep.mubr.bf16.mxu0 %v949
        %2543 = vmatmul.mubr.bf16.gmra.mrb[0].mxu0 %v948
        %v2544 = vpop.f32.mrb[0].mxu0
        %v2545 = vadd.f32 %v2384, %v2544
        %v2546 = vpop.f32.mrb[0].mxu0
        %v2547 = vpop.f32.mrb[0].mxu0
        %v2548 = vadd.f32 %v2387, %v2547
        %v2549 = vpop.f32.mrb[0].mxu0
        %2550 = vmatprep.mubr.bf16.mxu0 %v954
        %2551 = vmatmul.mubr.bf16.gmra.mrb[0].mxu0 %v953
        %v2552 = vpop.f32.mrb[0].mxu0
        %v2553 = vadd.f32 %v2392, %v2552
        %v2554 = vpop.f32.mrb[0].mxu0
        %v2555 = vpop.f32.mrb[0].mxu0
        %v2556 = vadd.f32 %v2395, %v2555
        %v2557 = vpop.f32.mrb[0].mxu0
        %2558 = vmatprep.mubr.bf16.mxu0 %v959
        %2559 = vmatmul.mubr.bf16.gmra.mrb[0].mxu0 %v958
        %v2560 = vpop.f32.mrb[0].mxu0
        %v2561 = vadd.f32 %v2400, %v2560
        %v2562 = vpop.f32.mrb[0].mxu0
        %v2563 = vpop.f32.mrb[0].mxu0
        %v2564 = vadd.f32 %v2403, %v2563
        %v2565 = vpop.f32.mrb[0].mxu0
        %2566 = vmatprep.mubr.bf16.mxu0 %v964
        %2567 = vmatmul.mubr.bf16.gmra.mrb[0].mxu0 %v963
        %v2568 = vpop.f32.mrb[0].mxu0
        %v2569 = vadd.f32 %v2408, %v2568
        %v2570 = vpop.f32.mrb[0].mxu0
        %v2571 = vpop.f32.mrb[0].mxu0
        %v2572 = vadd.f32 %v2411, %v2571
        %v2573 = vpop.f32.mrb[0].mxu0
        %2574 = vmatprep.mubr.bf16.mxu0 %v969
        %2575 = vmatmul.mubr.bf16.gmra.mrb[0].mxu0 %v968
        %v2576 = vpop.f32.mrb[0].mxu0
        %v2577 = vadd.f32 %v2416, %v2576
        %v2578 = vpop.f32.mrb[0].mxu0
        %v2579 = vpop.f32.mrb[0].mxu0
        %v2580 = vadd.f32 %v2419, %v2579
        %v2581 = vpop.f32.mrb[0].mxu0
        %2582 = vmatprep.mubr.bf16.mxu0 %v974
        %2583 = vmatmul.mubr.bf16.gmra.mrb[0].mxu0 %v973
        %v2584 = vpop.f32.mrb[0].mxu0
        %v2585 = vadd.f32 %v2424, %v2584
        %v2586 = vpop.f32.mrb[0].mxu0
        %v2587 = vpop.f32.mrb[0].mxu0
        %v2588 = vadd.f32 %v2427, %v2587
        %v2589 = vpop.f32.mrb[0].mxu0
        %2590 = vmatprep.mubr.bf16.mxu0 %v979
        %2591 = vmatmul.mubr.bf16.gmra.mrb[0].mxu0 %v978
        %v2592 = vpop.f32.mrb[0].mxu0
        %v2593 = vadd.f32 %v2432, %v2592
        %v2594 = vpop.f32.mrb[0].mxu0
        %v2595 = vpop.f32.mrb[0].mxu0
        %v2596 = vadd.f32 %v2435, %v2595
        %v2597 = vpop.f32.mrb[0].mxu0
        %2598 = vmatprep.mubr.bf16.mxu0 %v984
        %2599 = vmatmul.mubr.bf16.gmra.mrb[0].mxu0 %v983
        %v2600 = vpop.f32.mrb[0].mxu0
        %v2601 = vadd.f32 %v2440, %v2600
        %v2602 = vpop.f32.mrb[0].mxu0
        %v2603 = vpop.f32.mrb[0].mxu0
        %v2604 = vadd.f32 %v2443, %v2603
        %v2605 = vpop.f32.mrb[0].mxu0
        %2606 = vmatprep.mubr.bf16.mxu0 %v989
        %2607 = vmatmul.mubr.bf16.gmra.mrb[0].mxu0 %v988
        %v2608 = vpop.f32.mrb[0].mxu0
        %v2609 = vadd.f32 %v2448, %v2608
        %v2610 = vpop.f32.mrb[0].mxu0
        %v2611 = vpop.f32.mrb[0].mxu0
        %v2612 = vadd.f32 %v2451, %v2611
        %v2613 = vpop.f32.mrb[0].mxu0
        %2614 = vdwg.mxu0
        %2615 = vmatprep.subr.bf16.mxu0 0
        %2616 = vmatpush1.bf16.msra.mxu0 %v1528
        %2617 = vmatprep.subr.bf16.mxu0 0
        %2618 = vmatpush1.bf16.msra.mxu0 %v1531
        %2619 = vmatprep.subr.bf16.mxu0 0
        %2620 = vmatpush1.bf16.msra.mxu0 %v1534
        %2621 = vmatprep.subr.bf16.mxu0 0
        %2622 = vmatpush1.bf16.msra.mxu0 %v1537
        %2623 = vmatprep.subr.bf16.mxu0 0
        %2624 = vmatpush1.bf16.msra.mxu0 %v1540
        %2625 = vmatprep.subr.bf16.mxu0 0
        %2626 = vmatpush1.bf16.msra.mxu0 %v1712
        %2627 = vmatprep.subr.bf16.mxu0 0
        %2628 = vmatpush1.bf16.msra.mxu0 0
        %2629 = vmatprep.subr.bf16.mxu0 0
        %2630 = vmatpush1.bf16.msra.mxu0 0
        %2631 = vmatprep.subr.bf16.mxu0 0
        %2632 = vmatpush1.bf16.msra.mxu0 0
        %2633 = vmatprep.subr.bf16.mxu0 0
        %2634 = vmatpush1.bf16.msra.mxu0 0
        %2635 = vmatprep.subr.bf16.mxu0 0
        %2636 = vmatpush1.bf16.msra.mxu0 0
        %2637 = vmatprep.subr.bf16.mxu0 0
        %2638 = vmatpush1.bf16.msra.mxu0 0
        %2639 = vmatprep.subr.bf16.mxu0 0
        %2640 = vmatpush1.bf16.msra.mxu0 0
        %2641 = vmatprep.subr.bf16.mxu0 0
        %2642 = vmatpush1.bf16.msra.mxu0 0
        %2643 = vmatprep.subr.bf16.mxu0 0
        %2644 = vmatpush1.bf16.msra.mxu0 0
        %2645 = vmatprep.subr.bf16.mxu0 0
        %2646 = vmatpush1.bf16.msra.mxu0 0
        %2647 = vmatprep.mubr.bf16.mxu0 0
        %2648 = vmatmul.mubr.bf16.gmra.mrb[0].mxu0 %v1657
        %v2649 = vpop.f32.mrb[0].mxu0
        %v2650 = vadd.f32 %v2489, %v2649
        %v2651 = vpop.f32.mrb[0].mxu0
        %v2652 = vpop.f32.mrb[0].mxu0
        %v2653 = vadd.f32 %v2492, %v2652
        %v2654 = vpop.f32.mrb[0].mxu0
        %2655 = vmatprep.mubr.bf16.mxu0 0
        %2656 = vmatmul.mubr.bf16.gmra.mrb[0].mxu0 %v1660
        %v2657 = vpop.f32.mrb[0].mxu0
        %v2658 = vadd.f32 %v2497, %v2657
        %v2659 = vpop.f32.mrb[0].mxu0
        %v2660 = vpop.f32.mrb[0].mxu0
        %v2661 = vadd.f32 %v2500, %v2660
        %v2662 = vpop.f32.mrb[0].mxu0
        %2663 = vmatprep.mubr.bf16.mxu0 0
        %2664 = vmatmul.mubr.bf16.gmra.mrb[0].mxu0 %v1663
        %v2665 = vpop.f32.mrb[0].mxu0
        %v2666 = vadd.f32 %v2505, %v2665
        %v2667 = vpop.f32.mrb[0].mxu0
        %v2668 = vpop.f32.mrb[0].mxu0
        %v2669 = vadd.f32 %v2508, %v2668
        %v2670 = vpop.f32.mrb[0].mxu0
        %2671 = vmatprep.mubr.bf16.mxu0 0
        %2672 = vmatmul.mubr.bf16.gmra.mrb[0].mxu0 %v1666
        %v2673 = vpop.f32.mrb[0].mxu0
        %v2674 = vadd.f32 %v2513, %v2673
        %v2675 = vpop.f32.mrb[0].mxu0
        %v2676 = vpop.f32.mrb[0].mxu0
        %v2677 = vadd.f32 %v2516, %v2676
        %v2678 = vpop.f32.mrb[0].mxu0
        %2679 = vmatprep.mubr.bf16.mxu0 0
        %2680 = vmatmul.mubr.bf16.gmra.mrb[0].mxu0 %v1669
        %v2681 = vpop.f32.mrb[0].mxu0
        %v2682 = vadd.f32 %v2521, %v2681
        %v2683 = vpop.f32.mrb[0].mxu0
        %v2684 = vpop.f32.mrb[0].mxu0
        %v2685 = vadd.f32 %v2524, %v2684
        %v2686 = vpop.f32.mrb[0].mxu0
        %2687 = vmatprep.mubr.bf16.mxu0 0
        %2688 = vmatmul.mubr.bf16.gmra.mrb[0].mxu0 %v1672
        %v2689 = vpop.f32.mrb[0].mxu0
        %v2690 = vadd.f32 %v2529, %v2689
        %v2691 = vpop.f32.mrb[0].mxu0
        %v2692 = vpop.f32.mrb[0].mxu0
        %v2693 = vadd.f32 %v2532, %v2692
        %v2694 = vpop.f32.mrb[0].mxu0
        %2695 = vmatprep.mubr.bf16.mxu0 0
        %2696 = vmatmul.mubr.bf16.gmra.mrb[0].mxu0 %v1675
        %v2697 = vpop.f32.mrb[0].mxu0
        %v2698 = vadd.f32 %v2537, %v2697
        %v2699 = vpop.f32.mrb[0].mxu0
        %v2700 = vpop.f32.mrb[0].mxu0
        %v2701 = vadd.f32 %v2540, %v2700
        %v2702 = vpop.f32.mrb[0].mxu0
        %2703 = vmatprep.mubr.bf16.mxu0 0
        %2704 = vmatmul.mubr.bf16.gmra.mrb[0].mxu0 %v1678
        %v2705 = vpop.f32.mrb[0].mxu0
        %v2706 = vadd.f32 %v2545, %v2705
        %v2707 = vpop.f32.mrb[0].mxu0
        %v2708 = vpop.f32.mrb[0].mxu0
        %v2709 = vadd.f32 %v2548, %v2708
        %v2710 = vpop.f32.mrb[0].mxu0
        %2711 = vmatprep.mubr.bf16.mxu0 0
        %2712 = vmatmul.mubr.bf16.gmra.mrb[0].mxu0 %v1681
        %v2713 = vpop.f32.mrb[0].mxu0
        %v2714 = vadd.f32 %v2553, %v2713
        %v2715 = vpop.f32.mrb[0].mxu0
        %v2716 = vpop.f32.mrb[0].mxu0
        %v2717 = vadd.f32 %v2556, %v2716
        %v2718 = vpop.f32.mrb[0].mxu0
        %2719 = vmatprep.mubr.bf16.mxu0 0
        %2720 = vmatmul.mubr.bf16.gmra.mrb[0].mxu0 %v1684
        %v2721 = vpop.f32.mrb[0].mxu0
        %v2722 = vadd.f32 %v2561, %v2721
        %v2723 = vpop.f32.mrb[0].mxu0
        %v2724 = vpop.f32.mrb[0].mxu0
        %v2725 = vadd.f32 %v2564, %v2724
        %v2726 = vpop.f32.mrb[0].mxu0
        %2727 = vmatprep.mubr.bf16.mxu0 0
        %2728 = vmatmul.mubr.bf16.gmra.mrb[0].mxu0 %v1687
        %v2729 = vpop.f32.mrb[0].mxu0
        %v2730 = vadd.f32 %v2569, %v2729
        %v2731 = vpop.f32.mrb[0].mxu0
        %v2732 = vpop.f32.mrb[0].mxu0
        %v2733 = vadd.f32 %v2572, %v2732
        %v2734 = vpop.f32.mrb[0].mxu0
        %2735 = vmatprep.mubr.bf16.mxu0 0
        %2736 = vmatmul.mubr.bf16.gmra.mrb[0].mxu0 %v1690
        %v2737 = vpop.f32.mrb[0].mxu0
        %v2738 = vadd.f32 %v2577, %v2737
        %v2739 = vpop.f32.mrb[0].mxu0
        %v2740 = vpop.f32.mrb[0].mxu0
        %v2741 = vadd.f32 %v2580, %v2740
        %v2742 = vpop.f32.mrb[0].mxu0
        %2743 = vmatprep.mubr.bf16.mxu0 0
        %2744 = vmatmul.mubr.bf16.gmra.mrb[0].mxu0 %v1693
        %v2745 = vpop.f32.mrb[0].mxu0
        %v2746 = vadd.f32 %v2585, %v2745
        %v2747 = vpop.f32.mrb[0].mxu0
        %v2748 = vpop.f32.mrb[0].mxu0
        %v2749 = vadd.f32 %v2588, %v2748
        %v2750 = vpop.f32.mrb[0].mxu0
        %2751 = vmatprep.mubr.bf16.mxu0 0
        %2752 = vmatmul.mubr.bf16.gmra.mrb[0].mxu0 %v1696
        %v2753 = vpop.f32.mrb[0].mxu0
        %v2754 = vadd.f32 %v2593, %v2753
        %v2755 = vpop.f32.mrb[0].mxu0
        %v2756 = vpop.f32.mrb[0].mxu0
        %v2757 = vadd.f32 %v2596, %v2756
        %v2758 = vpop.f32.mrb[0].mxu0
        %2759 = vmatprep.mubr.bf16.mxu0 0
        %2760 = vmatmul.mubr.bf16.gmra.mrb[0].mxu0 %v1699
        %v2761 = vpop.f32.mrb[0].mxu0
        %v2762 = vadd.f32 %v2601, %v2761
        %v2763 = vpop.f32.mrb[0].mxu0
        %v2764 = vpop.f32.mrb[0].mxu0
        %v2765 = vadd.f32 %v2604, %v2764
        %v2766 = vpop.f32.mrb[0].mxu0
        %2767 = vmatprep.mubr.bf16.mxu0 0
        %2768 = vmatmul.mubr.bf16.gmra.mrb[0].mxu0 %v1702
        %v2769 = vpop.f32.mrb[0].mxu0
        %v2770 = vadd.f32 %v2609, %v2769
        %v2771 = vpop.f32.mrb[0].mxu0
        %v2772 = vpop.f32.mrb[0].mxu0
        %v2773 = vadd.f32 %v2612, %v2772
        %v2774 = vpop.f32.mrb[0].mxu0
        %2775 = vdwg.mxu0
        %v2776 = vmax.f32 %v2135, 0.0
        %v2777 = vmax.f32 %v2137, 0.0
        %v2778 = vmax.f32 %v2650, 0.0
        %v2779 = vmax.f32 %v2139, 0.0
        %v2780 = vmax.f32 %v2141, 0.0
        %v2781 = vmax.f32 %v2653, 0.0
        %v2782 = vmax.f32 %v2145, 0.0
        %v2783 = vmax.f32 %v2147, 0.0
        %v2784 = vmax.f32 %v2658, 0.0
        %v2785 = vmax.f32 %v2149, 0.0
        %v2786 = vmax.f32 %v2151, 0.0
        %v2787 = vmax.f32 %v2661, 0.0
        %v2788 = vmax.f32 %v2155, 0.0
        %v2789 = vmax.f32 %v2157, 0.0
        %v2790 = vmax.f32 %v2666, 0.0
        %v2791 = vmax.f32 %v2159, 0.0
        %v2792 = vmax.f32 %v2161, 0.0
        %v2793 = vmax.f32 %v2669, 0.0
        %v2794 = vmax.f32 %v2165, 0.0
        %v2795 = vmax.f32 %v2167, 0.0
        %v2796 = vmax.f32 %v2674, 0.0
        %v2797 = vmax.f32 %v2169, 0.0
        %v2798 = vmax.f32 %v2171, 0.0
        %v2799 = vmax.f32 %v2677, 0.0
        %v2800 = vmax.f32 %v2175, 0.0
        %v2801 = vmax.f32 %v2177, 0.0
        %v2802 = vmax.f32 %v2682, 0.0
        %v2803 = vmax.f32 %v2179, 0.0
        %v2804 = vmax.f32 %v2181, 0.0
        %v2805 = vmax.f32 %v2685, 0.0
        %v2806 = vmax.f32 %v2185, 0.0
        %v2807 = vmax.f32 %v2187, 0.0
        %v2808 = vmax.f32 %v2690, 0.0
        %v2809 = vmax.f32 %v2189, 0.0
        %v2810 = vmax.f32 %v2191, 0.0
        %v2811 = vmax.f32 %v2693, 0.0
        %v2812 = vmax.f32 %v2195, 0.0
        %v2813 = vmax.f32 %v2197, 0.0
        %v2814 = vmax.f32 %v2698, 0.0
        %v2815 = vmax.f32 %v2199, 0.0
        %v2816 = vmax.f32 %v2201, 0.0
        %v2817 = vmax.f32 %v2701, 0.0
        %v2818 = vmax.f32 %v2205, 0.0
        %v2819 = vmax.f32 %v2207, 0.0
        %v2820 = vmax.f32 %v2706, 0.0
        %v2821 = vmax.f32 %v2209, 0.0
        %v2822 = vmax.f32 %v2211, 0.0
        %v2823 = vmax.f32 %v2709, 0.0
        %v2824 = vmax.f32 %v2215, 0.0
        %v2825 = vmax.f32 %v2217, 0.0
        %v2826 = vmax.f32 %v2714, 0.0
        %v2827 = vmax.f32 %v2219, 0.0
        %v2828 = vmax.f32 %v2221, 0.0
        %v2829 = vmax.f32 %v2717, 0.0
        %v2830 = vmax.f32 %v2225, 0.0
        %v2831 = vmax.f32 %v2227, 0.0
        %v2832 = vmax.f32 %v2722, 0.0
        %v2833 = vmax.f32 %v2229, 0.0
        %v2834 = vmax.f32 %v2231, 0.0
        %v2835 = vmax.f32 %v2725, 0.0
        %v2836 = vmax.f32 %v2235, 0.0
        %v2837 = vmax.f32 %v2237, 0.0
        %v2838 = vmax.f32 %v2730, 0.0
        %v2839 = vmax.f32 %v2239, 0.0
        %v2840 = vmax.f32 %v2241, 0.0
        %v2841 = vmax.f32 %v2733, 0.0
        %v2842 = vmax.f32 %v2245, 0.0
        %v2843 = vmax.f32 %v2247, 0.0
        %v2844 = vmax.f32 %v2738, 0.0
        %v2845 = vmax.f32 %v2249, 0.0
        %v2846 = vmax.f32 %v2251, 0.0
        %v2847 = vmax.f32 %v2741, 0.0
        %v2848 = vmax.f32 %v2255, 0.0
        %v2849 = vmax.f32 %v2257, 0.0
        %v2850 = vmax.f32 %v2746, 0.0
        %v2851 = vmax.f32 %v2259, 0.0
        %v2852 = vmax.f32 %v2261, 0.0
        %v2853 = vmax.f32 %v2749, 0.0
        %v2854 = vmax.f32 %v2265, 0.0
        %v2855 = vmax.f32 %v2267, 0.0
        %v2856 = vmax.f32 %v2754, 0.0
        %v2857 = vmax.f32 %v2269, 0.0
        %v2858 = vmax.f32 %v2271, 0.0
        %v2859 = vmax.f32 %v2757, 0.0
        %v2860 = vmax.f32 %v2275, 0.0
        %v2861 = vmax.f32 %v2277, 0.0
        %v2862 = vmax.f32 %v2762, 0.0
        %v2863 = vmax.f32 %v2279, 0.0
        %v2864 = vmax.f32 %v2281, 0.0
        %v2865 = vmax.f32 %v2765, 0.0
        %v2866 = vmax.f32 %v2285, 0.0
        %v2867 = vmax.f32 %v2287, 0.0
        %v2868 = vmax.f32 %v2770, 0.0
        %v2869 = vmax.f32 %v2289, 0.0
        %v2870 = vmax.f32 %v2291, 0.0
        %v2871 = vmax.f32 %v2773, 0.0
        %v2872 = vpack.c.bf16 %v2779, %v2776
        %v2873 = vpack.c.bf16 %v2780, %v2777
        %v2874 = vpack.c.bf16 %v2781, %v2778
        %v2875 = vpack.c.bf16 %v2785, %v2782
        %v2876 = vpack.c.bf16 %v2786, %v2783
        %v2877 = vpack.c.bf16 %v2787, %v2784
        %v2878 = vpack.c.bf16 %v2791, %v2788
        %v2879 = vpack.c.bf16 %v2792, %v2789
        %v2880 = vpack.c.bf16 %v2793, %v2790
        %v2881 = vpack.c.bf16 %v2797, %v2794
        %v2882 = vpack.c.bf16 %v2798, %v2795
        %v2883 = vpack.c.bf16 %v2799, %v2796
        %v2884 = vpack.c.bf16 %v2803, %v2800
        %v2885 = vpack.c.bf16 %v2804, %v2801
        %v2886 = vpack.c.bf16 %v2805, %v2802
        %v2887 = vpack.c.bf16 %v2809, %v2806
        %v2888 = vpack.c.bf16 %v2810, %v2807
        %v2889 = vpack.c.bf16 %v2811, %v2808
        %v2890 = vpack.c.bf16 %v2815, %v2812
        %v2891 = vpack.c.bf16 %v2816, %v2813
        %v2892 = vpack.c.bf16 %v2817, %v2814
        %v2893 = vpack.c.bf16 %v2821, %v2818
        %v2894 = vpack.c.bf16 %v2822, %v2819
        %v2895 = vpack.c.bf16 %v2823, %v2820
        %v2896 = vpack.c.bf16 %v2827, %v2824
        %v2897 = vpack.c.bf16 %v2828, %v2825
        %v2898 = vpack.c.bf16 %v2829, %v2826
        %v2899 = vpack.c.bf16 %v2833, %v2830
        %v2900 = vpack.c.bf16 %v2834, %v2831
        %v2901 = vpack.c.bf16 %v2835, %v2832
        %v2902 = vpack.c.bf16 %v2839, %v2836
        %v2903 = vpack.c.bf16 %v2840, %v2837
        %v2904 = vpack.c.bf16 %v2841, %v2838
        %v2905 = vpack.c.bf16 %v2845, %v2842
        %v2906 = vpack.c.bf16 %v2846, %v2843
        %v2907 = vpack.c.bf16 %v2847, %v2844
        %v2908 = vpack.c.bf16 %v2851, %v2848
        %v2909 = vpack.c.bf16 %v2852, %v2849
        %v2910 = vpack.c.bf16 %v2853, %v2850
        %v2911 = vpack.c.bf16 %v2857, %v2854
        %v2912 = vpack.c.bf16 %v2858, %v2855
        %v2913 = vpack.c.bf16 %v2859, %v2856
        %v2914 = vpack.c.bf16 %v2863, %v2860
        %v2915 = vpack.c.bf16 %v2864, %v2861
        %v2916 = vpack.c.bf16 %v2865, %v2862
        %v2917 = vpack.c.bf16 %v2869, %v2866
        %v2918 = vpack.c.bf16 %v2870, %v2867
        %v2919 = vpack.c.bf16 %v2871, %v2868
        %v2920 = vld [vmem:[%s3] sm:$0xff]
        %v2921 = vld [vmem:[%s3 + $0x8] sm:$0xff]
        %v2922 = vld [vmem:[%s3 + $0x10] sm:$0xff]
        %v2923 = vld [vmem:[%s3 + $0x18] sm:$0xff]
        %v2924 = vld [vmem:[%s3 + $0x20] sm:$0xff]
        %v2925 = vld [vmem:[%s3 + $0x28] sm:$0xff]
        %v2926 = vld [vmem:[%s3 + $0x30] sm:$0xff]
        %v2927 = vld [vmem:[%s3 + $0x38] sm:$0xff]
        %v2928 = vld [vmem:[%s3 + $0x40] sm:$0xff]
        %v2929 = vld [vmem:[%s3 + $0x48] sm:$0xff]
        %v2930 = vld [vmem:[%s3 + $0x50] sm:$0xff]
        %v2931 = vld [vmem:[%s3 + $0x58] sm:$0xff]
        %v2932 = vld [vmem:[%s3 + $0x60] sm:$0xff]
        %v2933 = vld [vmem:[%s3 + $0x68] sm:$0xff]
        %v2934 = vld [vmem:[%s3 + $0x70] sm:$0xff]
        %v2935 = vld [vmem:[%s3 + $0x78] sm:$0xff]
        %v2936 = vld [vmem:[%s3 + $0x80] sm:$0xff]
        %v2937 = vld [vmem:[%s3 + $0x88] sm:$0xff]
        %v2938 = vld [vmem:[%s3 + $0x90] sm:$0xff]
        %v2939 = vld [vmem:[%s3 + $0x98] sm:$0xff]
        %v2940 = vld [vmem:[%s3 + $0xa0] sm:$0xff]
        %v2941 = vld [vmem:[%s3 + $0xa8] sm:$0xff]
        %v2942 = vld [vmem:[%s3 + $0xb0] sm:$0xff]
        %v2943 = vld [vmem:[%s3 + $0xb8] sm:$0xff]
        %v2944 = vld [vmem:[%s3 + $0xc0] sm:$0xff]
        %v2945 = vld [vmem:[%s3 + $0xc8] sm:$0xff]
        %v2946 = vld [vmem:[%s3 + $0xd0] sm:$0xff]
        %v2947 = vld [vmem:[%s3 + $0xd8] sm:$0xff]
        %v2948 = vld [vmem:[%s3 + $0xe0] sm:$0xff]
        %v2949 = vld [vmem:[%s3 + $0xe8] sm:$0xff]
        %v2950 = vld [vmem:[%s3 + $0xf0] sm:$0xff]
        %v2951 = vld [vmem:[%s3 + $0xf8] sm:$0xff]
        %v2952 = vld [vmem:[%s3 + $0x100] sm:$0xff]
        %v2953 = vld [vmem:[%s3 + $0x108] sm:$0xff]
        %v2954 = vld [vmem:[%s3 + $0x110] sm:$0xff]
        %v2955 = vld [vmem:[%s3 + $0x118] sm:$0xff]
        %v2956 = vld [vmem:[%s3 + $0x120] sm:$0xff]
        %v2957 = vld [vmem:[%s3 + $0x128] sm:$0xff]
        %v2958 = vld [vmem:[%s3 + $0x130] sm:$0xff]
        %v2959 = vld [vmem:[%s3 + $0x138] sm:$0xff]
        %v2960 = vld [vmem:[%s3 + $0x140] sm:$0xff]
        %v2961 = vld [vmem:[%s3 + $0x148] sm:$0xff]
        %v2962 = vld [vmem:[%s3 + $0x150] sm:$0xff]
        %v2963 = vld [vmem:[%s3 + $0x158] sm:$0xff]
        %v2964 = vld [vmem:[%s3 + $0x160] sm:$0xff]
        %v2965 = vld [vmem:[%s3 + $0x168] sm:$0xff]
        %v2966 = vld [vmem:[%s3 + $0x170] sm:$0xff]
        %v2967 = vld [vmem:[%s3 + $0x178] sm:$0xff]
        %v2968 = vld [vmem:[%s4] sm:$0x3]
        %v2970 = vlaneseq
        %v2971 = vshrl.u32 %v2970, 7
        %v2972 = vsub.s32 0, %v2971
        %v2973 = vrot.slane %v2968, %v2972
        %v2974 = vlaneseq
        %v2975 = vshrl.u32 %v2974, 7
        %v2976 = vsub.s32 1, %v2975
        %v2977 = vrot.slane %v2968, %v2976
        %v3028 = vunpack.c.l.b16 %v2920
        %v3029 = vunpack.c.h.b16 %v2920
        %v3030 = vunpack.c.l.b16 %v2921
        %v3031 = vunpack.c.h.b16 %v2921
        %v3032 = vunpack.c.l.b16 %v2922
        %v3033 = vunpack.c.h.b16 %v2922
        %v3034 = vunpack.c.l.b16 %v2923
        %v3035 = vunpack.c.h.b16 %v2923
        %v3036 = vunpack.c.l.b16 %v2924
        %v3037 = vunpack.c.h.b16 %v2924
        %v3038 = vunpack.c.l.b16 %v2925
        %v3039 = vunpack.c.h.b16 %v2925
        %v3040 = vunpack.c.l.b16 %v2926
        %v3041 = vunpack.c.h.b16 %v2926
        %v3042 = vunpack.c.l.b16 %v2927
        %v3043 = vunpack.c.h.b16 %v2927
        %v3044 = vunpack.c.l.b16 %v2928
        %v3045 = vunpack.c.h.b16 %v2928
        %v3046 = vunpack.c.l.b16 %v2929
        %v3047 = vunpack.c.h.b16 %v2929
        %v3048 = vunpack.c.l.b16 %v2930
        %v3049 = vunpack.c.h.b16 %v2930
        %v3050 = vunpack.c.l.b16 %v2931
        %v3051 = vunpack.c.h.b16 %v2931
        %v3052 = vunpack.c.l.b16 %v2932
        %v3053 = vunpack.c.h.b16 %v2932
        %v3054 = vunpack.c.l.b16 %v2933
        %v3055 = vunpack.c.h.b16 %v2933
        %v3056 = vunpack.c.l.b16 %v2934
        %v3057 = vunpack.c.h.b16 %v2934
        %v3058 = vunpack.c.l.b16 %v2935
        %v3059 = vunpack.c.h.b16 %v2935
        %v3060 = vunpack.c.l.b16 %v2936
        %v3061 = vunpack.c.h.b16 %v2936
        %v3062 = vunpack.c.l.b16 %v2937
        %v3063 = vunpack.c.h.b16 %v2937
        %v3064 = vunpack.c.l.b16 %v2938
        %v3065 = vunpack.c.h.b16 %v2938
        %v3066 = vunpack.c.l.b16 %v2939
        %v3067 = vunpack.c.h.b16 %v2939
        %v3068 = vunpack.c.l.b16 %v2940
        %v3069 = vunpack.c.h.b16 %v2940
        %v3070 = vunpack.c.l.b16 %v2941
        %v3071 = vunpack.c.h.b16 %v2941
        %v3072 = vunpack.c.l.b16 %v2942
        %v3073 = vunpack.c.h.b16 %v2942
        %v3074 = vunpack.c.l.b16 %v2943
        %v3075 = vunpack.c.h.b16 %v2943
        %v3076 = vunpack.c.l.b16 %v2944
        %v3077 = vunpack.c.h.b16 %v2944
        %v3078 = vunpack.c.l.b16 %v2945
        %v3079 = vunpack.c.h.b16 %v2945
        %v3080 = vunpack.c.l.b16 %v2946
        %v3081 = vunpack.c.h.b16 %v2946
        %v3082 = vunpack.c.l.b16 %v2947
        %v3083 = vunpack.c.h.b16 %v2947
        %v3084 = vunpack.c.l.b16 %v2948
        %v3085 = vunpack.c.h.b16 %v2948
        %v3086 = vunpack.c.l.b16 %v2949
        %v3087 = vunpack.c.h.b16 %v2949
        %v3088 = vunpack.c.l.b16 %v2950
        %v3089 = vunpack.c.h.b16 %v2950
        %v3090 = vunpack.c.l.b16 %v2951
        %v3091 = vunpack.c.h.b16 %v2951
        %v3092 = vunpack.c.l.b16 %v2952
        %v3093 = vunpack.c.h.b16 %v2952
        %v3094 = vunpack.c.l.b16 %v2953
        %v3095 = vunpack.c.h.b16 %v2953
        %v3096 = vunpack.c.l.b16 %v2954
        %v3097 = vunpack.c.h.b16 %v2954
        %v3098 = vunpack.c.l.b16 %v2955
        %v3099 = vunpack.c.h.b16 %v2955
        %v3100 = vunpack.c.l.b16 %v2956
        %v3101 = vunpack.c.h.b16 %v2956
        %v3102 = vunpack.c.l.b16 %v2957
        %v3103 = vunpack.c.h.b16 %v2957
        %v3104 = vunpack.c.l.b16 %v2958
        %v3105 = vunpack.c.h.b16 %v2958
        %v3106 = vunpack.c.l.b16 %v2959
        %v3107 = vunpack.c.h.b16 %v2959
        %v3108 = vunpack.c.l.b16 %v2960
        %v3109 = vunpack.c.h.b16 %v2960
        %v3110 = vunpack.c.l.b16 %v2961
        %v3111 = vunpack.c.h.b16 %v2961
        %v3112 = vunpack.c.l.b16 %v2962
        %v3113 = vunpack.c.h.b16 %v2962
        %v3114 = vunpack.c.l.b16 %v2963
        %v3115 = vunpack.c.h.b16 %v2963
        %v3116 = vunpack.c.l.b16 %v2964
        %v3117 = vunpack.c.h.b16 %v2964
        %v3118 = vunpack.c.l.b16 %v2965
        %v3119 = vunpack.c.h.b16 %v2965
        %v3120 = vunpack.c.l.b16 %v2966
        %v3121 = vunpack.c.h.b16 %v2966
        %v3122 = vunpack.c.l.b16 %v2967
        %v3123 = vunpack.c.h.b16 %v2967
        %v3124 = vpack.c.b16 %v3030, %v3028
        %v3125 = vpack.c.b16 %v3031, %v3029
        %v3126 = vpack.c.b16 %v3034, %v3032
        %v3127 = vpack.c.b16 %v3035, %v3033
        %v3128 = vpack.c.b16 %v3038, %v3036
        %v3129 = vpack.c.b16 %v3039, %v3037
        %v3130 = vpack.c.b16 %v3042, %v3040
        %v3131 = vpack.c.b16 %v3043, %v3041
        %v3132 = vpack.c.b16 %v3046, %v3044
        %v3133 = vpack.c.b16 %v3047, %v3045
        %v3134 = vpack.c.b16 %v3050, %v3048
        %v3135 = vpack.c.b16 %v3051, %v3049
        %v3136 = vpack.c.b16 %v3054, %v3052
        %v3137 = vpack.c.b16 %v3055, %v3053
        %v3138 = vpack.c.b16 %v3058, %v3056
        %v3139 = vpack.c.b16 %v3059, %v3057
        %v3140 = vpack.c.b16 %v3062, %v3060
        %v3141 = vpack.c.b16 %v3063, %v3061
        %v3142 = vpack.c.b16 %v3066, %v3064
        %v3143 = vpack.c.b16 %v3067, %v3065
        %v3144 = vpack.c.b16 %v3070, %v3068
        %v3145 = vpack.c.b16 %v3071, %v3069
        %v3146 = vpack.c.b16 %v3074, %v3072
        %v3147 = vpack.c.b16 %v3075, %v3073
        %v3148 = vpack.c.b16 %v3078, %v3076
        %v3149 = vpack.c.b16 %v3079, %v3077
        %v3150 = vpack.c.b16 %v3082, %v3080
        %v3151 = vpack.c.b16 %v3083, %v3081
        %v3152 = vpack.c.b16 %v3086, %v3084
        %v3153 = vpack.c.b16 %v3087, %v3085
        %v3154 = vpack.c.b16 %v3090, %v3088
        %v3155 = vpack.c.b16 %v3091, %v3089
        %v3156 = vpack.c.b16 %v3094, %v3092
        %v3157 = vpack.c.b16 %v3095, %v3093
        %v3158 = vpack.c.b16 %v3098, %v3096
        %v3159 = vpack.c.b16 %v3099, %v3097
        %v3160 = vpack.c.b16 %v3102, %v3100
        %v3161 = vpack.c.b16 %v3103, %v3101
        %v3162 = vpack.c.b16 %v3106, %v3104
        %v3163 = vpack.c.b16 %v3107, %v3105
        %v3164 = vpack.c.b16 %v3110, %v3108
        %v3165 = vpack.c.b16 %v3111, %v3109
        %v3166 = vpack.c.b16 %v3114, %v3112
        %v3167 = vpack.c.b16 %v3115, %v3113
        %v3168 = vpack.c.b16 %v3118, %v3116
        %v3169 = vpack.c.b16 %v3119, %v3117
        %v3170 = vpack.c.b16 %v3122, %v3120
        %v3171 = vpack.c.b16 %v3123, %v3121
        %3220 = vmatprep.subr.bf16.mxu0 %v3125
        %3221 = vmatpush1.bf16.msra.mxu0 %v3124
        %3222 = vmatprep.subr.bf16.mxu0 %v3127
        %3223 = vmatpush1.bf16.msra.mxu0 %v3126
        %3224 = vmatprep.subr.bf16.mxu0 %v3129
        %3225 = vmatpush1.bf16.msra.mxu0 %v3128
        %3226 = vmatprep.subr.bf16.mxu0 %v3131
        %3227 = vmatpush1.bf16.msra.mxu0 %v3130
        %3228 = vmatprep.subr.bf16.mxu0 %v3133
        %3229 = vmatpush1.bf16.msra.mxu0 %v3132
        %3230 = vmatprep.subr.bf16.mxu0 %v3135
        %3231 = vmatpush1.bf16.msra.mxu0 %v3134
        %3232 = vmatprep.subr.bf16.mxu0 %v3137
        %3233 = vmatpush1.bf16.msra.mxu0 %v3136
        %3234 = vmatprep.subr.bf16.mxu0 %v3139
        %3235 = vmatpush1.bf16.msra.mxu0 %v3138
        %3236 = vmatprep.subr.bf16.mxu0 %v3141
        %3237 = vmatpush1.bf16.msra.mxu0 %v3140
        %3238 = vmatprep.subr.bf16.mxu0 %v3143
        %3239 = vmatpush1.bf16.msra.mxu0 %v3142
        %3240 = vmatprep.subr.bf16.mxu0 %v3145
        %3241 = vmatpush1.bf16.msra.mxu0 %v3144
        %3242 = vmatprep.subr.bf16.mxu0 %v3147
        %3243 = vmatpush1.bf16.msra.mxu0 %v3146
        %3244 = vmatprep.subr.bf16.mxu0 %v3149
        %3245 = vmatpush1.bf16.msra.mxu0 %v3148
        %3246 = vmatprep.subr.bf16.mxu0 %v3151
        %3247 = vmatpush1.bf16.msra.mxu0 %v3150
        %3248 = vmatprep.subr.bf16.mxu0 %v3153
        %3249 = vmatpush1.bf16.msra.mxu0 %v3152
        %3250 = vmatprep.subr.bf16.mxu0 %v3155
        %3251 = vmatpush1.bf16.msra.mxu0 %v3154
        %3252 = vmatprep.mubr.bf16.mxu0 %v2873
        %3253 = vmatmul.mubr.bf16.gmra.mrb[0].mxu0 %v2872
        %v3254 = vpop.f32.mrb[0].mxu0
        %v3255 = vadd.f32 %v2973, %v3254
        %v3256 = vpop.f32.mrb[0].mxu0
        %v3257 = vadd.f32 %v2977, %v3256
        %v3258 = vpop.f32.mrb[0].mxu0
        %v3259 = vadd.f32 %v2973, %v3258
        %v3260 = vpop.f32.mrb[0].mxu0
        %v3261 = vadd.f32 %v2977, %v3260
        %3262 = vmatprep.mubr.bf16.mxu0 %v2876
        %3263 = vmatmul.mubr.bf16.gmra.mrb[0].mxu0 %v2875
        %v3264 = vpop.f32.mrb[0].mxu0
        %v3265 = vadd.f32 %v2973, %v3264
        %v3266 = vpop.f32.mrb[0].mxu0
        %v3267 = vadd.f32 %v2977, %v3266
        %v3268 = vpop.f32.mrb[0].mxu0
        %v3269 = vadd.f32 %v2973, %v3268
        %v3270 = vpop.f32.mrb[0].mxu0
        %v3271 = vadd.f32 %v2977, %v3270
        %3272 = vmatprep.mubr.bf16.mxu0 %v2879
        %3273 = vmatmul.mubr.bf16.gmra.mrb[0].mxu0 %v2878
        %v3274 = vpop.f32.mrb[0].mxu0
        %v3275 = vadd.f32 %v2973, %v3274
        %v3276 = vpop.f32.mrb[0].mxu0
        %v3277 = vadd.f32 %v2977, %v3276
        %v3278 = vpop.f32.mrb[0].mxu0
        %v3279 = vadd.f32 %v2973, %v3278
        %v3280 = vpop.f32.mrb[0].mxu0
        %v3281 = vadd.f32 %v2977, %v3280
        %3282 = vmatprep.mubr.bf16.mxu0 %v2882
        %3283 = vmatmul.mubr.bf16.gmra.mrb[0].mxu0 %v2881
        %v3284 = vpop.f32.mrb[0].mxu0
        %v3285 = vadd.f32 %v2973, %v3284
        %v3286 = vpop.f32.mrb[0].mxu0
        %v3287 = vadd.f32 %v2977, %v3286
        %v3288 = vpop.f32.mrb[0].mxu0
        %v3289 = vadd.f32 %v2973, %v3288
        %v3290 = vpop.f32.mrb[0].mxu0
        %v3291 = vadd.f32 %v2977, %v3290
        %3292 = vmatprep.mubr.bf16.mxu0 %v2885
        %3293 = vmatmul.mubr.bf16.gmra.mrb[0].mxu0 %v2884
        %v3294 = vpop.f32.mrb[0].mxu0
        %v3295 = vadd.f32 %v2973, %v3294
        %v3296 = vpop.f32.mrb[0].mxu0
        %v3297 = vadd.f32 %v2977, %v3296
        %v3298 = vpop.f32.mrb[0].mxu0
        %v3299 = vadd.f32 %v2973, %v3298
        %v3300 = vpop.f32.mrb[0].mxu0
        %v3301 = vadd.f32 %v2977, %v3300
        %3302 = vmatprep.mubr.bf16.mxu0 %v2888
        %3303 = vmatmul.mubr.bf16.gmra.mrb[0].mxu0 %v2887
        %v3304 = vpop.f32.mrb[0].mxu0
        %v3305 = vadd.f32 %v2973, %v3304
        %v3306 = vpop.f32.mrb[0].mxu0
        %v3307 = vadd.f32 %v2977, %v3306
        %v3308 = vpop.f32.mrb[0].mxu0
        %v3309 = vadd.f32 %v2973, %v3308
        %v3310 = vpop.f32.mrb[0].mxu0
        %v3311 = vadd.f32 %v2977, %v3310
        %3312 = vmatprep.mubr.bf16.mxu0 %v2891
        %3313 = vmatmul.mubr.bf16.gmra.mrb[0].mxu0 %v2890
        %v3314 = vpop.f32.mrb[0].mxu0
        %v3315 = vadd.f32 %v2973, %v3314
        %v3316 = vpop.f32.mrb[0].mxu0
        %v3317 = vadd.f32 %v2977, %v3316
        %v3318 = vpop.f32.mrb[0].mxu0
        %v3319 = vadd.f32 %v2973, %v3318
        %v3320 = vpop.f32.mrb[0].mxu0
        %v3321 = vadd.f32 %v2977, %v3320
        %3322 = vmatprep.mubr.bf16.mxu0 %v2894
        %3323 = vmatmul.mubr.bf16.gmra.mrb[0].mxu0 %v2893
        %v3324 = vpop.f32.mrb[0].mxu0
        %v3325 = vadd.f32 %v2973, %v3324
        %v3326 = vpop.f32.mrb[0].mxu0
        %v3327 = vadd.f32 %v2977, %v3326
        %v3328 = vpop.f32.mrb[0].mxu0
        %v3329 = vadd.f32 %v2973, %v3328
        %v3330 = vpop.f32.mrb[0].mxu0
        %v3331 = vadd.f32 %v2977, %v3330
        %3332 = vmatprep.mubr.bf16.mxu0 %v2897
        %3333 = vmatmul.mubr.bf16.gmra.mrb[0].mxu0 %v2896
        %v3334 = vpop.f32.mrb[0].mxu0
        %v3335 = vadd.f32 %v2973, %v3334
        %v3336 = vpop.f32.mrb[0].mxu0
        %v3337 = vadd.f32 %v2977, %v3336
        %v3338 = vpop.f32.mrb[0].mxu0
        %v3339 = vadd.f32 %v2973, %v3338
        %v3340 = vpop.f32.mrb[0].mxu0
        %v3341 = vadd.f32 %v2977, %v3340
        %3342 = vmatprep.mubr.bf16.mxu0 %v2900
        %3343 = vmatmul.mubr.bf16.gmra.mrb[0].mxu0 %v2899
        %v3344 = vpop.f32.mrb[0].mxu0
        %v3345 = vadd.f32 %v2973, %v3344
        %v3346 = vpop.f32.mrb[0].mxu0
        %v3347 = vadd.f32 %v2977, %v3346
        %v3348 = vpop.f32.mrb[0].mxu0
        %v3349 = vadd.f32 %v2973, %v3348
        %v3350 = vpop.f32.mrb[0].mxu0
        %v3351 = vadd.f32 %v2977, %v3350
        %3352 = vmatprep.mubr.bf16.mxu0 %v2903
        %3353 = vmatmul.mubr.bf16.gmra.mrb[0].mxu0 %v2902
        %v3354 = vpop.f32.mrb[0].mxu0
        %v3355 = vadd.f32 %v2973, %v3354
        %v3356 = vpop.f32.mrb[0].mxu0
        %v3357 = vadd.f32 %v2977, %v3356
        %v3358 = vpop.f32.mrb[0].mxu0
        %v3359 = vadd.f32 %v2973, %v3358
        %v3360 = vpop.f32.mrb[0].mxu0
        %v3361 = vadd.f32 %v2977, %v3360
        %3362 = vmatprep.mubr.bf16.mxu0 %v2906
        %3363 = vmatmul.mubr.bf16.gmra.mrb[0].mxu0 %v2905
        %v3364 = vpop.f32.mrb[0].mxu0
        %v3365 = vadd.f32 %v2973, %v3364
        %v3366 = vpop.f32.mrb[0].mxu0
        %v3367 = vadd.f32 %v2977, %v3366
        %v3368 = vpop.f32.mrb[0].mxu0
        %v3369 = vadd.f32 %v2973, %v3368
        %v3370 = vpop.f32.mrb[0].mxu0
        %v3371 = vadd.f32 %v2977, %v3370
        %3372 = vmatprep.mubr.bf16.mxu0 %v2909
        %3373 = vmatmul.mubr.bf16.gmra.mrb[0].mxu0 %v2908
        %v3374 = vpop.f32.mrb[0].mxu0
        %v3375 = vadd.f32 %v2973, %v3374
        %v3376 = vpop.f32.mrb[0].mxu0
        %v3377 = vadd.f32 %v2977, %v3376
        %v3378 = vpop.f32.mrb[0].mxu0
        %v3379 = vadd.f32 %v2973, %v3378
        %v3380 = vpop.f32.mrb[0].mxu0
        %v3381 = vadd.f32 %v2977, %v3380
        %3382 = vmatprep.mubr.bf16.mxu0 %v2912
        %3383 = vmatmul.mubr.bf16.gmra.mrb[0].mxu0 %v2911
        %v3384 = vpop.f32.mrb[0].mxu0
        %v3385 = vadd.f32 %v2973, %v3384
        %v3386 = vpop.f32.mrb[0].mxu0
        %v3387 = vadd.f32 %v2977, %v3386
        %v3388 = vpop.f32.mrb[0].mxu0
        %v3389 = vadd.f32 %v2973, %v3388
        %v3390 = vpop.f32.mrb[0].mxu0
        %v3391 = vadd.f32 %v2977, %v3390
        %3392 = vmatprep.mubr.bf16.mxu0 %v2915
        %3393 = vmatmul.mubr.bf16.gmra.mrb[0].mxu0 %v2914
        %v3394 = vpop.f32.mrb[0].mxu0
        %v3395 = vadd.f32 %v2973, %v3394
        %v3396 = vpop.f32.mrb[0].mxu0
        %v3397 = vadd.f32 %v2977, %v3396
        %v3398 = vpop.f32.mrb[0].mxu0
        %v3399 = vadd.f32 %v2973, %v3398
        %v3400 = vpop.f32.mrb[0].mxu0
        %v3401 = vadd.f32 %v2977, %v3400
        %3402 = vmatprep.mubr.bf16.mxu0 %v2918
        %3403 = vmatmul.mubr.bf16.gmra.mrb[0].mxu0 %v2917
        %v3404 = vpop.f32.mrb[0].mxu0
        %v3405 = vadd.f32 %v2973, %v3404
        %v3406 = vpop.f32.mrb[0].mxu0
        %v3407 = vadd.f32 %v2977, %v3406
        %v3408 = vpop.f32.mrb[0].mxu0
        %v3409 = vadd.f32 %v2973, %v3408
        %v3410 = vpop.f32.mrb[0].mxu0
        %v3411 = vadd.f32 %v2977, %v3410
        %3412 = vdwg.mxu0
        %3413 = vmatprep.subr.bf16.mxu0 %v3157
        %3414 = vmatpush1.bf16.msra.mxu0 %v3156
        %3415 = vmatprep.subr.bf16.mxu0 %v3159
        %3416 = vmatpush1.bf16.msra.mxu0 %v3158
        %3417 = vmatprep.subr.bf16.mxu0 %v3161
        %3418 = vmatpush1.bf16.msra.mxu0 %v3160
        %3419 = vmatprep.subr.bf16.mxu0 %v3163
        %3420 = vmatpush1.bf16.msra.mxu0 %v3162
        %3421 = vmatprep.subr.bf16.mxu0 %v3165
        %3422 = vmatpush1.bf16.msra.mxu0 %v3164
        %3423 = vmatprep.subr.bf16.mxu0 %v3167
        %3424 = vmatpush1.bf16.msra.mxu0 %v3166
        %3425 = vmatprep.subr.bf16.mxu0 %v3169
        %3426 = vmatpush1.bf16.msra.mxu0 %v3168
        %3427 = vmatprep.subr.bf16.mxu0 %v3171
        %3428 = vmatpush1.bf16.msra.mxu0 %v3170
        %3429 = vmatprep.subr.bf16.mxu0 0
        %3430 = vmatpush1.bf16.msra.mxu0 0
        %3431 = vmatprep.subr.bf16.mxu0 0
        %3432 = vmatpush1.bf16.msra.mxu0 0
        %3433 = vmatprep.subr.bf16.mxu0 0
        %3434 = vmatpush1.bf16.msra.mxu0 0
        %3435 = vmatprep.subr.bf16.mxu0 0
        %3436 = vmatpush1.bf16.msra.mxu0 0
        %3437 = vmatprep.subr.bf16.mxu0 0
        %3438 = vmatpush1.bf16.msra.mxu0 0
        %3439 = vmatprep.subr.bf16.mxu0 0
        %3440 = vmatpush1.bf16.msra.mxu0 0
        %3441 = vmatprep.subr.bf16.mxu0 0
        %3442 = vmatpush1.bf16.msra.mxu0 0
        %3443 = vmatprep.subr.bf16.mxu0 0
        %3444 = vmatpush1.bf16.msra.mxu0 0
        %3445 = vmatprep.mubr.bf16.mxu0 0
        %3446 = vmatmul.mubr.bf16.gmra.mrb[0].mxu0 %v2874
        %v3447 = vpop.f32.mrb[0].mxu0
        %v3448 = vadd.f32 %v3255, %v3447
        %v3449 = vpop.f32.mrb[0].mxu0
        %v3450 = vadd.f32 %v3257, %v3449
        %v3451 = vpop.f32.mrb[0].mxu0
        %v3452 = vadd.f32 %v3259, %v3451
        %v3453 = vpop.f32.mrb[0].mxu0
        %v3454 = vadd.f32 %v3261, %v3453
        %3455 = vmatprep.mubr.bf16.mxu0 0
        %3456 = vmatmul.mubr.bf16.gmra.mrb[0].mxu0 %v2877
        %v3457 = vpop.f32.mrb[0].mxu0
        %v3458 = vadd.f32 %v3265, %v3457
        %v3459 = vpop.f32.mrb[0].mxu0
        %v3460 = vadd.f32 %v3267, %v3459
        %v3461 = vpop.f32.mrb[0].mxu0
        %v3462 = vadd.f32 %v3269, %v3461
        %v3463 = vpop.f32.mrb[0].mxu0
        %v3464 = vadd.f32 %v3271, %v3463
        %3465 = vmatprep.mubr.bf16.mxu0 0
        %3466 = vmatmul.mubr.bf16.gmra.mrb[0].mxu0 %v2880
        %v3467 = vpop.f32.mrb[0].mxu0
        %v3468 = vadd.f32 %v3275, %v3467
        %v3469 = vpop.f32.mrb[0].mxu0
        %v3470 = vadd.f32 %v3277, %v3469
        %v3471 = vpop.f32.mrb[0].mxu0
        %v3472 = vadd.f32 %v3279, %v3471
        %v3473 = vpop.f32.mrb[0].mxu0
        %v3474 = vadd.f32 %v3281, %v3473
        %3475 = vmatprep.mubr.bf16.mxu0 0
        %3476 = vmatmul.mubr.bf16.gmra.mrb[0].mxu0 %v2883
        %v3477 = vpop.f32.mrb[0].mxu0
        %v3478 = vadd.f32 %v3285, %v3477
        %v3479 = vpop.f32.mrb[0].mxu0
        %v3480 = vadd.f32 %v3287, %v3479
        %v3481 = vpop.f32.mrb[0].mxu0
        %v3482 = vadd.f32 %v3289, %v3481
        %v3483 = vpop.f32.mrb[0].mxu0
        %v3484 = vadd.f32 %v3291, %v3483
        %3485 = vmatprep.mubr.bf16.mxu0 0
        %3486 = vmatmul.mubr.bf16.gmra.mrb[0].mxu0 %v2886
        %v3487 = vpop.f32.mrb[0].mxu0
        %v3488 = vadd.f32 %v3295, %v3487
        %v3489 = vpop.f32.mrb[0].mxu0
        %v3490 = vadd.f32 %v3297, %v3489
        %v3491 = vpop.f32.mrb[0].mxu0
        %v3492 = vadd.f32 %v3299, %v3491
        %v3493 = vpop.f32.mrb[0].mxu0
        %v3494 = vadd.f32 %v3301, %v3493
        %3495 = vmatprep.mubr.bf16.mxu0 0
        %3496 = vmatmul.mubr.bf16.gmra.mrb[0].mxu0 %v2889
        %v3497 = vpop.f32.mrb[0].mxu0
        %v3498 = vadd.f32 %v3305, %v3497
        %v3499 = vpop.f32.mrb[0].mxu0
        %v3500 = vadd.f32 %v3307, %v3499
        %v3501 = vpop.f32.mrb[0].mxu0
        %v3502 = vadd.f32 %v3309, %v3501
        %v3503 = vpop.f32.mrb[0].mxu0
        %v3504 = vadd.f32 %v3311, %v3503
        %3505 = vmatprep.mubr.bf16.mxu0 0
        %3506 = vmatmul.mubr.bf16.gmra.mrb[0].mxu0 %v2892
        %v3507 = vpop.f32.mrb[0].mxu0
        %v3508 = vadd.f32 %v3315, %v3507
        %v3509 = vpop.f32.mrb[0].mxu0
        %v3510 = vadd.f32 %v3317, %v3509
        %v3511 = vpop.f32.mrb[0].mxu0
        %v3512 = vadd.f32 %v3319, %v3511
        %v3513 = vpop.f32.mrb[0].mxu0
        %v3514 = vadd.f32 %v3321, %v3513
        %3515 = vmatprep.mubr.bf16.mxu0 0
        %3516 = vmatmul.mubr.bf16.gmra.mrb[0].mxu0 %v2895
        %v3517 = vpop.f32.mrb[0].mxu0
        %v3518 = vadd.f32 %v3325, %v3517
        %v3519 = vpop.f32.mrb[0].mxu0
        %v3520 = vadd.f32 %v3327, %v3519
        %v3521 = vpop.f32.mrb[0].mxu0
        %v3522 = vadd.f32 %v3329, %v3521
        %v3523 = vpop.f32.mrb[0].mxu0
        %v3524 = vadd.f32 %v3331, %v3523
        %3525 = vmatprep.mubr.bf16.mxu0 0
        %3526 = vmatmul.mubr.bf16.gmra.mrb[0].mxu0 %v2898
        %v3527 = vpop.f32.mrb[0].mxu0
        %v3528 = vadd.f32 %v3335, %v3527
        %v3529 = vpop.f32.mrb[0].mxu0
        %v3530 = vadd.f32 %v3337, %v3529
        %v3531 = vpop.f32.mrb[0].mxu0
        %v3532 = vadd.f32 %v3339, %v3531
        %v3533 = vpop.f32.mrb[0].mxu0
        %v3534 = vadd.f32 %v3341, %v3533
        %3535 = vmatprep.mubr.bf16.mxu0 0
        %3536 = vmatmul.mubr.bf16.gmra.mrb[0].mxu0 %v2901
        %v3537 = vpop.f32.mrb[0].mxu0
        %v3538 = vadd.f32 %v3345, %v3537
        %v3539 = vpop.f32.mrb[0].mxu0
        %v3540 = vadd.f32 %v3347, %v3539
        %v3541 = vpop.f32.mrb[0].mxu0
        %v3542 = vadd.f32 %v3349, %v3541
        %v3543 = vpop.f32.mrb[0].mxu0
        %v3544 = vadd.f32 %v3351, %v3543
        %3545 = vmatprep.mubr.bf16.mxu0 0
        %3546 = vmatmul.mubr.bf16.gmra.mrb[0].mxu0 %v2904
        %v3547 = vpop.f32.mrb[0].mxu0
        %v3548 = vadd.f32 %v3355, %v3547
        %v3549 = vpop.f32.mrb[0].mxu0
        %v3550 = vadd.f32 %v3357, %v3549
        %v3551 = vpop.f32.mrb[0].mxu0
        %v3552 = vadd.f32 %v3359, %v3551
        %v3553 = vpop.f32.mrb[0].mxu0
        %v3554 = vadd.f32 %v3361, %v3553
        %3555 = vmatprep.mubr.bf16.mxu0 0
        %3556 = vmatmul.mubr.bf16.gmra.mrb[0].mxu0 %v2907
        %v3557 = vpop.f32.mrb[0].mxu0
        %v3558 = vadd.f32 %v3365, %v3557
        %v3559 = vpop.f32.mrb[0].mxu0
        %v3560 = vadd.f32 %v3367, %v3559
        %v3561 = vpop.f32.mrb[0].mxu0
        %v3562 = vadd.f32 %v3369, %v3561
        %v3563 = vpop.f32.mrb[0].mxu0
        %v3564 = vadd.f32 %v3371, %v3563
        %3565 = vmatprep.mubr.bf16.mxu0 0
        %3566 = vmatmul.mubr.bf16.gmra.mrb[0].mxu0 %v2910
        %v3567 = vpop.f32.mrb[0].mxu0
        %v3568 = vadd.f32 %v3375, %v3567
        %v3569 = vpop.f32.mrb[0].mxu0
        %v3570 = vadd.f32 %v3377, %v3569
        %v3571 = vpop.f32.mrb[0].mxu0
        %v3572 = vadd.f32 %v3379, %v3571
        %v3573 = vpop.f32.mrb[0].mxu0
        %v3574 = vadd.f32 %v3381, %v3573
        %3575 = vmatprep.mubr.bf16.mxu0 0
        %3576 = vmatmul.mubr.bf16.gmra.mrb[0].mxu0 %v2913
        %v3577 = vpop.f32.mrb[0].mxu0
        %v3578 = vadd.f32 %v3385, %v3577
        %v3579 = vpop.f32.mrb[0].mxu0
        %v3580 = vadd.f32 %v3387, %v3579
        %v3581 = vpop.f32.mrb[0].mxu0
        %v3582 = vadd.f32 %v3389, %v3581
        %v3583 = vpop.f32.mrb[0].mxu0
        %v3584 = vadd.f32 %v3391, %v3583
        %3585 = vmatprep.mubr.bf16.mxu0 0
        %3586 = vmatmul.mubr.bf16.gmra.mrb[0].mxu0 %v2916
        %v3587 = vpop.f32.mrb[0].mxu0
        %v3588 = vadd.f32 %v3395, %v3587
        %v3589 = vpop.f32.mrb[0].mxu0
        %v3590 = vadd.f32 %v3397, %v3589
        %v3591 = vpop.f32.mrb[0].mxu0
        %v3592 = vadd.f32 %v3399, %v3591
        %v3593 = vpop.f32.mrb[0].mxu0
        %v3594 = vadd.f32 %v3401, %v3593
        %3595 = vmatprep.mubr.bf16.mxu0 0
        %3596 = vmatmul.mubr.bf16.gmra.mrb[0].mxu0 %v2919
        %v3597 = vpop.f32.mrb[0].mxu0
        %v3598 = vadd.f32 %v3405, %v3597
        %v3599 = vpop.f32.mrb[0].mxu0
        %v3600 = vadd.f32 %v3407, %v3599
        %v3601 = vpop.f32.mrb[0].mxu0
        %v3602 = vadd.f32 %v3409, %v3601
        %v3603 = vpop.f32.mrb[0].mxu0
        %v3604 = vadd.f32 %v3411, %v3603
        %3605 = vdwg.mxu0
        %v3606 = vmax.f32 %v3448, 0.0
        %v3607 = vmax.f32 %v3450, 0.0
        %v3608 = vmax.f32 %v3452, 0.0
        %v3609 = vmax.f32 %v3454, 0.0
        %v3610 = vmax.f32 %v3458, 0.0
        %v3611 = vmax.f32 %v3460, 0.0
        %v3612 = vmax.f32 %v3462, 0.0
        %v3613 = vmax.f32 %v3464, 0.0
        %v3614 = vmax.f32 %v3468, 0.0
        %v3615 = vmax.f32 %v3470, 0.0
        %v3616 = vmax.f32 %v3472, 0.0
        %v3617 = vmax.f32 %v3474, 0.0
        %v3618 = vmax.f32 %v3478, 0.0
        %v3619 = vmax.f32 %v3480, 0.0
        %v3620 = vmax.f32 %v3482, 0.0
        %v3621 = vmax.f32 %v3484, 0.0
        %v3622 = vmax.f32 %v3488, 0.0
        %v3623 = vmax.f32 %v3490, 0.0
        %v3624 = vmax.f32 %v3492, 0.0
        %v3625 = vmax.f32 %v3494, 0.0
        %v3626 = vmax.f32 %v3498, 0.0
        %v3627 = vmax.f32 %v3500, 0.0
        %v3628 = vmax.f32 %v3502, 0.0
        %v3629 = vmax.f32 %v3504, 0.0
        %v3630 = vmax.f32 %v3508, 0.0
        %v3631 = vmax.f32 %v3510, 0.0
        %v3632 = vmax.f32 %v3512, 0.0
        %v3633 = vmax.f32 %v3514, 0.0
        %v3634 = vmax.f32 %v3518, 0.0
        %v3635 = vmax.f32 %v3520, 0.0
        %v3636 = vmax.f32 %v3522, 0.0
        %v3637 = vmax.f32 %v3524, 0.0
        %v3638 = vmax.f32 %v3528, 0.0
        %v3639 = vmax.f32 %v3530, 0.0
        %v3640 = vmax.f32 %v3532, 0.0
        %v3641 = vmax.f32 %v3534, 0.0
        %v3642 = vmax.f32 %v3538, 0.0
        %v3643 = vmax.f32 %v3540, 0.0
        %v3644 = vmax.f32 %v3542, 0.0
        %v3645 = vmax.f32 %v3544, 0.0
        %v3646 = vmax.f32 %v3548, 0.0
        %v3647 = vmax.f32 %v3550, 0.0
        %v3648 = vmax.f32 %v3552, 0.0
        %v3649 = vmax.f32 %v3554, 0.0
        %v3650 = vmax.f32 %v3558, 0.0
        %v3651 = vmax.f32 %v3560, 0.0
        %v3652 = vmax.f32 %v3562, 0.0
        %v3653 = vmax.f32 %v3564, 0.0
        %v3654 = vmax.f32 %v3568, 0.0
        %v3655 = vmax.f32 %v3570, 0.0
        %v3656 = vmax.f32 %v3572, 0.0
        %v3657 = vmax.f32 %v3574, 0.0
        %v3658 = vmax.f32 %v3578, 0.0
        %v3659 = vmax.f32 %v3580, 0.0
        %v3660 = vmax.f32 %v3582, 0.0
        %v3661 = vmax.f32 %v3584, 0.0
        %v3662 = vmax.f32 %v3588, 0.0
        %v3663 = vmax.f32 %v3590, 0.0
        %v3664 = vmax.f32 %v3592, 0.0
        %v3665 = vmax.f32 %v3594, 0.0
        %v3666 = vmax.f32 %v3598, 0.0
        %v3667 = vmax.f32 %v3600, 0.0
        %v3668 = vmax.f32 %v3602, 0.0
        %v3669 = vmax.f32 %v3604, 0.0
        %v3670 = vpack.c.bf16 %v3608, %v3606
        %v3671 = vpack.c.bf16 %v3609, %v3607
        %v3672 = vpack.c.bf16 %v3612, %v3610
        %v3673 = vpack.c.bf16 %v3613, %v3611
        %v3674 = vpack.c.bf16 %v3616, %v3614
        %v3675 = vpack.c.bf16 %v3617, %v3615
        %v3676 = vpack.c.bf16 %v3620, %v3618
        %v3677 = vpack.c.bf16 %v3621, %v3619
        %v3678 = vpack.c.bf16 %v3624, %v3622
        %v3679 = vpack.c.bf16 %v3625, %v3623
        %v3680 = vpack.c.bf16 %v3628, %v3626
        %v3681 = vpack.c.bf16 %v3629, %v3627
        %v3682 = vpack.c.bf16 %v3632, %v3630
        %v3683 = vpack.c.bf16 %v3633, %v3631
        %v3684 = vpack.c.bf16 %v3636, %v3634
        %v3685 = vpack.c.bf16 %v3637, %v3635
        %v3686 = vpack.c.bf16 %v3640, %v3638
        %v3687 = vpack.c.bf16 %v3641, %v3639
        %v3688 = vpack.c.bf16 %v3644, %v3642
        %v3689 = vpack.c.bf16 %v3645, %v3643
        %v3690 = vpack.c.bf16 %v3648, %v3646
        %v3691 = vpack.c.bf16 %v3649, %v3647
        %v3692 = vpack.c.bf16 %v3652, %v3650
        %v3693 = vpack.c.bf16 %v3653, %v3651
        %v3694 = vpack.c.bf16 %v3656, %v3654
        %v3695 = vpack.c.bf16 %v3657, %v3655
        %v3696 = vpack.c.bf16 %v3660, %v3658
        %v3697 = vpack.c.bf16 %v3661, %v3659
        %v3698 = vpack.c.bf16 %v3664, %v3662
        %v3699 = vpack.c.bf16 %v3665, %v3663
        %v3700 = vpack.c.bf16 %v3668, %v3666
        %v3701 = vpack.c.bf16 %v3669, %v3667
        %v3702 = vld [vmem:[%s5] sm:$0xf]
        %v3703 = vld [vmem:[%s5 + $0x4] sm:$0xf]
        %v3704 = vld [vmem:[%s5 + $0x8] sm:$0xf]
        %v3705 = vld [vmem:[%s5 + $0xc] sm:$0xf]
        %v3706 = vld [vmem:[%s5 + $0x10] sm:$0xf]
        %v3707 = vld [vmem:[%s5 + $0x14] sm:$0xf]
        %v3708 = vld [vmem:[%s5 + $0x18] sm:$0xf]
        %v3709 = vld [vmem:[%s5 + $0x1c] sm:$0xf]
        %v3710 = vld [vmem:[%s5 + $0x20] sm:$0xf]
        %v3711 = vld [vmem:[%s5 + $0x24] sm:$0xf]
        %v3712 = vld [vmem:[%s5 + $0x28] sm:$0xf]
        %v3713 = vld [vmem:[%s5 + $0x2c] sm:$0xf]
        %v3714 = vld [vmem:[%s5 + $0x30] sm:$0xf]
        %v3715 = vld [vmem:[%s5 + $0x34] sm:$0xf]
        %v3716 = vld [vmem:[%s5 + $0x38] sm:$0xf]
        %v3717 = vld [vmem:[%s5 + $0x3c] sm:$0xf]
        %v3718 = vld [vmem:[%s5 + $0x40] sm:$0xf]
        %v3719 = vld [vmem:[%s5 + $0x44] sm:$0xf]
        %v3720 = vld [vmem:[%s5 + $0x48] sm:$0xf]
        %v3721 = vld [vmem:[%s5 + $0x4c] sm:$0xf]
        %v3722 = vld [vmem:[%s5 + $0x50] sm:$0xf]
        %v3723 = vld [vmem:[%s5 + $0x54] sm:$0xf]
        %v3724 = vld [vmem:[%s5 + $0x58] sm:$0xf]
        %v3725 = vld [vmem:[%s5 + $0x5c] sm:$0xf]
        %v3726 = vld [vmem:[%s5 + $0x60] sm:$0xf]
        %v3727 = vld [vmem:[%s5 + $0x64] sm:$0xf]
        %v3728 = vld [vmem:[%s5 + $0x68] sm:$0xf]
        %v3729 = vld [vmem:[%s5 + $0x6c] sm:$0xf]
        %v3730 = vld [vmem:[%s5 + $0x70] sm:$0xf]
        %v3731 = vld [vmem:[%s5 + $0x74] sm:$0xf]
        %v3732 = vld [vmem:[%s5 + $0x78] sm:$0xf]
        %v3733 = vld [vmem:[%s5 + $0x7c] sm:$0xf]
        %v3734 = vld [vmem:[%s6] sm:$0x1]
        %v3736 = vlaneseq
        %v3737 = vshrl.u32 %v3736, 7
        %v3738 = vsub.s32 0, %v3737
        %v3739 = vrot.slane %v3734, %v3738
        %v3773 = vunpack.c.l.b16 %v3702
        %v3774 = vunpack.c.l.b16 %v3703
        %v3775 = vunpack.c.l.b16 %v3704
        %v3776 = vunpack.c.l.b16 %v3705
        %v3777 = vunpack.c.l.b16 %v3706
        %v3778 = vunpack.c.l.b16 %v3707
        %v3779 = vunpack.c.l.b16 %v3708
        %v3780 = vunpack.c.l.b16 %v3709
        %v3781 = vunpack.c.l.b16 %v3710
        %v3782 = vunpack.c.l.b16 %v3711
        %v3783 = vunpack.c.l.b16 %v3712
        %v3784 = vunpack.c.l.b16 %v3713
        %v3785 = vunpack.c.l.b16 %v3714
        %v3786 = vunpack.c.l.b16 %v3715
        %v3787 = vunpack.c.l.b16 %v3716
        %v3788 = vunpack.c.l.b16 %v3717
        %v3789 = vunpack.c.l.b16 %v3718
        %v3790 = vunpack.c.l.b16 %v3719
        %v3791 = vunpack.c.l.b16 %v3720
        %v3792 = vunpack.c.l.b16 %v3721
        %v3793 = vunpack.c.l.b16 %v3722
        %v3794 = vunpack.c.l.b16 %v3723
        %v3795 = vunpack.c.l.b16 %v3724
        %v3796 = vunpack.c.l.b16 %v3725
        %v3797 = vunpack.c.l.b16 %v3726
        %v3798 = vunpack.c.l.b16 %v3727
        %v3799 = vunpack.c.l.b16 %v3728
        %v3800 = vunpack.c.l.b16 %v3729
        %v3801 = vunpack.c.l.b16 %v3730
        %v3802 = vunpack.c.l.b16 %v3731
        %v3803 = vunpack.c.l.b16 %v3732
        %v3804 = vunpack.c.l.b16 %v3733
        %v3805 = vpack.c.b16 %v3774, %v3773
        %v3806 = vpack.c.b16 %v3776, %v3775
        %v3807 = vpack.c.b16 %v3778, %v3777
        %v3808 = vpack.c.b16 %v3780, %v3779
        %v3809 = vpack.c.b16 %v3782, %v3781
        %v3810 = vpack.c.b16 %v3784, %v3783
        %v3811 = vpack.c.b16 %v3786, %v3785
        %v3812 = vpack.c.b16 %v3788, %v3787
        %v3813 = vpack.c.b16 %v3790, %v3789
        %v3814 = vpack.c.b16 %v3792, %v3791
        %v3815 = vpack.c.b16 %v3794, %v3793
        %v3816 = vpack.c.b16 %v3796, %v3795
        %v3817 = vpack.c.b16 %v3798, %v3797
        %v3818 = vpack.c.b16 %v3800, %v3799
        %v3819 = vpack.c.b16 %v3802, %v3801
        %v3820 = vpack.c.b16 %v3804, %v3803
        %3837 = vmatprep.subr.bf16.mxu0 0
        %3838 = vmatpush1.bf16.msra.mxu0 %v3805
        %3839 = vmatprep.subr.bf16.mxu0 0
        %3840 = vmatpush1.bf16.msra.mxu0 %v3806
        %3841 = vmatprep.subr.bf16.mxu0 0
        %3842 = vmatpush1.bf16.msra.mxu0 %v3807
        %3843 = vmatprep.subr.bf16.mxu0 0
        %3844 = vmatpush1.bf16.msra.mxu0 %v3808
        %3845 = vmatprep.subr.bf16.mxu0 0
        %3846 = vmatpush1.bf16.msra.mxu0 %v3809
        %3847 = vmatprep.subr.bf16.mxu0 0
        %3848 = vmatpush1.bf16.msra.mxu0 %v3810
        %3849 = vmatprep.subr.bf16.mxu0 0
        %3850 = vmatpush1.bf16.msra.mxu0 %v3811
        %3851 = vmatprep.subr.bf16.mxu0 0
        %3852 = vmatpush1.bf16.msra.mxu0 %v3812
        %3853 = vmatprep.subr.bf16.mxu0 0
        %3854 = vmatpush1.bf16.msra.mxu0 %v3813
        %3855 = vmatprep.subr.bf16.mxu0 0
        %3856 = vmatpush1.bf16.msra.mxu0 %v3814
        %3857 = vmatprep.subr.bf16.mxu0 0
        %3858 = vmatpush1.bf16.msra.mxu0 %v3815
        %3859 = vmatprep.subr.bf16.mxu0 0
        %3860 = vmatpush1.bf16.msra.mxu0 %v3816
        %3861 = vmatprep.subr.bf16.mxu0 0
        %3862 = vmatpush1.bf16.msra.mxu0 %v3817
        %3863 = vmatprep.subr.bf16.mxu0 0
        %3864 = vmatpush1.bf16.msra.mxu0 %v3818
        %3865 = vmatprep.subr.bf16.mxu0 0
        %3866 = vmatpush1.bf16.msra.mxu0 %v3819
        %3867 = vmatprep.subr.bf16.mxu0 0
        %3868 = vmatpush1.bf16.msra.mxu0 %v3820
        %3869 = vmatprep.mubr.bf16.mxu0 %v3671
        %3870 = vmatmul.mubr.bf16.gmra.mrb[0].mxu0 %v3670
        %v3871 = vpop.f32.mrb[0].mxu0
        %v3872 = vadd.f32 %v3739, %v3871
        %v3873 = vpop.f32.mrb[0].mxu0
        %v3874 = vpop.f32.mrb[0].mxu0
        %v3875 = vadd.f32 %v3739, %v3874
        %v3876 = vpop.f32.mrb[0].mxu0
        %3877 = vmatprep.mubr.bf16.mxu0 %v3673
        %3878 = vmatmul.mubr.bf16.gmra.mrb[0].mxu0 %v3672
        %v3879 = vpop.f32.mrb[0].mxu0
        %v3880 = vadd.f32 %v3739, %v3879
        %v3881 = vpop.f32.mrb[0].mxu0
        %v3882 = vpop.f32.mrb[0].mxu0
        %v3883 = vadd.f32 %v3739, %v3882
        %v3884 = vpop.f32.mrb[0].mxu0
        %3885 = vmatprep.mubr.bf16.mxu0 %v3675
        %3886 = vmatmul.mubr.bf16.gmra.mrb[0].mxu0 %v3674
        %v3887 = vpop.f32.mrb[0].mxu0
        %v3888 = vadd.f32 %v3739, %v3887
        %v3889 = vpop.f32.mrb[0].mxu0
        %v3890 = vpop.f32.mrb[0].mxu0
        %v3891 = vadd.f32 %v3739, %v3890
        %v3892 = vpop.f32.mrb[0].mxu0
        %3893 = vmatprep.mubr.bf16.mxu0 %v3677
        %3894 = vmatmul.mubr.bf16.gmra.mrb[0].mxu0 %v3676
        %v3895 = vpop.f32.mrb[0].mxu0
        %v3896 = vadd.f32 %v3739, %v3895
        %v3897 = vpop.f32.mrb[0].mxu0
        %v3898 = vpop.f32.mrb[0].mxu0
        %v3899 = vadd.f32 %v3739, %v3898
        %v3900 = vpop.f32.mrb[0].mxu0
        %3901 = vmatprep.mubr.bf16.mxu0 %v3679
        %3902 = vmatmul.mubr.bf16.gmra.mrb[0].mxu0 %v3678
        %v3903 = vpop.f32.mrb[0].mxu0
        %v3904 = vadd.f32 %v3739, %v3903
        %v3905 = vpop.f32.mrb[0].mxu0
        %v3906 = vpop.f32.mrb[0].mxu0
        %v3907 = vadd.f32 %v3739, %v3906
        %v3908 = vpop.f32.mrb[0].mxu0
        %3909 = vmatprep.mubr.bf16.mxu0 %v3681
        %3910 = vmatmul.mubr.bf16.gmra.mrb[0].mxu0 %v3680
        %v3911 = vpop.f32.mrb[0].mxu0
        %v3912 = vadd.f32 %v3739, %v3911
        %v3913 = vpop.f32.mrb[0].mxu0
        %v3914 = vpop.f32.mrb[0].mxu0
        %v3915 = vadd.f32 %v3739, %v3914
        %v3916 = vpop.f32.mrb[0].mxu0
        %3917 = vmatprep.mubr.bf16.mxu0 %v3683
        %3918 = vmatmul.mubr.bf16.gmra.mrb[0].mxu0 %v3682
        %v3919 = vpop.f32.mrb[0].mxu0
        %v3920 = vadd.f32 %v3739, %v3919
        %v3921 = vpop.f32.mrb[0].mxu0
        %v3922 = vpop.f32.mrb[0].mxu0
        %v3923 = vadd.f32 %v3739, %v3922
        %v3924 = vpop.f32.mrb[0].mxu0
        %3925 = vmatprep.mubr.bf16.mxu0 %v3685
        %3926 = vmatmul.mubr.bf16.gmra.mrb[0].mxu0 %v3684
        %v3927 = vpop.f32.mrb[0].mxu0
        %v3928 = vadd.f32 %v3739, %v3927
        %v3929 = vpop.f32.mrb[0].mxu0
        %v3930 = vpop.f32.mrb[0].mxu0
        %v3931 = vadd.f32 %v3739, %v3930
        %v3932 = vpop.f32.mrb[0].mxu0
        %3933 = vmatprep.mubr.bf16.mxu0 %v3687
        %3934 = vmatmul.mubr.bf16.gmra.mrb[0].mxu0 %v3686
        %v3935 = vpop.f32.mrb[0].mxu0
        %v3936 = vadd.f32 %v3739, %v3935
        %v3937 = vpop.f32.mrb[0].mxu0
        %v3938 = vpop.f32.mrb[0].mxu0
        %v3939 = vadd.f32 %v3739, %v3938
        %v3940 = vpop.f32.mrb[0].mxu0
        %3941 = vmatprep.mubr.bf16.mxu0 %v3689
        %3942 = vmatmul.mubr.bf16.gmra.mrb[0].mxu0 %v3688
        %v3943 = vpop.f32.mrb[0].mxu0
        %v3944 = vadd.f32 %v3739, %v3943
        %v3945 = vpop.f32.mrb[0].mxu0
        %v3946 = vpop.f32.mrb[0].mxu0
        %v3947 = vadd.f32 %v3739, %v3946
        %v3948 = vpop.f32.mrb[0].mxu0
        %3949 = vmatprep.mubr.bf16.mxu0 %v3691
        %3950 = vmatmul.mubr.bf16.gmra.mrb[0].mxu0 %v3690
        %v3951 = vpop.f32.mrb[0].mxu0
        %v3952 = vadd.f32 %v3739, %v3951
        %v3953 = vpop.f32.mrb[0].mxu0
        %v3954 = vpop.f32.mrb[0].mxu0
        %v3955 = vadd.f32 %v3739, %v3954
        %v3956 = vpop.f32.mrb[0].mxu0
        %3957 = vmatprep.mubr.bf16.mxu0 %v3693
        %3958 = vmatmul.mubr.bf16.gmra.mrb[0].mxu0 %v3692
        %v3959 = vpop.f32.mrb[0].mxu0
        %v3960 = vadd.f32 %v3739, %v3959
        %v3961 = vpop.f32.mrb[0].mxu0
        %v3962 = vpop.f32.mrb[0].mxu0
        %v3963 = vadd.f32 %v3739, %v3962
        %v3964 = vpop.f32.mrb[0].mxu0
        %3965 = vmatprep.mubr.bf16.mxu0 %v3695
        %3966 = vmatmul.mubr.bf16.gmra.mrb[0].mxu0 %v3694
        %v3967 = vpop.f32.mrb[0].mxu0
        %v3968 = vadd.f32 %v3739, %v3967
        %v3969 = vpop.f32.mrb[0].mxu0
        %v3970 = vpop.f32.mrb[0].mxu0
        %v3971 = vadd.f32 %v3739, %v3970
        %v3972 = vpop.f32.mrb[0].mxu0
        %3973 = vmatprep.mubr.bf16.mxu0 %v3697
        %3974 = vmatmul.mubr.bf16.gmra.mrb[0].mxu0 %v3696
        %v3975 = vpop.f32.mrb[0].mxu0
        %v3976 = vadd.f32 %v3739, %v3975
        %v3977 = vpop.f32.mrb[0].mxu0
        %v3978 = vpop.f32.mrb[0].mxu0
        %v3979 = vadd.f32 %v3739, %v3978
        %v3980 = vpop.f32.mrb[0].mxu0
        %3981 = vmatprep.mubr.bf16.mxu0 %v3699
        %3982 = vmatmul.mubr.bf16.gmra.mrb[0].mxu0 %v3698
        %v3983 = vpop.f32.mrb[0].mxu0
        %v3984 = vadd.f32 %v3739, %v3983
        %v3985 = vpop.f32.mrb[0].mxu0
        %v3986 = vpop.f32.mrb[0].mxu0
        %v3987 = vadd.f32 %v3739, %v3986
        %v3988 = vpop.f32.mrb[0].mxu0
        %3989 = vmatprep.mubr.bf16.mxu0 %v3701
        %3990 = vmatmul.mubr.bf16.gmra.mrb[0].mxu0 %v3700
        %v3991 = vpop.f32.mrb[0].mxu0
        %v3992 = vadd.f32 %v3739, %v3991
        %v3993 = vpop.f32.mrb[0].mxu0
        %v3994 = vpop.f32.mrb[0].mxu0
        %v3995 = vadd.f32 %v3739, %v3994
        %v3996 = vpop.f32.mrb[0].mxu0
        %3997 = vdwg.mxu0
        %v3998 = vmax.f32 %v3872, 0.0
        %v3999 = vmax.f32 %v3875, 0.0
        %v4000 = vmax.f32 %v3880, 0.0
        %v4001 = vmax.f32 %v3883, 0.0
        %v4002 = vmax.f32 %v3888, 0.0
        %v4003 = vmax.f32 %v3891, 0.0
        %v4004 = vmax.f32 %v3896, 0.0
        %v4005 = vmax.f32 %v3899, 0.0
        %v4006 = vmax.f32 %v3904, 0.0
        %v4007 = vmax.f32 %v3907, 0.0
        %v4008 = vmax.f32 %v3912, 0.0
        %v4009 = vmax.f32 %v3915, 0.0
        %v4010 = vmax.f32 %v3920, 0.0
        %v4011 = vmax.f32 %v3923, 0.0
        %v4012 = vmax.f32 %v3928, 0.0
        %v4013 = vmax.f32 %v3931, 0.0
        %v4014 = vmax.f32 %v3936, 0.0
        %v4015 = vmax.f32 %v3939, 0.0
        %v4016 = vmax.f32 %v3944, 0.0
        %v4017 = vmax.f32 %v3947, 0.0
        %v4018 = vmax.f32 %v3952, 0.0
        %v4019 = vmax.f32 %v3955, 0.0
        %v4020 = vmax.f32 %v3960, 0.0
        %v4021 = vmax.f32 %v3963, 0.0
        %v4022 = vmax.f32 %v3968, 0.0
        %v4023 = vmax.f32 %v3971, 0.0
        %v4024 = vmax.f32 %v3976, 0.0
        %v4025 = vmax.f32 %v3979, 0.0
        %v4026 = vmax.f32 %v3984, 0.0
        %v4027 = vmax.f32 %v3987, 0.0
        %v4028 = vmax.f32 %v3992, 0.0
        %v4029 = vmax.f32 %v3995, 0.0
        %v4030 = vpack.c.bf16 %v3999, %v3998
        %v4031 = vpack.c.bf16 %v4001, %v4000
        %v4032 = vpack.c.bf16 %v4003, %v4002
        %v4033 = vpack.c.bf16 %v4005, %v4004
        %v4034 = vpack.c.bf16 %v4007, %v4006
        %v4035 = vpack.c.bf16 %v4009, %v4008
        %v4036 = vpack.c.bf16 %v4011, %v4010
        %v4037 = vpack.c.bf16 %v4013, %v4012
        %v4038 = vpack.c.bf16 %v4015, %v4014
        %v4039 = vpack.c.bf16 %v4017, %v4016
        %v4040 = vpack.c.bf16 %v4019, %v4018
        %v4041 = vpack.c.bf16 %v4021, %v4020
        %v4042 = vpack.c.bf16 %v4023, %v4022
        %v4043 = vpack.c.bf16 %v4025, %v4024
        %v4044 = vpack.c.bf16 %v4027, %v4026
        %v4045 = vpack.c.bf16 %v4029, %v4028
        %v4046 = vld [vmem:[%s7] sm:$0xf]
        %v4047 = vld [vmem:[%s7 + $0x4] sm:$0xf]
        %v4048 = vld [vmem:[%s7 + $0x8] sm:$0xf]
        %v4049 = vld [vmem:[%s7 + $0xc] sm:$0xf]
        %v4050 = vld [vmem:[%s7 + $0x10] sm:$0xf]
        %v4051 = vld [vmem:[%s7 + $0x14] sm:$0xf]
        %v4052 = vld [vmem:[%s7 + $0x18] sm:$0xf]
        %v4053 = vld [vmem:[%s7 + $0x1c] sm:$0xf]
        %v4054 = vld [vmem:[%s7 + $0x20] sm:$0xf]
        %v4055 = vld [vmem:[%s7 + $0x24] sm:$0xf]
        %v4056 = vld [vmem:[%s7 + $0x28] sm:$0xf]
        %v4057 = vld [vmem:[%s7 + $0x2c] sm:$0xf]
        %v4058 = vld [vmem:[%s7 + $0x30] sm:$0xf]
        %v4059 = vld [vmem:[%s7 + $0x34] sm:$0xf]
        %v4060 = vld [vmem:[%s7 + $0x38] sm:$0xf]
        %v4061 = vld [vmem:[%s7 + $0x3c] sm:$0xf]
        %v4062 = vld [vmem:[%s8] sm:$0x1]
        %v4064 = vlaneseq
        %v4065 = vshrl.u32 %v4064, 7
        %v4066 = vsub.s32 0, %v4065
        %v4067 = vrot.slane %v4062, %v4066
        %v4085 = vunpack.c.l.b16 %v4046
        %v4086 = vunpack.c.l.b16 %v4047
        %v4087 = vunpack.c.l.b16 %v4048
        %v4088 = vunpack.c.l.b16 %v4049
        %v4089 = vunpack.c.l.b16 %v4050
        %v4090 = vunpack.c.l.b16 %v4051
        %v4091 = vunpack.c.l.b16 %v4052
        %v4092 = vunpack.c.l.b16 %v4053
        %v4093 = vunpack.c.l.b16 %v4054
        %v4094 = vunpack.c.l.b16 %v4055
        %v4095 = vunpack.c.l.b16 %v4056
        %v4096 = vunpack.c.l.b16 %v4057
        %v4097 = vunpack.c.l.b16 %v4058
        %v4098 = vunpack.c.l.b16 %v4059
        %v4099 = vunpack.c.l.b16 %v4060
        %v4100 = vunpack.c.l.b16 %v4061
        %v4101 = vpack.c.b16 %v4086, %v4085
        %v4102 = vpack.c.b16 %v4088, %v4087
        %v4103 = vpack.c.b16 %v4090, %v4089
        %v4104 = vpack.c.b16 %v4092, %v4091
        %v4105 = vpack.c.b16 %v4094, %v4093
        %v4106 = vpack.c.b16 %v4096, %v4095
        %v4107 = vpack.c.b16 %v4098, %v4097
        %v4108 = vpack.c.b16 %v4100, %v4099
        %4117 = vmatprep.subr.bf16.mxu0 0
        %4118 = vmatpush1.bf16.msra.mxu0 %v4101
        %4119 = vmatprep.subr.bf16.mxu0 0
        %4120 = vmatpush1.bf16.msra.mxu0 %v4102
        %4121 = vmatprep.subr.bf16.mxu0 0
        %4122 = vmatpush1.bf16.msra.mxu0 %v4103
        %4123 = vmatprep.subr.bf16.mxu0 0
        %4124 = vmatpush1.bf16.msra.mxu0 %v4104
        %4125 = vmatprep.subr.bf16.mxu0 0
        %4126 = vmatpush1.bf16.msra.mxu0 %v4105
        %4127 = vmatprep.subr.bf16.mxu0 0
        %4128 = vmatpush1.bf16.msra.mxu0 %v4106
        %4129 = vmatprep.subr.bf16.mxu0 0
        %4130 = vmatpush1.bf16.msra.mxu0 %v4107
        %4131 = vmatprep.subr.bf16.mxu0 0
        %4132 = vmatpush1.bf16.msra.mxu0 %v4108
        %4133 = vmatprep.subr.bf16.mxu0 0
        %4134 = vmatpush1.bf16.msra.mxu0 0
        %4135 = vmatprep.subr.bf16.mxu0 0
        %4136 = vmatpush1.bf16.msra.mxu0 0
        %4137 = vmatprep.subr.bf16.mxu0 0
        %4138 = vmatpush1.bf16.msra.mxu0 0
        %4139 = vmatprep.subr.bf16.mxu0 0
        %4140 = vmatpush1.bf16.msra.mxu0 0
        %4141 = vmatprep.subr.bf16.mxu0 0
        %4142 = vmatpush1.bf16.msra.mxu0 0
        %4143 = vmatprep.subr.bf16.mxu0 0
        %4144 = vmatpush1.bf16.msra.mxu0 0
        %4145 = vmatprep.subr.bf16.mxu0 0
        %4146 = vmatpush1.bf16.msra.mxu0 0
        %4147 = vmatprep.subr.bf16.mxu0 0
        %4148 = vmatpush1.bf16.msra.mxu0 0
        %4149 = vmatprep.mubr.bf16.mxu0 0
        %4150 = vmatmul.mubr.bf16.gmra.mrb[0].mxu0 %v4030
        %v4151 = vpop.f32.mrb[0].mxu0
        %v4152 = vadd.f32 %v4067, %v4151
        %v4153 = vpop.f32.mrb[0].mxu0
        %v4154 = vpop.f32.mrb[0].mxu0
        %v4155 = vadd.f32 %v4067, %v4154
        %v4156 = vpop.f32.mrb[0].mxu0
        %4157 = vmatprep.mubr.bf16.mxu0 0
        %4158 = vmatmul.mubr.bf16.gmra.mrb[0].mxu0 %v4031
        %v4159 = vpop.f32.mrb[0].mxu0
        %v4160 = vadd.f32 %v4067, %v4159
        %v4161 = vpop.f32.mrb[0].mxu0
        %v4162 = vpop.f32.mrb[0].mxu0
        %v4163 = vadd.f32 %v4067, %v4162
        %v4164 = vpop.f32.mrb[0].mxu0
        %4165 = vmatprep.mubr.bf16.mxu0 0
        %4166 = vmatmul.mubr.bf16.gmra.mrb[0].mxu0 %v4032
        %v4167 = vpop.f32.mrb[0].mxu0
        %v4168 = vadd.f32 %v4067, %v4167
        %v4169 = vpop.f32.mrb[0].mxu0
        %v4170 = vpop.f32.mrb[0].mxu0
        %v4171 = vadd.f32 %v4067, %v4170
        %v4172 = vpop.f32.mrb[0].mxu0
        %4173 = vmatprep.mubr.bf16.mxu0 0
        %4174 = vmatmul.mubr.bf16.gmra.mrb[0].mxu0 %v4033
        %v4175 = vpop.f32.mrb[0].mxu0
        %v4176 = vadd.f32 %v4067, %v4175
        %v4177 = vpop.f32.mrb[0].mxu0
        %v4178 = vpop.f32.mrb[0].mxu0
        %v4179 = vadd.f32 %v4067, %v4178
        %v4180 = vpop.f32.mrb[0].mxu0
        %4181 = vmatprep.mubr.bf16.mxu0 0
        %4182 = vmatmul.mubr.bf16.gmra.mrb[0].mxu0 %v4034
        %v4183 = vpop.f32.mrb[0].mxu0
        %v4184 = vadd.f32 %v4067, %v4183
        %v4185 = vpop.f32.mrb[0].mxu0
        %v4186 = vpop.f32.mrb[0].mxu0
        %v4187 = vadd.f32 %v4067, %v4186
        %v4188 = vpop.f32.mrb[0].mxu0
        %4189 = vmatprep.mubr.bf16.mxu0 0
        %4190 = vmatmul.mubr.bf16.gmra.mrb[0].mxu0 %v4035
        %v4191 = vpop.f32.mrb[0].mxu0
        %v4192 = vadd.f32 %v4067, %v4191
        %v4193 = vpop.f32.mrb[0].mxu0
        %v4194 = vpop.f32.mrb[0].mxu0
        %v4195 = vadd.f32 %v4067, %v4194
        %v4196 = vpop.f32.mrb[0].mxu0
        %4197 = vmatprep.mubr.bf16.mxu0 0
        %4198 = vmatmul.mubr.bf16.gmra.mrb[0].mxu0 %v4036
        %v4199 = vpop.f32.mrb[0].mxu0
        %v4200 = vadd.f32 %v4067, %v4199
        %v4201 = vpop.f32.mrb[0].mxu0
        %v4202 = vpop.f32.mrb[0].mxu0
        %v4203 = vadd.f32 %v4067, %v4202
        %v4204 = vpop.f32.mrb[0].mxu0
        %4205 = vmatprep.mubr.bf16.mxu0 0
        %4206 = vmatmul.mubr.bf16.gmra.mrb[0].mxu0 %v4037
        %v4207 = vpop.f32.mrb[0].mxu0
        %v4208 = vadd.f32 %v4067, %v4207
        %v4209 = vpop.f32.mrb[0].mxu0
        %v4210 = vpop.f32.mrb[0].mxu0
        %v4211 = vadd.f32 %v4067, %v4210
        %v4212 = vpop.f32.mrb[0].mxu0
        %4213 = vmatprep.mubr.bf16.mxu0 0
        %4214 = vmatmul.mubr.bf16.gmra.mrb[0].mxu0 %v4038
        %v4215 = vpop.f32.mrb[0].mxu0
        %v4216 = vadd.f32 %v4067, %v4215
        %v4217 = vpop.f32.mrb[0].mxu0
        %v4218 = vpop.f32.mrb[0].mxu0
        %v4219 = vadd.f32 %v4067, %v4218
        %v4220 = vpop.f32.mrb[0].mxu0
        %4221 = vmatprep.mubr.bf16.mxu0 0
        %4222 = vmatmul.mubr.bf16.gmra.mrb[0].mxu0 %v4039
        %v4223 = vpop.f32.mrb[0].mxu0
        %v4224 = vadd.f32 %v4067, %v4223
        %v4225 = vpop.f32.mrb[0].mxu0
        %v4226 = vpop.f32.mrb[0].mxu0
        %v4227 = vadd.f32 %v4067, %v4226
        %v4228 = vpop.f32.mrb[0].mxu0
        %4229 = vmatprep.mubr.bf16.mxu0 0
        %4230 = vmatmul.mubr.bf16.gmra.mrb[0].mxu0 %v4040
        %v4231 = vpop.f32.mrb[0].mxu0
        %v4232 = vadd.f32 %v4067, %v4231
        %v4233 = vpop.f32.mrb[0].mxu0
        %v4234 = vpop.f32.mrb[0].mxu0
        %v4235 = vadd.f32 %v4067, %v4234
        %v4236 = vpop.f32.mrb[0].mxu0
        %4237 = vmatprep.mubr.bf16.mxu0 0
        %4238 = vmatmul.mubr.bf16.gmra.mrb[0].mxu0 %v4041
        %v4239 = vpop.f32.mrb[0].mxu0
        %v4240 = vadd.f32 %v4067, %v4239
        %v4241 = vpop.f32.mrb[0].mxu0
        %v4242 = vpop.f32.mrb[0].mxu0
        %v4243 = vadd.f32 %v4067, %v4242
        %v4244 = vpop.f32.mrb[0].mxu0
        %4245 = vmatprep.mubr.bf16.mxu0 0
        %4246 = vmatmul.mubr.bf16.gmra.mrb[0].mxu0 %v4042
        %v4247 = vpop.f32.mrb[0].mxu0
        %v4248 = vadd.f32 %v4067, %v4247
        %v4249 = vpop.f32.mrb[0].mxu0
        %v4250 = vpop.f32.mrb[0].mxu0
        %v4251 = vadd.f32 %v4067, %v4250
        %v4252 = vpop.f32.mrb[0].mxu0
        %4253 = vmatprep.mubr.bf16.mxu0 0
        %4254 = vmatmul.mubr.bf16.gmra.mrb[0].mxu0 %v4043
        %v4255 = vpop.f32.mrb[0].mxu0
        %v4256 = vadd.f32 %v4067, %v4255
        %v4257 = vpop.f32.mrb[0].mxu0
        %v4258 = vpop.f32.mrb[0].mxu0
        %v4259 = vadd.f32 %v4067, %v4258
        %v4260 = vpop.f32.mrb[0].mxu0
        %4261 = vmatprep.mubr.bf16.mxu0 0
        %4262 = vmatmul.mubr.bf16.gmra.mrb[0].mxu0 %v4044
        %v4263 = vpop.f32.mrb[0].mxu0
        %v4264 = vadd.f32 %v4067, %v4263
        %v4265 = vpop.f32.mrb[0].mxu0
        %v4266 = vpop.f32.mrb[0].mxu0
        %v4267 = vadd.f32 %v4067, %v4266
        %v4268 = vpop.f32.mrb[0].mxu0
        %4269 = vmatprep.mubr.bf16.mxu0 0
        %4270 = vmatmul.mubr.bf16.gmra.mrb[0].mxu0 %v4045
        %v4271 = vpop.f32.mrb[0].mxu0
        %v4272 = vadd.f32 %v4067, %v4271
        %v4273 = vpop.f32.mrb[0].mxu0
        %v4274 = vpop.f32.mrb[0].mxu0
        %v4275 = vadd.f32 %v4067, %v4274
        %v4276 = vpop.f32.mrb[0].mxu0
        %4277 = vdwg.mxu0
        %v4278 = vmax.f32 %v4152, 0.0
        %v4279 = vmax.f32 %v4155, 0.0
        %v4280 = vmax.f32 %v4160, 0.0
        %v4281 = vmax.f32 %v4163, 0.0
        %v4282 = vmax.f32 %v4168, 0.0
        %v4283 = vmax.f32 %v4171, 0.0
        %v4284 = vmax.f32 %v4176, 0.0
        %v4285 = vmax.f32 %v4179, 0.0
        %v4286 = vmax.f32 %v4184, 0.0
        %v4287 = vmax.f32 %v4187, 0.0
        %v4288 = vmax.f32 %v4192, 0.0
        %v4289 = vmax.f32 %v4195, 0.0
        %v4290 = vmax.f32 %v4200, 0.0
        %v4291 = vmax.f32 %v4203, 0.0
        %v4292 = vmax.f32 %v4208, 0.0
        %v4293 = vmax.f32 %v4211, 0.0
        %v4294 = vmax.f32 %v4216, 0.0
        %v4295 = vmax.f32 %v4219, 0.0
        %v4296 = vmax.f32 %v4224, 0.0
        %v4297 = vmax.f32 %v4227, 0.0
        %v4298 = vmax.f32 %v4232, 0.0
        %v4299 = vmax.f32 %v4235, 0.0
        %v4300 = vmax.f32 %v4240, 0.0
        %v4301 = vmax.f32 %v4243, 0.0
        %v4302 = vmax.f32 %v4248, 0.0
        %v4303 = vmax.f32 %v4251, 0.0
        %v4304 = vmax.f32 %v4256, 0.0
        %v4305 = vmax.f32 %v4259, 0.0
        %v4306 = vmax.f32 %v4264, 0.0
        %v4307 = vmax.f32 %v4267, 0.0
        %v4308 = vmax.f32 %v4272, 0.0
        %v4309 = vmax.f32 %v4275, 0.0
        %v4310 = vpack.c.bf16 %v4279, %v4278
        %v4311 = vpack.c.bf16 %v4281, %v4280
        %v4312 = vpack.c.bf16 %v4283, %v4282
        %v4313 = vpack.c.bf16 %v4285, %v4284
        %v4314 = vpack.c.bf16 %v4287, %v4286
        %v4315 = vpack.c.bf16 %v4289, %v4288
        %v4316 = vpack.c.bf16 %v4291, %v4290
        %v4317 = vpack.c.bf16 %v4293, %v4292
        %v4318 = vpack.c.bf16 %v4295, %v4294
        %v4319 = vpack.c.bf16 %v4297, %v4296
        %v4320 = vpack.c.bf16 %v4299, %v4298
        %v4321 = vpack.c.bf16 %v4301, %v4300
        %v4322 = vpack.c.bf16 %v4303, %v4302
        %v4323 = vpack.c.bf16 %v4305, %v4304
        %v4324 = vpack.c.bf16 %v4307, %v4306
        %v4325 = vpack.c.bf16 %v4309, %v4308
        %v4326 = vld [vmem:[%s9] sm:$0xf]
        %v4327 = vld [vmem:[%s9 + $0x4] sm:$0xf]
        %v4328 = vld [vmem:[%s9 + $0x8] sm:$0xf]
        %v4329 = vld [vmem:[%s9 + $0xc] sm:$0xf]
        %v4330 = vld [vmem:[%s9 + $0x10] sm:$0xf]
        %v4331 = vld [vmem:[%s9 + $0x14] sm:$0xf]
        %v4332 = vld [vmem:[%s9 + $0x18] sm:$0xf]
        %v4333 = vld [vmem:[%s9 + $0x1c] sm:$0xf]
        %v4334 = vld [vmem:[%s9 + $0x20] sm:$0xf]
        %v4335 = vld [vmem:[%s9 + $0x24] sm:$0xf]
        %v4336 = vld [vmem:[%s9 + $0x28] sm:$0xf]
        %v4337 = vld [vmem:[%s9 + $0x2c] sm:$0xf]
        %v4338 = vld [vmem:[%s9 + $0x30] sm:$0xf]
        %v4339 = vld [vmem:[%s9 + $0x34] sm:$0xf]
        %v4340 = vld [vmem:[%s9 + $0x38] sm:$0xf]
        %v4341 = vld [vmem:[%s9 + $0x3c] sm:$0xf]
        %v4342 = vld [vmem:[%s10] sm:$0x1]
        %v4344 = vlaneseq
        %v4345 = vshrl.u32 %v4344, 7
        %v4346 = vsub.s32 0, %v4345
        %v4347 = vrot.slane %v4342, %v4346
        %v4365 = vunpack.c.l.b16 %v4326
        %v4366 = vunpack.c.l.b16 %v4327
        %v4367 = vunpack.c.l.b16 %v4328
        %v4368 = vunpack.c.l.b16 %v4329
        %v4369 = vunpack.c.l.b16 %v4330
        %v4370 = vunpack.c.l.b16 %v4331
        %v4371 = vunpack.c.l.b16 %v4332
        %v4372 = vunpack.c.l.b16 %v4333
        %v4373 = vunpack.c.l.b16 %v4334
        %v4374 = vunpack.c.l.b16 %v4335
        %v4375 = vunpack.c.l.b16 %v4336
        %v4376 = vunpack.c.l.b16 %v4337
        %v4377 = vunpack.c.l.b16 %v4338
        %v4378 = vunpack.c.l.b16 %v4339
        %v4379 = vunpack.c.l.b16 %v4340
        %v4380 = vunpack.c.l.b16 %v4341
        %v4381 = vpack.c.b16 %v4366, %v4365
        %v4382 = vpack.c.b16 %v4368, %v4367
        %v4383 = vpack.c.b16 %v4370, %v4369
        %v4384 = vpack.c.b16 %v4372, %v4371
        %v4385 = vpack.c.b16 %v4374, %v4373
        %v4386 = vpack.c.b16 %v4376, %v4375
        %v4387 = vpack.c.b16 %v4378, %v4377
        %v4388 = vpack.c.b16 %v4380, %v4379
        %4397 = vmatprep.subr.bf16.mxu0 0
        %4398 = vmatpush1.bf16.msra.mxu0 %v4381
        %4399 = vmatprep.subr.bf16.mxu0 0
        %4400 = vmatpush1.bf16.msra.mxu0 %v4382
        %4401 = vmatprep.subr.bf16.mxu0 0
        %4402 = vmatpush1.bf16.msra.mxu0 %v4383
        %4403 = vmatprep.subr.bf16.mxu0 0
        %4404 = vmatpush1.bf16.msra.mxu0 %v4384
        %4405 = vmatprep.subr.bf16.mxu0 0
        %4406 = vmatpush1.bf16.msra.mxu0 %v4385
        %4407 = vmatprep.subr.bf16.mxu0 0
        %4408 = vmatpush1.bf16.msra.mxu0 %v4386
        %4409 = vmatprep.subr.bf16.mxu0 0
        %4410 = vmatpush1.bf16.msra.mxu0 %v4387
        %4411 = vmatprep.subr.bf16.mxu0 0
        %4412 = vmatpush1.bf16.msra.mxu0 %v4388
        %4413 = vmatprep.subr.bf16.mxu0 0
        %4414 = vmatpush1.bf16.msra.mxu0 0
        %4415 = vmatprep.subr.bf16.mxu0 0
        %4416 = vmatpush1.bf16.msra.mxu0 0
        %4417 = vmatprep.subr.bf16.mxu0 0
        %4418 = vmatpush1.bf16.msra.mxu0 0
        %4419 = vmatprep.subr.bf16.mxu0 0
        %4420 = vmatpush1.bf16.msra.mxu0 0
        %4421 = vmatprep.subr.bf16.mxu0 0
        %4422 = vmatpush1.bf16.msra.mxu0 0
        %4423 = vmatprep.subr.bf16.mxu0 0
        %4424 = vmatpush1.bf16.msra.mxu0 0
        %4425 = vmatprep.subr.bf16.mxu0 0
        %4426 = vmatpush1.bf16.msra.mxu0 0
        %4427 = vmatprep.subr.bf16.mxu0 0
        %4428 = vmatpush1.bf16.msra.mxu0 0
        %4429 = vmatprep.mubr.bf16.mxu0 0
        %4430 = vmatmul.mubr.bf16.gmra.mrb[0].mxu0 %v4310
        %v4431 = vpop.f32.mrb[0].mxu0
        %v4432 = vadd.f32 %v4347, %v4431
        %v4433 = vpop.f32.mrb[0].mxu0
        %v4434 = vpop.f32.mrb[0].mxu0
        %v4435 = vadd.f32 %v4347, %v4434
        %v4436 = vpop.f32.mrb[0].mxu0
        %4437 = vmatprep.mubr.bf16.mxu0 0
        %4438 = vmatmul.mubr.bf16.gmra.mrb[0].mxu0 %v4311
        %v4439 = vpop.f32.mrb[0].mxu0
        %v4440 = vadd.f32 %v4347, %v4439
        %v4441 = vpop.f32.mrb[0].mxu0
        %v4442 = vpop.f32.mrb[0].mxu0
        %v4443 = vadd.f32 %v4347, %v4442
        %v4444 = vpop.f32.mrb[0].mxu0
        %4445 = vmatprep.mubr.bf16.mxu0 0
        %4446 = vmatmul.mubr.bf16.gmra.mrb[0].mxu0 %v4312
        %v4447 = vpop.f32.mrb[0].mxu0
        %v4448 = vadd.f32 %v4347, %v4447
        %v4449 = vpop.f32.mrb[0].mxu0
        %v4450 = vpop.f32.mrb[0].mxu0
        %v4451 = vadd.f32 %v4347, %v4450
        %v4452 = vpop.f32.mrb[0].mxu0
        %4453 = vmatprep.mubr.bf16.mxu0 0
        %4454 = vmatmul.mubr.bf16.gmra.mrb[0].mxu0 %v4313
        %v4455 = vpop.f32.mrb[0].mxu0
        %v4456 = vadd.f32 %v4347, %v4455
        %v4457 = vpop.f32.mrb[0].mxu0
        %v4458 = vpop.f32.mrb[0].mxu0
        %v4459 = vadd.f32 %v4347, %v4458
        %v4460 = vpop.f32.mrb[0].mxu0
        %4461 = vmatprep.mubr.bf16.mxu0 0
        %4462 = vmatmul.mubr.bf16.gmra.mrb[0].mxu0 %v4314
        %v4463 = vpop.f32.mrb[0].mxu0
        %v4464 = vadd.f32 %v4347, %v4463
        %v4465 = vpop.f32.mrb[0].mxu0
        %v4466 = vpop.f32.mrb[0].mxu0
        %v4467 = vadd.f32 %v4347, %v4466
        %v4468 = vpop.f32.mrb[0].mxu0
        %4469 = vmatprep.mubr.bf16.mxu0 0
        %4470 = vmatmul.mubr.bf16.gmra.mrb[0].mxu0 %v4315
        %v4471 = vpop.f32.mrb[0].mxu0
        %v4472 = vadd.f32 %v4347, %v4471
        %v4473 = vpop.f32.mrb[0].mxu0
        %v4474 = vpop.f32.mrb[0].mxu0
        %v4475 = vadd.f32 %v4347, %v4474
        %v4476 = vpop.f32.mrb[0].mxu0
        %4477 = vmatprep.mubr.bf16.mxu0 0
        %4478 = vmatmul.mubr.bf16.gmra.mrb[0].mxu0 %v4316
        %v4479 = vpop.f32.mrb[0].mxu0
        %v4480 = vadd.f32 %v4347, %v4479
        %v4481 = vpop.f32.mrb[0].mxu0
        %v4482 = vpop.f32.mrb[0].mxu0
        %v4483 = vadd.f32 %v4347, %v4482
        %v4484 = vpop.f32.mrb[0].mxu0
        %4485 = vmatprep.mubr.bf16.mxu0 0
        %4486 = vmatmul.mubr.bf16.gmra.mrb[0].mxu0 %v4317
        %v4487 = vpop.f32.mrb[0].mxu0
        %v4488 = vadd.f32 %v4347, %v4487
        %v4489 = vpop.f32.mrb[0].mxu0
        %v4490 = vpop.f32.mrb[0].mxu0
        %v4491 = vadd.f32 %v4347, %v4490
        %v4492 = vpop.f32.mrb[0].mxu0
        %4493 = vmatprep.mubr.bf16.mxu0 0
        %4494 = vmatmul.mubr.bf16.gmra.mrb[0].mxu0 %v4318
        %v4495 = vpop.f32.mrb[0].mxu0
        %v4496 = vadd.f32 %v4347, %v4495
        %v4497 = vpop.f32.mrb[0].mxu0
        %v4498 = vpop.f32.mrb[0].mxu0
        %v4499 = vadd.f32 %v4347, %v4498
        %v4500 = vpop.f32.mrb[0].mxu0
        %4501 = vmatprep.mubr.bf16.mxu0 0
        %4502 = vmatmul.mubr.bf16.gmra.mrb[0].mxu0 %v4319
        %v4503 = vpop.f32.mrb[0].mxu0
        %v4504 = vadd.f32 %v4347, %v4503
        %v4505 = vpop.f32.mrb[0].mxu0
        %v4506 = vpop.f32.mrb[0].mxu0
        %v4507 = vadd.f32 %v4347, %v4506
        %v4508 = vpop.f32.mrb[0].mxu0
        %4509 = vmatprep.mubr.bf16.mxu0 0
        %4510 = vmatmul.mubr.bf16.gmra.mrb[0].mxu0 %v4320
        %v4511 = vpop.f32.mrb[0].mxu0
        %v4512 = vadd.f32 %v4347, %v4511
        %v4513 = vpop.f32.mrb[0].mxu0
        %v4514 = vpop.f32.mrb[0].mxu0
        %v4515 = vadd.f32 %v4347, %v4514
        %v4516 = vpop.f32.mrb[0].mxu0
        %4517 = vmatprep.mubr.bf16.mxu0 0
        %4518 = vmatmul.mubr.bf16.gmra.mrb[0].mxu0 %v4321
        %v4519 = vpop.f32.mrb[0].mxu0
        %v4520 = vadd.f32 %v4347, %v4519
        %v4521 = vpop.f32.mrb[0].mxu0
        %v4522 = vpop.f32.mrb[0].mxu0
        %v4523 = vadd.f32 %v4347, %v4522
        %v4524 = vpop.f32.mrb[0].mxu0
        %4525 = vmatprep.mubr.bf16.mxu0 0
        %4526 = vmatmul.mubr.bf16.gmra.mrb[0].mxu0 %v4322
        %v4527 = vpop.f32.mrb[0].mxu0
        %v4528 = vadd.f32 %v4347, %v4527
        %v4529 = vpop.f32.mrb[0].mxu0
        %v4530 = vpop.f32.mrb[0].mxu0
        %v4531 = vadd.f32 %v4347, %v4530
        %v4532 = vpop.f32.mrb[0].mxu0
        %4533 = vmatprep.mubr.bf16.mxu0 0
        %4534 = vmatmul.mubr.bf16.gmra.mrb[0].mxu0 %v4323
        %v4535 = vpop.f32.mrb[0].mxu0
        %v4536 = vadd.f32 %v4347, %v4535
        %v4537 = vpop.f32.mrb[0].mxu0
        %v4538 = vpop.f32.mrb[0].mxu0
        %v4539 = vadd.f32 %v4347, %v4538
        %v4540 = vpop.f32.mrb[0].mxu0
        %4541 = vmatprep.mubr.bf16.mxu0 0
        %4542 = vmatmul.mubr.bf16.gmra.mrb[0].mxu0 %v4324
        %v4543 = vpop.f32.mrb[0].mxu0
        %v4544 = vadd.f32 %v4347, %v4543
        %v4545 = vpop.f32.mrb[0].mxu0
        %v4546 = vpop.f32.mrb[0].mxu0
        %v4547 = vadd.f32 %v4347, %v4546
        %v4548 = vpop.f32.mrb[0].mxu0
        %4549 = vmatprep.mubr.bf16.mxu0 0
        %4550 = vmatmul.mubr.bf16.gmra.mrb[0].mxu0 %v4325
        %v4551 = vpop.f32.mrb[0].mxu0
        %v4552 = vadd.f32 %v4347, %v4551
        %v4553 = vpop.f32.mrb[0].mxu0
        %v4554 = vpop.f32.mrb[0].mxu0
        %v4555 = vadd.f32 %v4347, %v4554
        %v4556 = vpop.f32.mrb[0].mxu0
        %4557 = vdwg.mxu0
        %4558 = vst [vmem:[%s382] sm:$0xff] %v4432
        %4559 = vst [vmem:[%s382 + $0x8] sm:$0xff] %v4435
        %4560 = vst [vmem:[%s382 + $0x10] sm:$0xff] %v4440
        %4561 = vst [vmem:[%s382 + $0x18] sm:$0xff] %v4443
        %4562 = vst [vmem:[%s382 + $0x20] sm:$0xff] %v4448
        %4563 = vst [vmem:[%s382 + $0x28] sm:$0xff] %v4451
        %4564 = vst [vmem:[%s382 + $0x30] sm:$0xff] %v4456
        %4565 = vst [vmem:[%s382 + $0x38] sm:$0xff] %v4459
        %4566 = vst [vmem:[%s382 + $0x40] sm:$0xff] %v4464
        %4567 = vst [vmem:[%s382 + $0x48] sm:$0xff] %v4467
        %4568 = vst [vmem:[%s382 + $0x50] sm:$0xff] %v4472
        %4569 = vst [vmem:[%s382 + $0x58] sm:$0xff] %v4475
        %4570 = vst [vmem:[%s382 + $0x60] sm:$0xff] %v4480
        %4571 = vst [vmem:[%s382 + $0x68] sm:$0xff] %v4483
        %4572 = vst [vmem:[%s382 + $0x70] sm:$0xff] %v4488
        %4573 = vst [vmem:[%s382 + $0x78] sm:$0xff] %v4491
        %4574 = vst [vmem:[%s382 + $0x80] sm:$0xff] %v4496
        %4575 = vst [vmem:[%s382 + $0x88] sm:$0xff] %v4499
        %4576 = vst [vmem:[%s382 + $0x90] sm:$0xff] %v4504
        %4577 = vst [vmem:[%s382 + $0x98] sm:$0xff] %v4507
        %4578 = vst [vmem:[%s382 + $0xa0] sm:$0xff] %v4512
        %4579 = vst [vmem:[%s382 + $0xa8] sm:$0xff] %v4515
        %4580 = vst [vmem:[%s382 + $0xb0] sm:$0xff] %v4520
        %4581 = vst [vmem:[%s382 + $0xb8] sm:$0xff] %v4523
        %4582 = vst [vmem:[%s382 + $0xc0] sm:$0xff] %v4528
        %4583 = vst [vmem:[%s382 + $0xc8] sm:$0xff] %v4531
        %4584 = vst [vmem:[%s382 + $0xd0] sm:$0xff] %v4536
        %4585 = vst [vmem:[%s382 + $0xd8] sm:$0xff] %v4539
        %4586 = vst [vmem:[%s382 + $0xe0] sm:$0xff] %v4544
        %4587 = vst [vmem:[%s382 + $0xe8] sm:$0xff] %v4547
        %4588 = vst [vmem:[%s382 + $0xf0] sm:$0xff] %v4552
        %4589 = vst [vmem:[%s382 + $0xf8] sm:$0xff] %v4555
        %s4590 = sand.u32 %s269, 1
        %s4591 = scalar_lea.sflag [#allocation3], %s4590
        %s4592 = sand.u32 %s269, 1
        %s4593 = smul.addr %s4592, 256
        %s4594 = scalar_lea.vmem [#allocation2], %s4593
        // Predicated region
        $region65: #{tpu_custom_call.1} parent=63 // pred_check
          %p4595 = pneg %p279
        $region66: #{tpu_custom_call.1} parent=63 // pred_check_branch
          %4597 = sbr.rel (%p4595) target = $region68
        $region67: #{tpu_custom_call.1} parent=63 // pred_region
          %s4598 = smul.u32 32, %s25
          %s4600 = ssub.s32 4096, 4096
          %4601 = vsyncadd %s4591, %s4600
          %s4602 = smul.addr %s4598, 128
          %s4603 = scalar_lea.hbm %s11, %s4602
          %s4604 = sshll.u32 %s4594, 4
          %s4605 = int_to_ptr.vmem [resolvable:$true] %s4604
          %4610 = dma.vmem_to_hbm [thread:$0]  %s4605, 4096, %s4603, %s4591, 128, 128, 8
        $region68: #{tpu_custom_call.1} parent=63 // pred_fallthru
          _
      $region64: #{tpu_custom_call.1} parent=5 // pred_fallthru
        _
      %p4611 = scmp.le.s32.totalorder 2, %s20
      // Predicated region
      $region69: #{tpu_custom_call.1} parent=5 // pred_check
        %p4612 = pneg %p4611
      $region70: #{tpu_custom_call.1} parent=5 // pred_check_branch
        %4614 = sbr.rel (%p4612) target = $region72
      $region71: #{tpu_custom_call.1} parent=5 // pred_region
        %s4615 = ssub.s32 %s20, 2
        // Predicated region
        $region73: #{tpu_custom_call.1} parent=71 // pred_check
          %p4616 = pneg %p285
        $region74: #{tpu_custom_call.1} parent=71 // pred_check_branch
          %4618 = sbr.rel (%p4616) target = $region76
        $region75: #{tpu_custom_call.1} parent=71 // pred_region
          %s4619 = sand.u32 %s270, 1
          %s4620 = scalar_lea.sflag [#allocation3], %s4619
          %s4621 = sand.u32 %s270, 1
          %s4622 = smul.addr %s4621, 256
          %s4623 = scalar_lea.vmem [#allocation2], %s4622
          %4624 = dma.done %s4620, 4096
        $region76: #{tpu_custom_call.1} parent=71 // pred_fallthru
          _
      $region72: #{tpu_custom_call.1} parent=5 // pred_fallthru
        _
    $region6: #{tpu_custom_call.1} parent=1 // loop_footer
      %s24 = sadd.s32 1, %s20
    $region7: #{tpu_custom_call.1} parent=1 // loop_footer_branch
      %19 = sbr.rel target = $region3
    $region8: #{tpu_custom_call.1} parent=1 // loop_exit
      _
    %4625 = vsyncpa [#allocation3], 1
    %s4626 = scalar_lea.sflag [#allocation3], 1
    %4627 = vsyncpa %s4626, 1

</llo_original>
